<compile_context>
chip_gen: v6e
topology: v6e:2x2x1
jax: 0.10.0
libtpu: 0.0.40
codegen_flags: <defaults>
</compile_context>

<pallas_src>
import functools

import jax
import jax.numpy as jnp
from jax.experimental import pallas as pl
from jax.experimental.pallas import tpu as pltpu

EPS = 1e-5


# ----------------------------------------------------------------------------
# Fused BasicBlock kernel (one grid step == one image)
# ----------------------------------------------------------------------------
def _make_block_kernel(stride, Ho, Wo, Cin, Cout, has_proj):
    M = Ho * Wo

    def kernel(*refs):
        if has_proj:
            x_ref, w1_ref, b1_ref, w2_ref, b2_ref, wsc_ref, o_ref, o1p_ref = refs
        else:
            x_ref, w1_ref, b1_ref, w2_ref, b2_ref, o_ref, o1p_ref = refs

        # ---- load the activation tile(s) once (f32) ----
        if stride == 1:
            xs = x_ref[0]                                   # (H+2, W+2, Cin)

            def tap1(dy, dx):
                return xs[dy:dy + Ho, dx:dx + Wo, :]

            x_short = xs[1:Ho + 1, 1:Wo + 1, :]             # == original x
        else:  # stride == 2: four parity phases -> unit-stride slices only
            ph = [x_ref[0], x_ref[1], x_ref[2], x_ref[3]]   # (Ho+1, Wo+1, Cin)

            def tap1(dy, dx):
                p = (dy % 2) * 2 + (dx % 2)
                a, b = dy // 2, dx // 2
                return ph[p][a:a + Ho, b:b + Wo, :]

            x_short = ph[3][0:Ho, 0:Wo, :]                  # == x[:, ::2, ::2, :]

        # ---- conv1 + bn1 + relu : 9 accumulated shift-matmuls ----
        acc1 = jnp.zeros((M, Cout), jnp.float32)
        for dy in range(3):
            for dx in range(3):
                t = tap1(dy, dx).reshape(M, Cin).astype(jnp.bfloat16)
                acc1 = acc1 + jnp.dot(t, w1_ref[3 * dy + dx],
                                      preferred_element_type=jnp.float32)
        out1 = jnp.maximum(acc1 + b1_ref[...], 0.0)

        # ---- conv1 output (zero ring == conv2 padding) lives only in VMEM ----
        o1p_ref[...] = jnp.zeros(o1p_ref.shape, o1p_ref.dtype)
        o1p_ref[pl.ds(1, Ho), pl.ds(1, Wo), :] = out1.reshape(Ho, Wo, Cout)
        o1p = o1p_ref[...]

        # ---- conv2 + bn2 : 9 accumulated shift-matmuls ----
        acc2 = jnp.zeros((M, Cout), jnp.float32)
        for dy in range(3):
            for dx in range(3):
                t = o1p[dy:dy + Ho, dx:dx + Wo, :].reshape(M, Cout)
                acc2 = acc2 + jnp.dot(t.astype(jnp.bfloat16), w2_ref[3 * dy + dx],
                                      preferred_element_type=jnp.float32)
        acc2 = acc2 + b2_ref[...]

        # ---- shortcut ----
        if has_proj:   # folded 1x1-conv + BN, accumulated into the same f32 acc
            acc2 = acc2 + jnp.dot(x_short.reshape(M, Cin).astype(jnp.bfloat16),
                                  wsc_ref[...], preferred_element_type=jnp.float32)
        else:          # identity residual straight from the loaded tile (exact f32)
            acc2 = acc2 + x_short.reshape(M, Cin)

        o_ref[0] = jnp.maximum(acc2, 0.0).astype(o_ref.dtype)

    return kernel


# ----------------------------------------------------------------------------
# Plain-JAX glue (BN folding, padding / phase split, specs)
# ----------------------------------------------------------------------------
def _bn_fold(gamma, beta, mean, var):
    scale = gamma / jnp.sqrt(var + EPS)
    return scale, beta - mean * scale


def _ceil_to(a, b):
    return -(-a // b) * b


def _vmem_block_bytes(shape, itemsize):
    """VMEM footprint of one block (minor dim -> 128 lanes, 2nd minor -> 8 sublanes)."""
    lead = 1
    for d in shape[:-2]:
        lead *= d
    return lead * _ceil_to(shape[-2], 8) * _ceil_to(shape[-1], 128) * itemsize


@functools.partial(jax.jit, static_argnums=(2,))
def basic_block_forward_nhwc(x_nhwc, params, stride):
    """Fused BasicBlock forward; x is NHWC (keep NHWC across chained blocks)."""
    assert stride in (1, 2), "ResNet BasicBlock uses stride 1 or 2"
    x_nhwc = x_nhwc.astype(jnp.float32)
    N, H, W, Cin = x_nhwc.shape
    Cout = params['conv1_w'].shape[0]
    Ho = (H - 1) // stride + 1
    Wo = (W - 1) // stride + 1
    has_proj = (stride != 1) or (Cin != Cout)

    # ---- fold BatchNorm (running stats) into weights (bf16) + bias (f32) ----
    s1, b1 = _bn_fold(params['bn1_gamma'], params['bn1_beta'],
                      params['bn1_mean'], params['bn1_var'])
    s2, b2 = _bn_fold(params['bn2_gamma'], params['bn2_beta'],
                      params['bn2_mean'], params['bn2_var'])
    # (O,I,3,3) -> (3,3,I,O) -> (9,I,O); tap index t = 3*dy + dx.
    w1 = (jnp.transpose(params['conv1_w'], (2, 3, 1, 0)).reshape(9, Cin, Cout)
          * s1).astype(jnp.bfloat16)
    w2 = (jnp.transpose(params['conv2_w'], (2, 3, 1, 0)).reshape(9, Cout, Cout)
          * s2).astype(jnp.bfloat16)
    bias2 = b2
    wsc = None
    if has_proj:
        ssc, bsc = _bn_fold(params['sc_gamma'], params['sc_beta'],
                            params['sc_mean'], params['sc_var'])
        wsc = (jnp.transpose(params['sc_conv_w'][:, :, 0, 0], (1, 0))
               * ssc).astype(jnp.bfloat16)
        bias2 = bias2 + bsc
    b1 = b1.reshape(1, Cout).astype(jnp.float32)
    b2f = bias2.reshape(1, Cout).astype(jnp.float32)

    # ---- pad (and for stride 2, parity-split) the input: one fused XLA pass ----
    xp = jnp.pad(x_nhwc, ((0, 0), (1, 1), (1, 1), (0, 0)))
    if stride == 1:
        x_in = xp
        x_block = (1, H + 2, W + 2, Cin)
    else:
        xp = jnp.pad(xp, ((0, 0), (0, (H + 2) % 2), (0, (W + 2) % 2), (0, 0)))
        ph = [xp[:, py::2, px::2, :] for py in (0, 1) for px in (0, 1)]
        Hq, Wq = ph[0].shape[1], ph[0].shape[2]            # == Ho + 1, Wo + 1
        x_in = jnp.stack(ph, axis=1).reshape(N * 4, Hq, Wq, Cin)
        x_block = (4, Hq, Wq, Cin)

    inputs = [x_in, w1, b1, w2, b2f]
    in_specs = [
        pl.BlockSpec(x_block, lambda n: (n, 0, 0, 0)),          # activations: streamed
        pl.BlockSpec((9, Cin, Cout), lambda n: (0, 0, 0)),      # weights/bias: resident
        pl.BlockSpec((1, Cout), lambda n: (0, 0)),
        pl.BlockSpec((9, Cout, Cout), lambda n: (0, 0, 0)),
        pl.BlockSpec((1, Cout), lambda n: (0, 0)),
    ]
    if has_proj:
        inputs.append(wsc)
        in_specs.append(pl.BlockSpec((Cin, Cout), lambda n: (0, 0)))

    # Footprint-driven VMEM budget (double-buffered streams + resident weights
    # + scratch), clamped to stay well inside v7x's 64 MiB physical VMEM.
    need = (2 * _vmem_block_bytes(x_block, 4)
            + 2 * _vmem_block_bytes((1, Ho * Wo, Cout), 4)
            + 2 * _vmem_block_bytes((9, Cin, Cout), 2)
            + 2 * _vmem_block_bytes((9, Cout, Cout), 2)
            + 2 * _vmem_block_bytes((Cin, Cout), 2)
            + 4 * _vmem_block_bytes((1, Cout), 4)
            + _vmem_block_bytes((Ho + 2, Wo + 2, Cout), 4))
    vmem_limit = int(min(max(2 * need + (4 << 20), 16 << 20), 40 << 20))

    out = pl.pallas_call(
        _make_block_kernel(stride, Ho, Wo, Cin, Cout, has_proj),
        out_shape=jax.ShapeDtypeStruct((N, Ho * Wo, Cout), jnp.float32),
        grid=(N,),
        in_specs=in_specs,
        out_specs=pl.BlockSpec((1, Ho * Wo, Cout), lambda n: (n, 0, 0)),
        scratch_shapes=[pltpu.VMEM((Ho + 2, Wo + 2, Cout), jnp.float32)],
        compiler_params=pltpu.CompilerParams(
            dimension_semantics=("parallel",),
            vmem_limit_bytes=vmem_limit,
        ),
    )(*inputs)
    return out.reshape(N, Ho, Wo, Cout)


def basic_block_forward(x_nchw, params, stride):
    """NCHW wrapper (parity with the PyTorch module); NHWC entry avoids these transposes."""
    x = jnp.transpose(x_nchw, (0, 2, 3, 1))
    y = basic_block_forward_nhwc(x, params, stride)
    return jnp.transpose(y, (0, 3, 1, 2))


# ----------------------------------------------------------------------------
# Deterministic parameter init (matching nn.Conv2d / nn.BatchNorm2d shapes)
# ----------------------------------------------------------------------------
def init_params(key, in_planes, planes, stride):
    ks = jax.random.split(key, 16)
    p = {
        'conv1_w': 0.1 * jax.random.normal(ks[0], (planes, in_planes, 3, 3), jnp.float32),
        'bn1_gamma': 1.0 + 0.1 * jax.random.normal(ks[1], (planes,), jnp.float32),
        'bn1_beta': 0.1 * jax.random.normal(ks[2], (planes,), jnp.float32),
        'bn1_mean': 0.1 * jax.random.normal(ks[3], (planes,), jnp.float32),
        'bn1_var': 1.0 + 0.1 * jnp.abs(jax.random.normal(ks[4], (planes,), jnp.float32)),
        'conv2_w': 0.1 * jax.random.normal(ks[5], (planes, planes, 3, 3), jnp.float32),
        'bn2_gamma': 1.0 + 0.1 * jax.random.normal(ks[6], (planes,), jnp.float32),
        'bn2_beta': 0.1 * jax.random.normal(ks[7], (planes,), jnp.float32),
        'bn2_mean': 0.1 * jax.random.normal(ks[8], (planes,), jnp.float32),
        'bn2_var': 1.0 + 0.1 * jnp.abs(jax.random.normal(ks[9], (planes,), jnp.float32)),
    }
    if stride != 1 or in_planes != planes:
        p['sc_conv_w'] = 0.1 * jax.random.normal(ks[10], (planes, in_planes, 1, 1), jnp.float32)
        p['sc_gamma'] = 1.0 + 0.1 * jax.random.normal(ks[11], (planes,), jnp.float32)
        p['sc_beta'] = 0.1 * jax.random.normal(ks[12], (planes,), jnp.float32)
        p['sc_mean'] = 0.1 * jax.random.normal(ks[13], (planes,), jnp.float32)
        p['sc_var'] = 1.0 + 0.1 * jnp.abs(jax.random.normal(ks[14], (planes,), jnp.float32))
    return p


# ----------------------------------------------------------------------------
# Pure-JAX reference (lax conv, f32) for correctness checking
# ----------------------------------------------------------------------------
def ref_forward(x_nchw, params, stride):
    def bn(x, g, b, m, v):
        g, b = g[None, :, None, None], b[None, :, None, None]
        m, v = m[None, :, None, None], v[None, :, None, None]
        return (x - m) / jnp.sqrt(v + EPS) * g + b

    def conv(x, w, s, pad):
        return jax.lax.conv_general_dilated(
            x, w, (s, s), pad, dimension_numbers=('NCHW', 'OIHW', 'NCHW'))

    out = jax.nn.relu(bn(conv(x_nchw, params['conv1_w'], stride, ((1, 1), (1, 1))),
                         params['bn1_gamma'], params['bn1_beta'],
                         params['bn1_mean'], params['bn1_var']))
    out = bn(conv(out, params['conv2_w'], 1, ((1, 1), (1, 1))),
             params['bn2_gamma'], params['bn2_beta'],
             params['bn2_mean'], params['bn2_var'])
    Cin, Cout = x_nchw.shape[1], params['conv1_w'].shape[0]
    if stride != 1 or Cin != Cout:
        sc = bn(conv(x_nchw, params['sc_conv_w'], stride, ((0, 0), (0, 0))),
                params['sc_gamma'], params['sc_beta'],
                params['sc_mean'], params['sc_var'])
    else:
        sc = x_nchw
    return jax.nn.relu(out + sc)


if __name__ == "__main__":
    key = jax.random.PRNGKey(0)
    k_x, k_p1, k_p2 = jax.random.split(key, 3)

    x = jax.random.normal(k_x, (2, 8, 16, 16), jnp.float32)  # NCHW, as in PyTorch

    # bf16 matmul operands with f32 accumulation => loosened tolerance vs f32.
    ATOL, RTOL = 5e-2, 5e-2

    # Config 1: identity shortcut (stride=1, in_planes == planes).
    p1 = init_params(k_p1, 8, 8, 1)
    r1 = ref_forward(x, p1, 1)
    y1 = jax.block_until_ready(basic_block_forward(x, p1, 1))
    assert y1.shape == r1.shape
    err1 = float(jnp.max(jnp.abs(y1 - r1)))
    assert jnp.allclose(y1, r1, atol=ATOL, rtol=RTOL), err1

    # Config 2: projection shortcut (stride=2, 8 -> 16 planes).
    p2 = init_params(k_p2, 8, 16, 2)
    r2 = ref_forward(x, p2, 2)
    y2 = jax.block_until_ready(basic_block_forward(x, p2, 2))
    assert y2.shape == r2.shape
    err2 = float(jnp.max(jnp.abs(y2 - r2)))
    assert jnp.allclose(y2, r2, atol=ATOL, rtol=RTOL), err2

    print("KERNEL_OK")
</pallas_src>

<mosaic_0001>
module attributes {stable_mosaic.version = 11 : i64} {
  func.func @kernel(%arg0: i32, %arg1: memref<1x18x18x8xf32, #tpu.memory_space<vmem>>, %arg2: memref<9x8x8xbf16, #tpu.memory_space<vmem>>, %arg3: memref<1x8xf32, #tpu.memory_space<vmem>>, %arg4: memref<9x8x8xbf16, #tpu.memory_space<vmem>>, %arg5: memref<1x8xf32, #tpu.memory_space<vmem>>, %arg6: memref<1x256x8xf32, #tpu.memory_space<vmem>>, %arg7: memref<18x18x8xf32, #tpu.memory_space<vmem>>) attributes {dimension_semantics = [#tpu.dimension_semantics<parallel>], iteration_bounds = array<i64: 2>, scalar_prefetch = 0 : i64, scratch_operands = 1 : i64, tpu.core_type = #tpu.core_type<tc>, window_params = [{transform_indices = @transform_0, window_bounds = array<i64: 1, 18, 18, 8>}, {pipeline_mode = #tpu.pipeline_mode<synchronous>, transform_indices = @transform_1, window_bounds = array<i64: 9, 8, 8>}, {pipeline_mode = #tpu.pipeline_mode<synchronous>, transform_indices = @transform_2, window_bounds = array<i64: 1, 8>}, {pipeline_mode = #tpu.pipeline_mode<synchronous>, transform_indices = @transform_3, window_bounds = array<i64: 9, 8, 8>}, {pipeline_mode = #tpu.pipeline_mode<synchronous>, transform_indices = @transform_4, window_bounds = array<i64: 1, 8>}, {transform_indices = @transform_5, window_bounds = array<i64: 1, 256, 8>}]} {
    %c0 = arith.constant 0 : index
    %c0_0 = arith.constant 0 : index
    %c0_1 = arith.constant 0 : index
    %c0_2 = arith.constant 0 : index
    %0 = vector.load %arg1[%c0, %c0_0, %c0_1, %c0_2] : memref<1x18x18x8xf32, #tpu.memory_space<vmem>>, vector<1x18x18x8xf32>
    %1 = vector.shape_cast %0 : vector<1x18x18x8xf32> to vector<18x18x8xf32>
    %2 = vector.extract_strided_slice %1 {offsets = [1, 1, 0], sizes = [16, 16, 8], strides = [1, 1, 1]} : vector<18x18x8xf32> to vector<16x16x8xf32>
    %cst = arith.constant 0.000000e+00 : f32
    %3 = vector.broadcast %cst : f32 to vector<256x8xf32>
    %4 = vector.extract_strided_slice %1 {offsets = [0, 0, 0], sizes = [16, 16, 8], strides = [1, 1, 1]} : vector<18x18x8xf32> to vector<16x16x8xf32>
    %5 = vector.shape_cast %4 : vector<16x16x8xf32> to vector<256x8xf32>
    %6 = arith.truncf %5 : vector<256x8xf32> to vector<256x8xbf16>
    %c0_3 = arith.constant 0 : index
    %c0_4 = arith.constant 0 : index
    %c0_5 = arith.constant 0 : index
    %7 = vector.load %arg2[%c0_3, %c0_4, %c0_5] : memref<9x8x8xbf16, #tpu.memory_space<vmem>>, vector<1x8x8xbf16>
    %8 = vector.shape_cast %7 : vector<1x8x8xbf16> to vector<8x8xbf16>
    %cst_6 = arith.constant dense<0.000000e+00> : vector<256x8xf32>
    %9 = tpu.matmul %6, %8, %cst_6 {dimension_numbers = #tpu.dot_dimension_numbers<[1], [0], [0], [1], [0, 0, 1, 1], [], []>} : vector<256x8xbf16>, vector<8x8xbf16>, vector<256x8xf32> -> vector<256x8xf32>
    %10 = arith.addf %3, %9 : vector<256x8xf32>
    %11 = vector.extract_strided_slice %1 {offsets = [0, 1, 0], sizes = [16, 16, 8], strides = [1, 1, 1]} : vector<18x18x8xf32> to vector<16x16x8xf32>
    %12 = vector.shape_cast %11 : vector<16x16x8xf32> to vector<256x8xf32>
    %13 = arith.truncf %12 : vector<256x8xf32> to vector<256x8xbf16>
    %c1 = arith.constant 1 : index
    %c0_7 = arith.constant 0 : index
    %c0_8 = arith.constant 0 : index
    %14 = vector.load %arg2[%c1, %c0_7, %c0_8] : memref<9x8x8xbf16, #tpu.memory_space<vmem>>, vector<1x8x8xbf16>
    %15 = vector.shape_cast %14 : vector<1x8x8xbf16> to vector<8x8xbf16>
    %cst_9 = arith.constant dense<0.000000e+00> : vector<256x8xf32>
    %16 = tpu.matmul %13, %15, %cst_9 {dimension_numbers = #tpu.dot_dimension_numbers<[1], [0], [0], [1], [0, 0, 1, 1], [], []>} : vector<256x8xbf16>, vector<8x8xbf16>, vector<256x8xf32> -> vector<256x8xf32>
    %17 = arith.addf %10, %16 : vector<256x8xf32>
    %18 = vector.extract_strided_slice %1 {offsets = [0, 2, 0], sizes = [16, 16, 8], strides = [1, 1, 1]} : vector<18x18x8xf32> to vector<16x16x8xf32>
    %19 = vector.shape_cast %18 : vector<16x16x8xf32> to vector<256x8xf32>
    %20 = arith.truncf %19 : vector<256x8xf32> to vector<256x8xbf16>
    %c2 = arith.constant 2 : index
    %c0_10 = arith.constant 0 : index
    %c0_11 = arith.constant 0 : index
    %21 = vector.load %arg2[%c2, %c0_10, %c0_11] : memref<9x8x8xbf16, #tpu.memory_space<vmem>>, vector<1x8x8xbf16>
    %22 = vector.shape_cast %21 : vector<1x8x8xbf16> to vector<8x8xbf16>
    %cst_12 = arith.constant dense<0.000000e+00> : vector<256x8xf32>
    %23 = tpu.matmul %20, %22, %cst_12 {dimension_numbers = #tpu.dot_dimension_numbers<[1], [0], [0], [1], [0, 0, 1, 1], [], []>} : vector<256x8xbf16>, vector<8x8xbf16>, vector<256x8xf32> -> vector<256x8xf32>
    %24 = arith.addf %17, %23 : vector<256x8xf32>
    %25 = vector.extract_strided_slice %1 {offsets = [1, 0, 0], sizes = [16, 16, 8], strides = [1, 1, 1]} : vector<18x18x8xf32> to vector<16x16x8xf32>
    %26 = vector.shape_cast %25 : vector<16x16x8xf32> to vector<256x8xf32>
    %27 = arith.truncf %26 : vector<256x8xf32> to vector<256x8xbf16>
    %c3 = arith.constant 3 : index
    %c0_13 = arith.constant 0 : index
    %c0_14 = arith.constant 0 : index
    %28 = vector.load %arg2[%c3, %c0_13, %c0_14] : memref<9x8x8xbf16, #tpu.memory_space<vmem>>, vector<1x8x8xbf16>
    %29 = vector.shape_cast %28 : vector<1x8x8xbf16> to vector<8x8xbf16>
    %cst_15 = arith.constant dense<0.000000e+00> : vector<256x8xf32>
    %30 = tpu.matmul %27, %29, %cst_15 {dimension_numbers = #tpu.dot_dimension_numbers<[1], [0], [0], [1], [0, 0, 1, 1], [], []>} : vector<256x8xbf16>, vector<8x8xbf16>, vector<256x8xf32> -> vector<256x8xf32>
    %31 = arith.addf %24, %30 : vector<256x8xf32>
    %32 = vector.extract_strided_slice %1 {offsets = [1, 1, 0], sizes = [16, 16, 8], strides = [1, 1, 1]} : vector<18x18x8xf32> to vector<16x16x8xf32>
    %33 = vector.shape_cast %32 : vector<16x16x8xf32> to vector<256x8xf32>
    %34 = arith.truncf %33 : vector<256x8xf32> to vector<256x8xbf16>
    %c4 = arith.constant 4 : index
    %c0_16 = arith.constant 0 : index
    %c0_17 = arith.constant 0 : index
    %35 = vector.load %arg2[%c4, %c0_16, %c0_17] : memref<9x8x8xbf16, #tpu.memory_space<vmem>>, vector<1x8x8xbf16>
    %36 = vector.shape_cast %35 : vector<1x8x8xbf16> to vector<8x8xbf16>
    %cst_18 = arith.constant dense<0.000000e+00> : vector<256x8xf32>
    %37 = tpu.matmul %34, %36, %cst_18 {dimension_numbers = #tpu.dot_dimension_numbers<[1], [0], [0], [1], [0, 0, 1, 1], [], []>} : vector<256x8xbf16>, vector<8x8xbf16>, vector<256x8xf32> -> vector<256x8xf32>
    %38 = arith.addf %31, %37 : vector<256x8xf32>
    %39 = vector.extract_strided_slice %1 {offsets = [1, 2, 0], sizes = [16, 16, 8], strides = [1, 1, 1]} : vector<18x18x8xf32> to vector<16x16x8xf32>
    %40 = vector.shape_cast %39 : vector<16x16x8xf32> to vector<256x8xf32>
    %41 = arith.truncf %40 : vector<256x8xf32> to vector<256x8xbf16>
    %c5 = arith.constant 5 : index
    %c0_19 = arith.constant 0 : index
    %c0_20 = arith.constant 0 : index
    %42 = vector.load %arg2[%c5, %c0_19, %c0_20] : memref<9x8x8xbf16, #tpu.memory_space<vmem>>, vector<1x8x8xbf16>
    %43 = vector.shape_cast %42 : vector<1x8x8xbf16> to vector<8x8xbf16>
    %cst_21 = arith.constant dense<0.000000e+00> : vector<256x8xf32>
    %44 = tpu.matmul %41, %43, %cst_21 {dimension_numbers = #tpu.dot_dimension_numbers<[1], [0], [0], [1], [0, 0, 1, 1], [], []>} : vector<256x8xbf16>, vector<8x8xbf16>, vector<256x8xf32> -> vector<256x8xf32>
    %45 = arith.addf %38, %44 : vector<256x8xf32>
    %46 = vector.extract_strided_slice %1 {offsets = [2, 0, 0], sizes = [16, 16, 8], strides = [1, 1, 1]} : vector<18x18x8xf32> to vector<16x16x8xf32>
    %47 = vector.shape_cast %46 : vector<16x16x8xf32> to vector<256x8xf32>
    %48 = arith.truncf %47 : vector<256x8xf32> to vector<256x8xbf16>
    %c6 = arith.constant 6 : index
    %c0_22 = arith.constant 0 : index
    %c0_23 = arith.constant 0 : index
    %49 = vector.load %arg2[%c6, %c0_22, %c0_23] : memref<9x8x8xbf16, #tpu.memory_space<vmem>>, vector<1x8x8xbf16>
    %50 = vector.shape_cast %49 : vector<1x8x8xbf16> to vector<8x8xbf16>
    %cst_24 = arith.constant dense<0.000000e+00> : vector<256x8xf32>
    %51 = tpu.matmul %48, %50, %cst_24 {dimension_numbers = #tpu.dot_dimension_numbers<[1], [0], [0], [1], [0, 0, 1, 1], [], []>} : vector<256x8xbf16>, vector<8x8xbf16>, vector<256x8xf32> -> vector<256x8xf32>
    %52 = arith.addf %45, %51 : vector<256x8xf32>
    %53 = vector.extract_strided_slice %1 {offsets = [2, 1, 0], sizes = [16, 16, 8], strides = [1, 1, 1]} : vector<18x18x8xf32> to vector<16x16x8xf32>
    %54 = vector.shape_cast %53 : vector<16x16x8xf32> to vector<256x8xf32>
    %55 = arith.truncf %54 : vector<256x8xf32> to vector<256x8xbf16>
    %c7 = arith.constant 7 : index
    %c0_25 = arith.constant 0 : index
    %c0_26 = arith.constant 0 : index
    %56 = vector.load %arg2[%c7, %c0_25, %c0_26] : memref<9x8x8xbf16, #tpu.memory_space<vmem>>, vector<1x8x8xbf16>
    %57 = vector.shape_cast %56 : vector<1x8x8xbf16> to vector<8x8xbf16>
    %cst_27 = arith.constant dense<0.000000e+00> : vector<256x8xf32>
    %58 = tpu.matmul %55, %57, %cst_27 {dimension_numbers = #tpu.dot_dimension_numbers<[1], [0], [0], [1], [0, 0, 1, 1], [], []>} : vector<256x8xbf16>, vector<8x8xbf16>, vector<256x8xf32> -> vector<256x8xf32>
    %59 = arith.addf %52, %58 : vector<256x8xf32>
    %60 = vector.extract_strided_slice %1 {offsets = [2, 2, 0], sizes = [16, 16, 8], strides = [1, 1, 1]} : vector<18x18x8xf32> to vector<16x16x8xf32>
    %61 = vector.shape_cast %60 : vector<16x16x8xf32> to vector<256x8xf32>
    %62 = arith.truncf %61 : vector<256x8xf32> to vector<256x8xbf16>
    %c8 = arith.constant 8 : index
    %c0_28 = arith.constant 0 : index
    %c0_29 = arith.constant 0 : index
    %63 = vector.load %arg2[%c8, %c0_28, %c0_29] : memref<9x8x8xbf16, #tpu.memory_space<vmem>>, vector<1x8x8xbf16>
    %64 = vector.shape_cast %63 : vector<1x8x8xbf16> to vector<8x8xbf16>
    %cst_30 = arith.constant dense<0.000000e+00> : vector<256x8xf32>
    %65 = tpu.matmul %62, %64, %cst_30 {dimension_numbers = #tpu.dot_dimension_numbers<[1], [0], [0], [1], [0, 0, 1, 1], [], []>} : vector<256x8xbf16>, vector<8x8xbf16>, vector<256x8xf32> -> vector<256x8xf32>
    %66 = arith.addf %59, %65 : vector<256x8xf32>
    %c0_31 = arith.constant 0 : index
    %c0_32 = arith.constant 0 : index
    %67 = vector.load %arg3[%c0_31, %c0_32] : memref<1x8xf32, #tpu.memory_space<vmem>>, vector<1x8xf32>
    %68 = vector.broadcast %67 : vector<1x8xf32> to vector<256x8xf32>
    %69 = arith.addf %66, %68 : vector<256x8xf32>
    %cst_33 = arith.constant 0.000000e+00 : f32
    %70 = vector.broadcast %cst_33 : f32 to vector<256x8xf32>
    %71 = arith.maximumf %69, %70 : vector<256x8xf32>
    %cst_34 = arith.constant 0.000000e+00 : f32
    %72 = vector.broadcast %cst_34 : f32 to vector<18x18x8xf32>
    %c0_35 = arith.constant 0 : index
    %c0_36 = arith.constant 0 : index
    %c0_37 = arith.constant 0 : index
    %73 = vector.load %arg7[%c0_35, %c0_36, %c0_37] : memref<18x18x8xf32, #tpu.memory_space<vmem>>, vector<18x18x8xf32>
    tpu.vector_store %arg7[%c0_35, %c0_36, %c0_37], %72 {strides = array<i32>} : memref<18x18x8xf32, #tpu.memory_space<vmem>>, vector<18x18x8xf32>,
    %74 = vector.shape_cast %71 : vector<256x8xf32> to vector<16x16x8xf32>
    %c1_38 = arith.constant 1 : index
    %c1_39 = arith.constant 1 : index
    %c0_40 = arith.constant 0 : index
    %75 = vector.load %arg7[%c1_38, %c1_39, %c0_40] : memref<18x18x8xf32, #tpu.memory_space<vmem>>, vector<16x16x8xf32>
    tpu.vector_store %arg7[%c1_38, %c1_39, %c0_40], %74 {strides = array<i32>} : memref<18x18x8xf32, #tpu.memory_space<vmem>>, vector<16x16x8xf32>,
    %c0_41 = arith.constant 0 : index
    %c0_42 = arith.constant 0 : index
    %c0_43 = arith.constant 0 : index
    %76 = vector.load %arg7[%c0_41, %c0_42, %c0_43] : memref<18x18x8xf32, #tpu.memory_space<vmem>>, vector<18x18x8xf32>
    %cst_44 = arith.constant 0.000000e+00 : f32
    %77 = vector.broadcast %cst_44 : f32 to vector<256x8xf32>
    %78 = vector.extract_strided_slice %76 {offsets = [0, 0, 0], sizes = [16, 16, 8], strides = [1, 1, 1]} : vector<18x18x8xf32> to vector<16x16x8xf32>
    %79 = vector.shape_cast %78 : vector<16x16x8xf32> to vector<256x8xf32>
    %80 = arith.truncf %79 : vector<256x8xf32> to vector<256x8xbf16>
    %c0_45 = arith.constant 0 : index
    %c0_46 = arith.constant 0 : index
    %c0_47 = arith.constant 0 : index
    %81 = vector.load %arg4[%c0_45, %c0_46, %c0_47] : memref<9x8x8xbf16, #tpu.memory_space<vmem>>, vector<1x8x8xbf16>
    %82 = vector.shape_cast %81 : vector<1x8x8xbf16> to vector<8x8xbf16>
    %cst_48 = arith.constant dense<0.000000e+00> : vector<256x8xf32>
    %83 = tpu.matmul %80, %82, %cst_48 {dimension_numbers = #tpu.dot_dimension_numbers<[1], [0], [0], [1], [0, 0, 1, 1], [], []>} : vector<256x8xbf16>, vector<8x8xbf16>, vector<256x8xf32> -> vector<256x8xf32>
    %84 = arith.addf %77, %83 : vector<256x8xf32>
    %85 = vector.extract_strided_slice %76 {offsets = [0, 1, 0], sizes = [16, 16, 8], strides = [1, 1, 1]} : vector<18x18x8xf32> to vector<16x16x8xf32>
    %86 = vector.shape_cast %85 : vector<16x16x8xf32> to vector<256x8xf32>
    %87 = arith.truncf %86 : vector<256x8xf32> to vector<256x8xbf16>
    %c1_49 = arith.constant 1 : index
    %c0_50 = arith.constant 0 : index
    %c0_51 = arith.constant 0 : index
    %88 = vector.load %arg4[%c1_49, %c0_50, %c0_51] : memref<9x8x8xbf16, #tpu.memory_space<vmem>>, vector<1x8x8xbf16>
    %89 = vector.shape_cast %88 : vector<1x8x8xbf16> to vector<8x8xbf16>
    %cst_52 = arith.constant dense<0.000000e+00> : vector<256x8xf32>
    %90 = tpu.matmul %87, %89, %cst_52 {dimension_numbers = #tpu.dot_dimension_numbers<[1], [0], [0], [1], [0, 0, 1, 1], [], []>} : vector<256x8xbf16>, vector<8x8xbf16>, vector<256x8xf32> -> vector<256x8xf32>
    %91 = arith.addf %84, %90 : vector<256x8xf32>
    %92 = vector.extract_strided_slice %76 {offsets = [0, 2, 0], sizes = [16, 16, 8], strides = [1, 1, 1]} : vector<18x18x8xf32> to vector<16x16x8xf32>
    %93 = vector.shape_cast %92 : vector<16x16x8xf32> to vector<256x8xf32>
    %94 = arith.truncf %93 : vector<256x8xf32> to vector<256x8xbf16>
    %c2_53 = arith.constant 2 : index
    %c0_54 = arith.constant 0 : index
    %c0_55 = arith.constant 0 : index
    %95 = vector.load %arg4[%c2_53, %c0_54, %c0_55] : memref<9x8x8xbf16, #tpu.memory_space<vmem>>, vector<1x8x8xbf16>
    %96 = vector.shape_cast %95 : vector<1x8x8xbf16> to vector<8x8xbf16>
    %cst_56 = arith.constant dense<0.000000e+00> : vector<256x8xf32>
    %97 = tpu.matmul %94, %96, %cst_56 {dimension_numbers = #tpu.dot_dimension_numbers<[1], [0], [0], [1], [0, 0, 1, 1], [], []>} : vector<256x8xbf16>, vector<8x8xbf16>, vector<256x8xf32> -> vector<256x8xf32>
    %98 = arith.addf %91, %97 : vector<256x8xf32>
    %99 = vector.extract_strided_slice %76 {offsets = [1, 0, 0], sizes = [16, 16, 8], strides = [1, 1, 1]} : vector<18x18x8xf32> to vector<16x16x8xf32>
    %100 = vector.shape_cast %99 : vector<16x16x8xf32> to vector<256x8xf32>
    %101 = arith.truncf %100 : vector<256x8xf32> to vector<256x8xbf16>
    %c3_57 = arith.constant 3 : index
    %c0_58 = arith.constant 0 : index
    %c0_59 = arith.constant 0 : index
    %102 = vector.load %arg4[%c3_57, %c0_58, %c0_59] : memref<9x8x8xbf16, #tpu.memory_space<vmem>>, vector<1x8x8xbf16>
    %103 = vector.shape_cast %102 : vector<1x8x8xbf16> to vector<8x8xbf16>
    %cst_60 = arith.constant dense<0.000000e+00> : vector<256x8xf32>
    %104 = tpu.matmul %101, %103, %cst_60 {dimension_numbers = #tpu.dot_dimension_numbers<[1], [0], [0], [1], [0, 0, 1, 1], [], []>} : vector<256x8xbf16>, vector<8x8xbf16>, vector<256x8xf32> -> vector<256x8xf32>
    %105 = arith.addf %98, %104 : vector<256x8xf32>
    %106 = vector.extract_strided_slice %76 {offsets = [1, 1, 0], sizes = [16, 16, 8], strides = [1, 1, 1]} : vector<18x18x8xf32> to vector<16x16x8xf32>
    %107 = vector.shape_cast %106 : vector<16x16x8xf32> to vector<256x8xf32>
    %108 = arith.truncf %107 : vector<256x8xf32> to vector<256x8xbf16>
    %c4_61 = arith.constant 4 : index
    %c0_62 = arith.constant 0 : index
    %c0_63 = arith.constant 0 : index
    %109 = vector.load %arg4[%c4_61, %c0_62, %c0_63] : memref<9x8x8xbf16, #tpu.memory_space<vmem>>, vector<1x8x8xbf16>
    %110 = vector.shape_cast %109 : vector<1x8x8xbf16> to vector<8x8xbf16>
    %cst_64 = arith.constant dense<0.000000e+00> : vector<256x8xf32>
    %111 = tpu.matmul %108, %110, %cst_64 {dimension_numbers = #tpu.dot_dimension_numbers<[1], [0], [0], [1], [0, 0, 1, 1], [], []>} : vector<256x8xbf16>, vector<8x8xbf16>, vector<256x8xf32> -> vector<256x8xf32>
    %112 = arith.addf %105, %111 : vector<256x8xf32>
    %113 = vector.extract_strided_slice %76 {offsets = [1, 2, 0], sizes = [16, 16, 8], strides = [1, 1, 1]} : vector<18x18x8xf32> to vector<16x16x8xf32>
    %114 = vector.shape_cast %113 : vector<16x16x8xf32> to vector<256x8xf32>
    %115 = arith.truncf %114 : vector<256x8xf32> to vector<256x8xbf16>
    %c5_65 = arith.constant 5 : index
    %c0_66 = arith.constant 0 : index
    %c0_67 = arith.constant 0 : index
    %116 = vector.load %arg4[%c5_65, %c0_66, %c0_67] : memref<9x8x8xbf16, #tpu.memory_space<vmem>>, vector<1x8x8xbf16>
    %117 = vector.shape_cast %116 : vector<1x8x8xbf16> to vector<8x8xbf16>
    %cst_68 = arith.constant dense<0.000000e+00> : vector<256x8xf32>
    %118 = tpu.matmul %115, %117, %cst_68 {dimension_numbers = #tpu.dot_dimension_numbers<[1], [0], [0], [1], [0, 0, 1, 1], [], []>} : vector<256x8xbf16>, vector<8x8xbf16>, vector<256x8xf32> -> vector<256x8xf32>
    %119 = arith.addf %112, %118 : vector<256x8xf32>
    %120 = vector.extract_strided_slice %76 {offsets = [2, 0, 0], sizes = [16, 16, 8], strides = [1, 1, 1]} : vector<18x18x8xf32> to vector<16x16x8xf32>
    %121 = vector.shape_cast %120 : vector<16x16x8xf32> to vector<256x8xf32>
    %122 = arith.truncf %121 : vector<256x8xf32> to vector<256x8xbf16>
    %c6_69 = arith.constant 6 : index
    %c0_70 = arith.constant 0 : index
    %c0_71 = arith.constant 0 : index
    %123 = vector.load %arg4[%c6_69, %c0_70, %c0_71] : memref<9x8x8xbf16, #tpu.memory_space<vmem>>, vector<1x8x8xbf16>
    %124 = vector.shape_cast %123 : vector<1x8x8xbf16> to vector<8x8xbf16>
    %cst_72 = arith.constant dense<0.000000e+00> : vector<256x8xf32>
    %125 = tpu.matmul %122, %124, %cst_72 {dimension_numbers = #tpu.dot_dimension_numbers<[1], [0], [0], [1], [0, 0, 1, 1], [], []>} : vector<256x8xbf16>, vector<8x8xbf16>, vector<256x8xf32> -> vector<256x8xf32>
    %126 = arith.addf %119, %125 : vector<256x8xf32>
    %127 = vector.extract_strided_slice %76 {offsets = [2, 1, 0], sizes = [16, 16, 8], strides = [1, 1, 1]} : vector<18x18x8xf32> to vector<16x16x8xf32>
    %128 = vector.shape_cast %127 : vector<16x16x8xf32> to vector<256x8xf32>
    %129 = arith.truncf %128 : vector<256x8xf32> to vector<256x8xbf16>
    %c7_73 = arith.constant 7 : index
    %c0_74 = arith.constant 0 : index
    %c0_75 = arith.constant 0 : index
    %130 = vector.load %arg4[%c7_73, %c0_74, %c0_75] : memref<9x8x8xbf16, #tpu.memory_space<vmem>>, vector<1x8x8xbf16>
    %131 = vector.shape_cast %130 : vector<1x8x8xbf16> to vector<8x8xbf16>
    %cst_76 = arith.constant dense<0.000000e+00> : vector<256x8xf32>
    %132 = tpu.matmul %129, %131, %cst_76 {dimension_numbers = #tpu.dot_dimension_numbers<[1], [0], [0], [1], [0, 0, 1, 1], [], []>} : vector<256x8xbf16>, vector<8x8xbf16>, vector<256x8xf32> -> vector<256x8xf32>
    %133 = arith.addf %126, %132 : vector<256x8xf32>
    %134 = vector.extract_strided_slice %76 {offsets = [2, 2, 0], sizes = [16, 16, 8], strides = [1, 1, 1]} : vector<18x18x8xf32> to vector<16x16x8xf32>
    %135 = vector.shape_cast %134 : vector<16x16x8xf32> to vector<256x8xf32>
    %136 = arith.truncf %135 : vector<256x8xf32> to vector<256x8xbf16>
    %c8_77 = arith.constant 8 : index
    %c0_78 = arith.constant 0 : index
    %c0_79 = arith.constant 0 : index
    %137 = vector.load %arg4[%c8_77, %c0_78, %c0_79] : memref<9x8x8xbf16, #tpu.memory_space<vmem>>, vector<1x8x8xbf16>
    %138 = vector.shape_cast %137 : vector<1x8x8xbf16> to vector<8x8xbf16>
    %cst_80 = arith.constant dense<0.000000e+00> : vector<256x8xf32>
    %139 = tpu.matmul %136, %138, %cst_80 {dimension_numbers = #tpu.dot_dimension_numbers<[1], [0], [0], [1], [0, 0, 1, 1], [], []>} : vector<256x8xbf16>, vector<8x8xbf16>, vector<256x8xf32> -> vector<256x8xf32>
    %140 = arith.addf %133, %139 : vector<256x8xf32>
    %c0_81 = arith.constant 0 : index
    %c0_82 = arith.constant 0 : index
    %141 = vector.load %arg5[%c0_81, %c0_82] : memref<1x8xf32, #tpu.memory_space<vmem>>, vector<1x8xf32>
    %142 = vector.broadcast %141 : vector<1x8xf32> to vector<256x8xf32>
    %143 = arith.addf %140, %142 : vector<256x8xf32>
    %144 = vector.shape_cast %2 : vector<16x16x8xf32> to vector<256x8xf32>
    %145 = arith.addf %143, %144 : vector<256x8xf32>
    %cst_83 = arith.constant 0.000000e+00 : f32
    %146 = vector.broadcast %cst_83 : f32 to vector<256x8xf32>
    %147 = arith.maximumf %145, %146 : vector<256x8xf32>
    %c0_84 = arith.constant 0 : index
    %c0_85 = arith.constant 0 : index
    %c0_86 = arith.constant 0 : index
    %148 = vector.load %arg6[%c0_84, %c0_85, %c0_86] : memref<1x256x8xf32, #tpu.memory_space<vmem>>, vector<1x256x8xf32>
    %149 = vector.shape_cast %148 : vector<1x256x8xf32> to vector<256x8xf32>
    %150 = vector.shape_cast %147 : vector<256x8xf32> to vector<1x256x8xf32>
    tpu.vector_store %arg6[%c0_84, %c0_85, %c0_86], %150 {strides = array<i32>} : memref<1x256x8xf32, #tpu.memory_space<vmem>>, vector<1x256x8xf32>,
    return
  }
  func.func @transform_0(%arg0: i32) -> (i32, i32, i32, i32) {
    %c0_i32 = arith.constant 0 : i32
    %c0_i32_0 = arith.constant 0 : i32
    %c0_i32_1 = arith.constant 0 : i32
    %c0_i32_2 = arith.constant 0 : i32
    return %arg0, %c0_i32, %c0_i32_0, %c0_i32_1 : i32, i32, i32, i32
  }
  func.func @transform_1(%arg0: i32) -> (i32, i32, i32) {
    %c0_i32 = arith.constant 0 : i32
    %c0_i32_0 = arith.constant 0 : i32
    %c0_i32_1 = arith.constant 0 : i32
    %c0_i32_2 = arith.constant 0 : i32
    return %c0_i32, %c0_i32_0, %c0_i32_1 : i32, i32, i32
  }
  func.func @transform_2(%arg0: i32) -> (i32, i32) {
    %c0_i32 = arith.constant 0 : i32
    %c0_i32_0 = arith.constant 0 : i32
    %c0_i32_1 = arith.constant 0 : i32
    return %c0_i32, %c0_i32_0 : i32, i32
  }
  func.func @transform_3(%arg0: i32) -> (i32, i32, i32) {
    %c0_i32 = arith.constant 0 : i32
    %c0_i32_0 = arith.constant 0 : i32
    %c0_i32_1 = arith.constant 0 : i32
    %c0_i32_2 = arith.constant 0 : i32
    return %c0_i32, %c0_i32_0, %c0_i32_1 : i32, i32, i32
  }
  func.func @transform_4(%arg0: i32) -> (i32, i32) {
    %c0_i32 = arith.constant 0 : i32
    %c0_i32_0 = arith.constant 0 : i32
    %c0_i32_1 = arith.constant 0 : i32
    return %c0_i32, %c0_i32_0 : i32, i32
  }
  func.func @transform_5(%arg0: i32) -> (i32, i32, i32) {
    %c0_i32 = arith.constant 0 : i32
    %c0_i32_0 = arith.constant 0 : i32
    %c0_i32_1 = arith.constant 0 : i32
    return %arg0, %c0_i32, %c0_i32_0 : i32, i32, i32
  }
}

</mosaic_0001>

<llo_original>
// kernel: basic_block_forward_nhwc.1
$region0: #{basic_block_forward_nhwc.1}
  #allocation0 [shape = 'u32[]', space=smem, size = 0x4, offset = 0x4, fixed_abs, tag = 'smem constant byte address 0x4 - core index']
  #allocation1 [shape = 'u32[144,128]{1,0:T(1,128)}', space=vmem, size = 0x12000, scoped, tag = 'internal scratch']
  #allocation2 [shape = 'f32[18,18,8]{2,1,0:T(8,128)}', space=vmem, size = 0x36000, scoped, tag = 'scratch operand']
  %s0 = inlined_call_operand.vmem [shape: f32[2,18,18,8], index: 0, kind: input, shape index: {}]
  %s1 = inlined_call_operand.vmem [shape: bf16[9,8,8], index: 1, kind: input, shape index: {}]
  %s2 = inlined_call_operand.vmem [shape: f32[1,8], index: 2, kind: input, shape index: {}]
  %s3 = inlined_call_operand.vmem [shape: bf16[9,8,8], index: 3, kind: input, shape index: {}]
  %s4 = inlined_call_operand.vmem [shape: f32[1,8], index: 4, kind: input, shape index: {}]
  %s5 = inlined_call_operand.vmem [shape: f32[2,256,8], index: 5, kind: output, shape index: {}]
  %s6 = sld [smem:[#allocation0]]
  $region53: #{basic_block_forward_nhwc.1} parent=0
    _
  %s8 = ssub.s32 1, %s6
  %s9 = scalar_select 0, %s8, %s6
  loop: start=0, step=1, limit=4
  $region2: #{basic_block_forward_nhwc.1} parent=0 // loop_pre_header
    _
  $region3: #{basic_block_forward_nhwc.1} parent=0 // loop_header
    %s11 = sphi 0, %s15
    %p12 = scmp.ge.s32.totalorder %s11, 4
    %s21 = sphi 0, %s23
    %s24 = sphi 0, %s21
    %s25 = sphi 0, %s24
    %s41 = sphi 0, %s25
    %s45 = sphi 0, %s45
    %s47 = sphi 0, %s45
    %s48 = sphi 0, %s47
    %s62 = sphi 0, %s48
    %s66 = sphi 0, %s66
    %s68 = sphi 0, %s66
    %s69 = sphi 0, %s68
    %s83 = sphi 0, %s69
    %s87 = sphi 0, %s87
    %s89 = sphi 0, %s87
    %s90 = sphi 0, %s89
    %s104 = sphi 0, %s90
    %s108 = sphi 0, %s108
    %s110 = sphi 0, %s108
    %s111 = sphi 0, %s110
    %s125 = sphi 0, %s111
    %s131 = sphi 0, %s133
    %s134 = sphi 0, %s131
    %s135 = sphi 0, %s134
    %s151 = sphi 0, %s135
  $region4: #{basic_block_forward_nhwc.1} parent=0 // loop_header_branch
    %14 = sbr.rel (%p12) target = $region8
  $region5: #{basic_block_forward_nhwc.1} parent=0 // loop_body
    %s16 = ssub.s32 %s11, 1
    %s17 = ssub.s32 %s11, 2
    %s18 = sadd.s32 %s11, 1
    %s19 = ssub.s32 %s11, %s18
    %p20 = scmp.eq.s32.totalorder %s19, 0
    %s22 = sadd.s32 %s21, 1
    %s23 = scalar_select %p20, %s21, %s22
    %p26 = pneg %p20
    %p27 = scmp.eq.s32.totalorder %s11, 1
    %p28 = por %p26, %p27
    %p29 = scmp.ne.s32.totalorder %s21, %s24
    %p30 = scmp.eq.s32.totalorder %s11, 0
    %p31 = por %p29, %p30
    %p32 = scmp.ne.s32.totalorder %s21, %s24
    %p33 = scmp.eq.s32.totalorder %s16, 1
    %p34 = por %p32, %p33
    %p35 = scmp.ne.s32.totalorder %s24, %s25
    %p36 = scmp.eq.s32.totalorder %s16, 0
    %p37 = por %p35, %p36
    %p38 = scmp.ne.s32.totalorder %s24, %s25
    %p39 = scmp.eq.s32.totalorder %s17, 1
    %p40 = por %p38, %p39
    %p42 = scmp.ne.s32.totalorder %s25, %s41
    %p43 = scmp.eq.s32.totalorder %s17, 0
    %p44 = por %p42, %p43
    %s46 = sadd.s32 %s45, 1
    %p49 = scmp.eq.s32.totalorder %s11, 1
    %p50 = scmp.ne.s32.totalorder %s45, %s47
    %p51 = scmp.eq.s32.totalorder %s11, 0
    %p52 = por %p50, %p51
    %p53 = scmp.ne.s32.totalorder %s45, %s47
    %p54 = scmp.eq.s32.totalorder %s16, 1
    %p55 = por %p53, %p54
    %p56 = scmp.ne.s32.totalorder %s47, %s48
    %p57 = scmp.eq.s32.totalorder %s16, 0
    %p58 = por %p56, %p57
    %p59 = scmp.ne.s32.totalorder %s47, %s48
    %p60 = scmp.eq.s32.totalorder %s17, 1
    %p61 = por %p59, %p60
    %p63 = scmp.ne.s32.totalorder %s48, %s62
    %p64 = scmp.eq.s32.totalorder %s17, 0
    %p65 = por %p63, %p64
    %s67 = sadd.s32 %s66, 1
    %p70 = scmp.eq.s32.totalorder %s11, 1
    %p71 = scmp.ne.s32.totalorder %s66, %s68
    %p72 = scmp.eq.s32.totalorder %s11, 0
    %p73 = por %p71, %p72
    %p74 = scmp.ne.s32.totalorder %s66, %s68
    %p75 = scmp.eq.s32.totalorder %s16, 1
    %p76 = por %p74, %p75
    %p77 = scmp.ne.s32.totalorder %s68, %s69
    %p78 = scmp.eq.s32.totalorder %s16, 0
    %p79 = por %p77, %p78
    %p80 = scmp.ne.s32.totalorder %s68, %s69
    %p81 = scmp.eq.s32.totalorder %s17, 1
    %p82 = por %p80, %p81
    %p84 = scmp.ne.s32.totalorder %s69, %s83
    %p85 = scmp.eq.s32.totalorder %s17, 0
    %p86 = por %p84, %p85
    %s88 = sadd.s32 %s87, 1
    %p91 = scmp.eq.s32.totalorder %s11, 1
    %p92 = scmp.ne.s32.totalorder %s87, %s89
    %p93 = scmp.eq.s32.totalorder %s11, 0
    %p94 = por %p92, %p93
    %p95 = scmp.ne.s32.totalorder %s87, %s89
    %p96 = scmp.eq.s32.totalorder %s16, 1
    %p97 = por %p95, %p96
    %p98 = scmp.ne.s32.totalorder %s89, %s90
    %p99 = scmp.eq.s32.totalorder %s16, 0
    %p100 = por %p98, %p99
    %p101 = scmp.ne.s32.totalorder %s89, %s90
    %p102 = scmp.eq.s32.totalorder %s17, 1
    %p103 = por %p101, %p102
    %p105 = scmp.ne.s32.totalorder %s90, %s104
    %p106 = scmp.eq.s32.totalorder %s17, 0
    %p107 = por %p105, %p106
    %s109 = sadd.s32 %s108, 1
    %p112 = scmp.eq.s32.totalorder %s11, 1
    %p113 = scmp.ne.s32.totalorder %s108, %s110
    %p114 = scmp.eq.s32.totalorder %s11, 0
    %p115 = por %p113, %p114
    %p116 = scmp.ne.s32.totalorder %s108, %s110
    %p117 = scmp.eq.s32.totalorder %s16, 1
    %p118 = por %p116, %p117
    %p119 = scmp.ne.s32.totalorder %s110, %s111
    %p120 = scmp.eq.s32.totalorder %s16, 0
    %p121 = por %p119, %p120
    %p122 = scmp.ne.s32.totalorder %s110, %s111
    %p123 = scmp.eq.s32.totalorder %s17, 1
    %p124 = por %p122, %p123
    %p126 = scmp.ne.s32.totalorder %s111, %s125
    %p127 = scmp.eq.s32.totalorder %s17, 0
    %p128 = por %p126, %p127
    %s129 = ssub.s32 %s11, %s18
    %p130 = scmp.eq.s32.totalorder %s129, 0
    %s132 = sadd.s32 %s131, 1
    %s133 = scalar_select %p130, %s131, %s132
    %p136 = pneg %p130
    %p137 = scmp.eq.s32.totalorder %s11, 1
    %p138 = por %p136, %p137
    %p139 = scmp.ne.s32.totalorder %s131, %s134
    %p140 = scmp.eq.s32.totalorder %s11, 0
    %p141 = por %p139, %p140
    %p142 = scmp.ne.s32.totalorder %s131, %s134
    %p143 = scmp.eq.s32.totalorder %s16, 1
    %p144 = por %p142, %p143
    %p145 = scmp.ne.s32.totalorder %s134, %s135
    %p146 = scmp.eq.s32.totalorder %s16, 0
    %p147 = por %p145, %p146
    %p148 = scmp.ne.s32.totalorder %s134, %s135
    %p149 = scmp.eq.s32.totalorder %s17, 1
    %p150 = por %p148, %p149
    %p152 = scmp.ne.s32.totalorder %s135, %s151
    %p153 = scmp.eq.s32.totalorder %s17, 0
    %p154 = por %p152, %p153
    %p155 = scmp.le.s32.totalorder 1, %s11
    %p156 = scmp.lt.s32.totalorder %s11, 3
    %p157 = pnand %p155, %p156
    %p158 = pneg %p157
    // Predicated region
    $region9: #{basic_block_forward_nhwc.1} parent=5 // pred_check
      _
    $region10: #{basic_block_forward_nhwc.1} parent=5 // pred_check_branch
      %160 = sbr.rel (%p157) target = $region12
    $region11: #{basic_block_forward_nhwc.1} parent=5 // pred_region
      %s161 = ssub.s32 %s11, 1
      // Predicated region
      $region13: #{basic_block_forward_nhwc.1} parent=11 // pred_check
        %p162 = pneg %p58
      $region14: #{basic_block_forward_nhwc.1} parent=11 // pred_check_branch
        %164 = sbr.rel (%p162) target = $region16
      $region15: #{basic_block_forward_nhwc.1} parent=11 // pred_region
        _
      $region16: #{basic_block_forward_nhwc.1} parent=11 // pred_fallthru
        _
      // Predicated region
      $region17: #{basic_block_forward_nhwc.1} parent=11 // pred_check
        %p165 = pneg %p79
      $region18: #{basic_block_forward_nhwc.1} parent=11 // pred_check_branch
        %167 = sbr.rel (%p165) target = $region20
      $region19: #{basic_block_forward_nhwc.1} parent=11 // pred_region
        _
      $region20: #{basic_block_forward_nhwc.1} parent=11 // pred_fallthru
        _
      // Predicated region
      $region21: #{basic_block_forward_nhwc.1} parent=11 // pred_check
        %p168 = pneg %p100
      $region22: #{basic_block_forward_nhwc.1} parent=11 // pred_check_branch
        %170 = sbr.rel (%p168) target = $region24
      $region23: #{basic_block_forward_nhwc.1} parent=11 // pred_region
        _
      $region24: #{basic_block_forward_nhwc.1} parent=11 // pred_fallthru
        _
      // Predicated region
      $region25: #{basic_block_forward_nhwc.1} parent=11 // pred_check
        %p171 = pneg %p121
      $region26: #{basic_block_forward_nhwc.1} parent=11 // pred_check_branch
        %173 = sbr.rel (%p171) target = $region28
      $region27: #{basic_block_forward_nhwc.1} parent=11 // pred_region
        _
      $region28: #{basic_block_forward_nhwc.1} parent=11 // pred_fallthru
        _
    $region12: #{basic_block_forward_nhwc.1} parent=5 // pred_fallthru
      _
    %p174 = scmp.lt.s32.totalorder %s11, 2
    // Predicated region
    $region29: #{basic_block_forward_nhwc.1} parent=5 // pred_check
      %p175 = pneg %p174
    $region30: #{basic_block_forward_nhwc.1} parent=5 // pred_check_branch
      %177 = sbr.rel (%p175) target = $region32
    $region31: #{basic_block_forward_nhwc.1} parent=5 // pred_region
      // Predicated region
      $region33: #{basic_block_forward_nhwc.1} parent=31 // pred_check
        %p178 = pneg %p31
      $region34: #{basic_block_forward_nhwc.1} parent=31 // pred_check_branch
        %180 = sbr.rel (%p178) target = $region36
      $region35: #{basic_block_forward_nhwc.1} parent=31 // pred_region
        %p181 = scmp.lt.s32.totalorder %s11, 1
        %s182 = scalar_select %p181, %s11, 1
        %s183 = smul.addr %s182, 54
        %s184 = smul.addr %s183, 8
        %s185 = scalar_lea.vmem %s0, %s184
      $region36: #{basic_block_forward_nhwc.1} parent=31 // pred_fallthru
        _
    $region32: #{basic_block_forward_nhwc.1} parent=5 // pred_fallthru
      _
    %p186 = scmp.le.s32.totalorder 1, %s11
    %p187 = scmp.lt.s32.totalorder %s11, 3
    %p188 = pnand %p186, %p187
    %p189 = pneg %p188
    // Predicated region
    $region37: #{basic_block_forward_nhwc.1} parent=5 // pred_check
      _
    $region38: #{basic_block_forward_nhwc.1} parent=5 // pred_check_branch
      %191 = sbr.rel (%p188) target = $region40
    $region39: #{basic_block_forward_nhwc.1} parent=5 // pred_region
      %s192 = ssub.s32 %s11, 1
      %p193 = scmp.lt.s32.totalorder %s16, 1
      %s194 = scalar_select %p193, %s16, 1
      %s195 = smul.addr %s194, 54
      %s196 = smul.addr %s195, 8
      %s197 = scalar_lea.vmem %s0, %s196
      %p198 = pneg %p37
      %p199 = pneg %p34
      %p200 = pneg %p58
      %p201 = pneg %p55
      %p202 = pneg %p79
      %p203 = pneg %p76
      %p204 = pneg %p100
      %p205 = pneg %p97
      %p206 = pneg %p121
      %p207 = pneg %p118
      %p208 = pneg %p147
      %p209 = pneg %p144
      %p210 = scmp.lt.s32.totalorder %s16, 1
      %s211 = scalar_select %p210, %s16, 1
      %s212 = smul.addr %s211, 32
      %s213 = smul.addr %s212, 8
      %s214 = scalar_lea.vmem %s5, %s213
      %p215 = scmp.lt.s32.totalorder %s16, 1
      %s216 = scalar_select %p215, %s16, 1
      %s217 = smul.addr %s216, 54
      %s218 = smul.addr %s217, 8
      %s219 = scalar_lea.vmem %s0, %s218
      %p220 = scmp.lt.s32.totalorder %s16, 1
      %s221 = scalar_select %p220, %s16, 1
      %s222 = smul.addr %s221, 32
      %s223 = smul.addr %s222, 8
      %s224 = scalar_lea.vmem %s5, %s223
      %v226 = vld [vmem:[%s219] sm:$0xff]
      %v227 = vld [vmem:[%s219 + $0x8] sm:$0xff]
      %v228 = vld [vmem:[%s219 + $0x10] sm:$0x3]
      %v229 = vld [vmem:[%s219 + $0x18] sm:$0xff]
      %v230 = vld [vmem:[%s219 + $0x20] sm:$0xff]
      %v231 = vld [vmem:[%s219 + $0x28] sm:$0x3]
      %v232 = vld [vmem:[%s219 + $0x30] sm:$0xff]
      %v233 = vld [vmem:[%s219 + $0x38] sm:$0xff]
      %v234 = vld [vmem:[%s219 + $0x40] sm:$0x3]
      %v235 = vld [vmem:[%s219 + $0x48] sm:$0xff]
      %v236 = vld [vmem:[%s219 + $0x50] sm:$0xff]
      %v237 = vld [vmem:[%s219 + $0x58] sm:$0x3]
      %v238 = vld [vmem:[%s219 + $0x60] sm:$0xff]
      %v239 = vld [vmem:[%s219 + $0x68] sm:$0xff]
      %v240 = vld [vmem:[%s219 + $0x70] sm:$0x3]
      %v241 = vld [vmem:[%s219 + $0x78] sm:$0xff]
      %v242 = vld [vmem:[%s219 + $0x80] sm:$0xff]
      %v243 = vld [vmem:[%s219 + $0x88] sm:$0x3]
      %v244 = vld [vmem:[%s219 + $0x90] sm:$0xff]
      %v245 = vld [vmem:[%s219 + $0x98] sm:$0xff]
      %v246 = vld [vmem:[%s219 + $0xa0] sm:$0x3]
      %v247 = vld [vmem:[%s219 + $0xa8] sm:$0xff]
      %v248 = vld [vmem:[%s219 + $0xb0] sm:$0xff]
      %v249 = vld [vmem:[%s219 + $0xb8] sm:$0x3]
      %v250 = vld [vmem:[%s219 + $0xc0] sm:$0xff]
      %v251 = vld [vmem:[%s219 + $0xc8] sm:$0xff]
      %v252 = vld [vmem:[%s219 + $0xd0] sm:$0x3]
      %v253 = vld [vmem:[%s219 + $0xd8] sm:$0xff]
      %v254 = vld [vmem:[%s219 + $0xe0] sm:$0xff]
      %v255 = vld [vmem:[%s219 + $0xe8] sm:$0x3]
      %v256 = vld [vmem:[%s219 + $0xf0] sm:$0xff]
      %v257 = vld [vmem:[%s219 + $0xf8] sm:$0xff]
      %v258 = vld [vmem:[%s219 + $0x100] sm:$0x3]
      %v259 = vld [vmem:[%s219 + $0x108] sm:$0xff]
      %v260 = vld [vmem:[%s219 + $0x110] sm:$0xff]
      %v261 = vld [vmem:[%s219 + $0x118] sm:$0x3]
      %v262 = vld [vmem:[%s219 + $0x120] sm:$0xff]
      %v263 = vld [vmem:[%s219 + $0x128] sm:$0xff]
      %v264 = vld [vmem:[%s219 + $0x130] sm:$0x3]
      %v265 = vld [vmem:[%s219 + $0x138] sm:$0xff]
      %v266 = vld [vmem:[%s219 + $0x140] sm:$0xff]
      %v267 = vld [vmem:[%s219 + $0x148] sm:$0x3]
      %v268 = vld [vmem:[%s219 + $0x150] sm:$0xff]
      %v269 = vld [vmem:[%s219 + $0x158] sm:$0xff]
      %v270 = vld [vmem:[%s219 + $0x160] sm:$0x3]
      %v271 = vld [vmem:[%s219 + $0x168] sm:$0xff]
      %v272 = vld [vmem:[%s219 + $0x170] sm:$0xff]
      %v273 = vld [vmem:[%s219 + $0x178] sm:$0x3]
      %v274 = vld [vmem:[%s219 + $0x180] sm:$0xff]
      %v275 = vld [vmem:[%s219 + $0x188] sm:$0xff]
      %v276 = vld [vmem:[%s219 + $0x190] sm:$0x3]
      %v277 = vld [vmem:[%s219 + $0x198] sm:$0xff]
      %v278 = vld [vmem:[%s219 + $0x1a0] sm:$0xff]
      %v279 = vld [vmem:[%s219 + $0x1a8] sm:$0x3]
      %v280 = vpack.c.bf16 %v227, %v226
      %v281 = vpack.c.bf16 %v230, %v229
      %v282 = vpack.c.bf16 %v233, %v232
      %v283 = vpack.c.bf16 %v236, %v235
      %v284 = vpack.c.bf16 %v239, %v238
      %v285 = vpack.c.bf16 %v242, %v241
      %v286 = vpack.c.bf16 %v245, %v244
      %v287 = vpack.c.bf16 %v248, %v247
      %v288 = vpack.c.bf16 %v251, %v250
      %v289 = vpack.c.bf16 %v254, %v253
      %v290 = vpack.c.bf16 %v257, %v256
      %v291 = vpack.c.bf16 %v260, %v259
      %v292 = vpack.c.bf16 %v263, %v262
      %v293 = vpack.c.bf16 %v266, %v265
      %v294 = vpack.c.bf16 %v269, %v268
      %v295 = vpack.c.bf16 %v272, %v271
      %v296 = vld [vmem:[%s1] sm:$0xf]
      %vm345 = vcmask 1046528
      %v346 = vrot.slane %v226, 1
      %v347 = vrot.slane %v227, 1
      %v348 = vsel %vm345, %v346, %v347
      %v349 = vrot.slane %v228, 1
      %v350 = vsel %vm345, %v347, %v349
      %v351 = vrot.slane %v229, 1
      %v352 = vrot.slane %v230, 1
      %v353 = vsel %vm345, %v351, %v352
      %v354 = vrot.slane %v231, 1
      %v355 = vsel %vm345, %v352, %v354
      %v356 = vrot.slane %v232, 1
      %v357 = vrot.slane %v233, 1
      %v358 = vsel %vm345, %v356, %v357
      %v359 = vrot.slane %v234, 1
      %v360 = vsel %vm345, %v357, %v359
      %v361 = vrot.slane %v235, 1
      %v362 = vrot.slane %v236, 1
      %v363 = vsel %vm345, %v361, %v362
      %v364 = vrot.slane %v237, 1
      %v365 = vsel %vm345, %v362, %v364
      %v366 = vrot.slane %v238, 1
      %v367 = vrot.slane %v239, 1
      %v368 = vsel %vm345, %v366, %v367
      %v369 = vrot.slane %v240, 1
      %v370 = vsel %vm345, %v367, %v369
      %v371 = vrot.slane %v241, 1
      %v372 = vrot.slane %v242, 1
      %v373 = vsel %vm345, %v371, %v372
      %v374 = vrot.slane %v243, 1
      %v375 = vsel %vm345, %v372, %v374
      %v376 = vrot.slane %v244, 1
      %v377 = vrot.slane %v245, 1
      %v378 = vsel %vm345, %v376, %v377
      %v379 = vrot.slane %v246, 1
      %v380 = vsel %vm345, %v377, %v379
      %v381 = vrot.slane %v247, 1
      %v382 = vrot.slane %v248, 1
      %v383 = vsel %vm345, %v381, %v382
      %v384 = vrot.slane %v249, 1
      %v385 = vsel %vm345, %v382, %v384
      %v386 = vrot.slane %v250, 1
      %v387 = vrot.slane %v251, 1
      %v388 = vsel %vm345, %v386, %v387
      %v389 = vrot.slane %v252, 1
      %v390 = vsel %vm345, %v387, %v389
      %v391 = vrot.slane %v253, 1
      %v392 = vrot.slane %v254, 1
      %v393 = vsel %vm345, %v391, %v392
      %v394 = vrot.slane %v255, 1
      %v395 = vsel %vm345, %v392, %v394
      %v396 = vrot.slane %v256, 1
      %v397 = vrot.slane %v257, 1
      %v398 = vsel %vm345, %v396, %v397
      %v399 = vrot.slane %v258, 1
      %v400 = vsel %vm345, %v397, %v399
      %v401 = vrot.slane %v259, 1
      %v402 = vrot.slane %v260, 1
      %v403 = vsel %vm345, %v401, %v402
      %v404 = vrot.slane %v261, 1
      %v405 = vsel %vm345, %v402, %v404
      %v406 = vrot.slane %v262, 1
      %v407 = vrot.slane %v263, 1
      %v408 = vsel %vm345, %v406, %v407
      %v409 = vrot.slane %v264, 1
      %v410 = vsel %vm345, %v407, %v409
      %v411 = vrot.slane %v265, 1
      %v412 = vrot.slane %v266, 1
      %v413 = vsel %vm345, %v411, %v412
      %v414 = vrot.slane %v267, 1
      %v415 = vsel %vm345, %v412, %v414
      %v416 = vrot.slane %v268, 1
      %v417 = vrot.slane %v269, 1
      %v418 = vsel %vm345, %v416, %v417
      %v419 = vrot.slane %v270, 1
      %v420 = vsel %vm345, %v417, %v419
      %v421 = vrot.slane %v271, 1
      %v422 = vrot.slane %v272, 1
      %v423 = vsel %vm345, %v421, %v422
      %v424 = vrot.slane %v273, 1
      %v425 = vsel %vm345, %v422, %v424
      %v458 = vpack.c.bf16 %v350, %v348
      %v459 = vpack.c.bf16 %v355, %v353
      %v460 = vpack.c.bf16 %v360, %v358
      %v461 = vpack.c.bf16 %v365, %v363
      %v462 = vpack.c.bf16 %v370, %v368
      %v463 = vpack.c.bf16 %v375, %v373
      %v464 = vpack.c.bf16 %v380, %v378
      %v465 = vpack.c.bf16 %v385, %v383
      %v466 = vpack.c.bf16 %v390, %v388
      %v467 = vpack.c.bf16 %v395, %v393
      %v468 = vpack.c.bf16 %v400, %v398
      %v469 = vpack.c.bf16 %v405, %v403
      %v470 = vpack.c.bf16 %v410, %v408
      %v471 = vpack.c.bf16 %v415, %v413
      %v472 = vpack.c.bf16 %v420, %v418
      %v473 = vpack.c.bf16 %v425, %v423
      %s474 = scalar_lea.vmem %s1, 4
      %v475 = vld [vmem:[%s474] sm:$0xf]
      %vm476 = vcmask 64512
      %v478 = vsel %vm476, %v458, 0
      %v481 = vsel %vm476, %v459, 0
      %v484 = vsel %vm476, %v460, 0
      %v487 = vsel %vm476, %v461, 0
      %v490 = vsel %vm476, %v462, 0
      %v493 = vsel %vm476, %v463, 0
      %v496 = vsel %vm476, %v464, 0
      %v499 = vsel %vm476, %v465, 0
      %v502 = vsel %vm476, %v466, 0
      %v505 = vsel %vm476, %v467, 0
      %v508 = vsel %vm476, %v468, 0
      %v511 = vsel %vm476, %v469, 0
      %v514 = vsel %vm476, %v470, 0
      %v517 = vsel %vm476, %v471, 0
      %v520 = vsel %vm476, %v472, 0
      %v523 = vsel %vm476, %v473, 0
      %vm525 = vcmask 1043456
      %v527 = vsel %vm525, %v475, 0
      %529 = vmatprep.subr.bf16.mxu0 0
      %530 = vmatpush1.bf16.msra.mxu0 0
      %531 = vmatprep.subr.bf16.mxu0 0
      %532 = vmatpush1.bf16.msra.mxu0 0
      %533 = vmatprep.subr.bf16.mxu0 0
      %534 = vmatpush1.bf16.msra.mxu0 0
      %535 = vmatprep.subr.bf16.mxu0 0
      %536 = vmatpush1.bf16.msra.mxu0 0
      %537 = vmatprep.subr.bf16.mxu0 0
      %538 = vmatpush1.bf16.msra.mxu0 0
      %539 = vmatprep.subr.bf16.mxu0 0
      %540 = vmatpush1.bf16.msra.mxu0 0
      %541 = vmatprep.subr.bf16.mxu0 0
      %542 = vmatpush1.bf16.msra.mxu0 0
      %543 = vmatprep.subr.bf16.mxu0 0
      %544 = vmatpush1.bf16.msra.mxu0 %v527
      %545 = vmatprep.subr.bf16.mxu0 0
      %546 = vmatpush2.bf16.msra.mxu0 0
      %547 = vmatprep.subr.bf16.mxu0 0
      %548 = vmatpush2.bf16.msra.mxu0 0
      %549 = vmatprep.subr.bf16.mxu0 0
      %550 = vmatpush2.bf16.msra.mxu0 0
      %551 = vmatprep.subr.bf16.mxu0 0
      %552 = vmatpush2.bf16.msra.mxu0 0
      %553 = vmatprep.subr.bf16.mxu0 0
      %554 = vmatpush2.bf16.msra.mxu0 0
      %555 = vmatprep.subr.bf16.mxu0 0
      %556 = vmatpush2.bf16.msra.mxu0 0
      %557 = vmatprep.subr.bf16.mxu0 0
      %558 = vmatpush2.bf16.msra.mxu0 0
      %559 = vmatprep.subr.bf16.mxu0 0
      %560 = vmatpush2.bf16.msra.mxu0 0
      %561 = vmatprep.mubr.bf16.mxu0 0
      %562 = vmatmul.mubr.bf16.gmra.mxu0 %v478
      %v563 = vpop.f32.mrf.mxu0
      %v564 = vadd.f32 0.0, %v563
      %v565 = vpop.f32.mrf.mxu0
      %v566 = vpop.f32.mrf.mxu0
      %v567 = vadd.f32 0.0, %v566
      %v568 = vpop.f32.mrf.mxu0
      %569 = vmatprep.mubr.bf16.mxu0 0
      %570 = vmatmul.mubr.bf16.gmra.mxu0 %v481
      %v571 = vpop.f32.mrf.mxu0
      %v572 = vadd.f32 0.0, %v571
      %v573 = vpop.f32.mrf.mxu0
      %v574 = vpop.f32.mrf.mxu0
      %v575 = vadd.f32 0.0, %v574
      %v576 = vpop.f32.mrf.mxu0
      %577 = vmatprep.mubr.bf16.mxu0 0
      %578 = vmatmul.mubr.bf16.gmra.mxu0 %v484
      %v579 = vpop.f32.mrf.mxu0
      %v580 = vadd.f32 0.0, %v579
      %v581 = vpop.f32.mrf.mxu0
      %v582 = vpop.f32.mrf.mxu0
      %v583 = vadd.f32 0.0, %v582
      %v584 = vpop.f32.mrf.mxu0
      %585 = vmatprep.mubr.bf16.mxu0 0
      %586 = vmatmul.mubr.bf16.gmra.mxu0 %v487
      %v587 = vpop.f32.mrf.mxu0
      %v588 = vadd.f32 0.0, %v587
      %v589 = vpop.f32.mrf.mxu0
      %v590 = vpop.f32.mrf.mxu0
      %v591 = vadd.f32 0.0, %v590
      %v592 = vpop.f32.mrf.mxu0
      %593 = vmatprep.mubr.bf16.mxu0 0
      %594 = vmatmul.mubr.bf16.gmra.mxu0 %v490
      %v595 = vpop.f32.mrf.mxu0
      %v596 = vadd.f32 0.0, %v595
      %v597 = vpop.f32.mrf.mxu0
      %v598 = vpop.f32.mrf.mxu0
      %v599 = vadd.f32 0.0, %v598
      %v600 = vpop.f32.mrf.mxu0
      %601 = vmatprep.mubr.bf16.mxu0 0
      %602 = vmatmul.mubr.bf16.gmra.mxu0 %v493
      %v603 = vpop.f32.mrf.mxu0
      %v604 = vadd.f32 0.0, %v603
      %v605 = vpop.f32.mrf.mxu0
      %v606 = vpop.f32.mrf.mxu0
      %v607 = vadd.f32 0.0, %v606
      %v608 = vpop.f32.mrf.mxu0
      %609 = vmatprep.mubr.bf16.mxu0 0
      %610 = vmatmul.mubr.bf16.gmra.mxu0 %v496
      %v611 = vpop.f32.mrf.mxu0
      %v612 = vadd.f32 0.0, %v611
      %v613 = vpop.f32.mrf.mxu0
      %v614 = vpop.f32.mrf.mxu0
      %v615 = vadd.f32 0.0, %v614
      %v616 = vpop.f32.mrf.mxu0
      %617 = vmatprep.mubr.bf16.mxu0 0
      %618 = vmatmul.mubr.bf16.gmra.mxu0 %v499
      %v619 = vpop.f32.mrf.mxu0
      %v620 = vadd.f32 0.0, %v619
      %v621 = vpop.f32.mrf.mxu0
      %v622 = vpop.f32.mrf.mxu0
      %v623 = vadd.f32 0.0, %v622
      %v624 = vpop.f32.mrf.mxu0
      %625 = vmatprep.mubr.bf16.mxu0 0
      %626 = vmatmul.mubr.bf16.gmra.mxu0 %v502
      %v627 = vpop.f32.mrf.mxu0
      %v628 = vadd.f32 0.0, %v627
      %v629 = vpop.f32.mrf.mxu0
      %v630 = vpop.f32.mrf.mxu0
      %v631 = vadd.f32 0.0, %v630
      %v632 = vpop.f32.mrf.mxu0
      %633 = vmatprep.mubr.bf16.mxu0 0
      %634 = vmatmul.mubr.bf16.gmra.mxu0 %v505
      %v635 = vpop.f32.mrf.mxu0
      %v636 = vadd.f32 0.0, %v635
      %v637 = vpop.f32.mrf.mxu0
      %v638 = vpop.f32.mrf.mxu0
      %v639 = vadd.f32 0.0, %v638
      %v640 = vpop.f32.mrf.mxu0
      %641 = vmatprep.mubr.bf16.mxu0 0
      %642 = vmatmul.mubr.bf16.gmra.mxu0 %v508
      %v643 = vpop.f32.mrf.mxu0
      %v644 = vadd.f32 0.0, %v643
      %v645 = vpop.f32.mrf.mxu0
      %v646 = vpop.f32.mrf.mxu0
      %v647 = vadd.f32 0.0, %v646
      %v648 = vpop.f32.mrf.mxu0
      %649 = vmatprep.mubr.bf16.mxu0 0
      %650 = vmatmul.mubr.bf16.gmra.mxu0 %v511
      %v651 = vpop.f32.mrf.mxu0
      %v652 = vadd.f32 0.0, %v651
      %v653 = vpop.f32.mrf.mxu0
      %v654 = vpop.f32.mrf.mxu0
      %v655 = vadd.f32 0.0, %v654
      %v656 = vpop.f32.mrf.mxu0
      %657 = vmatprep.mubr.bf16.mxu0 0
      %658 = vmatmul.mubr.bf16.gmra.mxu0 %v514
      %v659 = vpop.f32.mrf.mxu0
      %v660 = vadd.f32 0.0, %v659
      %v661 = vpop.f32.mrf.mxu0
      %v662 = vpop.f32.mrf.mxu0
      %v663 = vadd.f32 0.0, %v662
      %v664 = vpop.f32.mrf.mxu0
      %665 = vmatprep.mubr.bf16.mxu0 0
      %666 = vmatmul.mubr.bf16.gmra.mxu0 %v517
      %v667 = vpop.f32.mrf.mxu0
      %v668 = vadd.f32 0.0, %v667
      %v669 = vpop.f32.mrf.mxu0
      %v670 = vpop.f32.mrf.mxu0
      %v671 = vadd.f32 0.0, %v670
      %v672 = vpop.f32.mrf.mxu0
      %673 = vmatprep.mubr.bf16.mxu0 0
      %674 = vmatmul.mubr.bf16.gmra.mxu0 %v520
      %v675 = vpop.f32.mrf.mxu0
      %v676 = vadd.f32 0.0, %v675
      %v677 = vpop.f32.mrf.mxu0
      %v678 = vpop.f32.mrf.mxu0
      %v679 = vadd.f32 0.0, %v678
      %v680 = vpop.f32.mrf.mxu0
      %681 = vmatprep.mubr.bf16.mxu0 0
      %682 = vmatmul.mubr.bf16.gmra.mxu0 %v523
      %v683 = vpop.f32.mrf.mxu0
      %v684 = vadd.f32 0.0, %v683
      %v685 = vpop.f32.mrf.mxu0
      %v686 = vpop.f32.mrf.mxu0
      %v687 = vadd.f32 0.0, %v686
      %v688 = vpop.f32.mrf.mxu0
      %689 = vdwg.mxu0
      %v691 = vsel %vm476, %v280, 0
      %v694 = vsel %vm476, %v281, 0
      %v697 = vsel %vm476, %v282, 0
      %v700 = vsel %vm476, %v283, 0
      %v703 = vsel %vm476, %v284, 0
      %v706 = vsel %vm476, %v285, 0
      %v709 = vsel %vm476, %v286, 0
      %v712 = vsel %vm476, %v287, 0
      %v715 = vsel %vm476, %v288, 0
      %v718 = vsel %vm476, %v289, 0
      %v721 = vsel %vm476, %v290, 0
      %v724 = vsel %vm476, %v291, 0
      %v727 = vsel %vm476, %v292, 0
      %v730 = vsel %vm476, %v293, 0
      %v733 = vsel %vm476, %v294, 0
      %v736 = vsel %vm476, %v295, 0
      %v739 = vsel %vm525, %v296, 0
      %741 = vmatprep.subr.bf16.mxu0 0
      %742 = vmatpush1.bf16.msra.mxu0 0
      %743 = vmatprep.subr.bf16.mxu0 0
      %744 = vmatpush1.bf16.msra.mxu0 0
      %745 = vmatprep.subr.bf16.mxu0 0
      %746 = vmatpush1.bf16.msra.mxu0 0
      %747 = vmatprep.subr.bf16.mxu0 0
      %748 = vmatpush1.bf16.msra.mxu0 0
      %749 = vmatprep.subr.bf16.mxu0 0
      %750 = vmatpush1.bf16.msra.mxu0 0
      %751 = vmatprep.subr.bf16.mxu0 0
      %752 = vmatpush1.bf16.msra.mxu0 0
      %753 = vmatprep.subr.bf16.mxu0 0
      %754 = vmatpush1.bf16.msra.mxu0 0
      %755 = vmatprep.subr.bf16.mxu0 0
      %756 = vmatpush1.bf16.msra.mxu0 %v739
      %757 = vmatprep.subr.bf16.mxu0 0
      %758 = vmatpush2.bf16.msra.mxu0 0
      %759 = vmatprep.subr.bf16.mxu0 0
      %760 = vmatpush2.bf16.msra.mxu0 0
      %761 = vmatprep.subr.bf16.mxu0 0
      %762 = vmatpush2.bf16.msra.mxu0 0
      %763 = vmatprep.subr.bf16.mxu0 0
      %764 = vmatpush2.bf16.msra.mxu0 0
      %765 = vmatprep.subr.bf16.mxu0 0
      %766 = vmatpush2.bf16.msra.mxu0 0
      %767 = vmatprep.subr.bf16.mxu0 0
      %768 = vmatpush2.bf16.msra.mxu0 0
      %769 = vmatprep.subr.bf16.mxu0 0
      %770 = vmatpush2.bf16.msra.mxu0 0
      %771 = vmatprep.subr.bf16.mxu0 0
      %772 = vmatpush2.bf16.msra.mxu0 0
      %773 = vmatprep.mubr.bf16.mxu0 0
      %774 = vmatmul.mubr.bf16.gmra.mxu0 %v691
      %v775 = vpop.f32.mrf.mxu0
      %v776 = vadd.f32 %v564, %v775
      %v777 = vpop.f32.mrf.mxu0
      %v778 = vpop.f32.mrf.mxu0
      %v779 = vadd.f32 %v567, %v778
      %v780 = vpop.f32.mrf.mxu0
      %781 = vmatprep.mubr.bf16.mxu0 0
      %782 = vmatmul.mubr.bf16.gmra.mxu0 %v694
      %v783 = vpop.f32.mrf.mxu0
      %v784 = vadd.f32 %v572, %v783
      %v785 = vpop.f32.mrf.mxu0
      %v786 = vpop.f32.mrf.mxu0
      %v787 = vadd.f32 %v575, %v786
      %v788 = vpop.f32.mrf.mxu0
      %789 = vmatprep.mubr.bf16.mxu0 0
      %790 = vmatmul.mubr.bf16.gmra.mxu0 %v697
      %v791 = vpop.f32.mrf.mxu0
      %v792 = vadd.f32 %v580, %v791
      %v793 = vpop.f32.mrf.mxu0
      %v794 = vpop.f32.mrf.mxu0
      %v795 = vadd.f32 %v583, %v794
      %v796 = vpop.f32.mrf.mxu0
      %797 = vmatprep.mubr.bf16.mxu0 0
      %798 = vmatmul.mubr.bf16.gmra.mxu0 %v700
      %v799 = vpop.f32.mrf.mxu0
      %v800 = vadd.f32 %v588, %v799
      %v801 = vpop.f32.mrf.mxu0
      %v802 = vpop.f32.mrf.mxu0
      %v803 = vadd.f32 %v591, %v802
      %v804 = vpop.f32.mrf.mxu0
      %805 = vmatprep.mubr.bf16.mxu0 0
      %806 = vmatmul.mubr.bf16.gmra.mxu0 %v703
      %v807 = vpop.f32.mrf.mxu0
      %v808 = vadd.f32 %v596, %v807
      %v809 = vpop.f32.mrf.mxu0
      %v810 = vpop.f32.mrf.mxu0
      %v811 = vadd.f32 %v599, %v810
      %v812 = vpop.f32.mrf.mxu0
      %813 = vmatprep.mubr.bf16.mxu0 0
      %814 = vmatmul.mubr.bf16.gmra.mxu0 %v706
      %v815 = vpop.f32.mrf.mxu0
      %v816 = vadd.f32 %v604, %v815
      %v817 = vpop.f32.mrf.mxu0
      %v818 = vpop.f32.mrf.mxu0
      %v819 = vadd.f32 %v607, %v818
      %v820 = vpop.f32.mrf.mxu0
      %821 = vmatprep.mubr.bf16.mxu0 0
      %822 = vmatmul.mubr.bf16.gmra.mxu0 %v709
      %v823 = vpop.f32.mrf.mxu0
      %v824 = vadd.f32 %v612, %v823
      %v825 = vpop.f32.mrf.mxu0
      %v826 = vpop.f32.mrf.mxu0
      %v827 = vadd.f32 %v615, %v826
      %v828 = vpop.f32.mrf.mxu0
      %829 = vmatprep.mubr.bf16.mxu0 0
      %830 = vmatmul.mubr.bf16.gmra.mxu0 %v712
      %v831 = vpop.f32.mrf.mxu0
      %v832 = vadd.f32 %v620, %v831
      %v833 = vpop.f32.mrf.mxu0
      %v834 = vpop.f32.mrf.mxu0
      %v835 = vadd.f32 %v623, %v834
      %v836 = vpop.f32.mrf.mxu0
      %837 = vmatprep.mubr.bf16.mxu0 0
      %838 = vmatmul.mubr.bf16.gmra.mxu0 %v715
      %v839 = vpop.f32.mrf.mxu0
      %v840 = vadd.f32 %v628, %v839
      %v841 = vpop.f32.mrf.mxu0
      %v842 = vpop.f32.mrf.mxu0
      %v843 = vadd.f32 %v631, %v842
      %v844 = vpop.f32.mrf.mxu0
      %845 = vmatprep.mubr.bf16.mxu0 0
      %846 = vmatmul.mubr.bf16.gmra.mxu0 %v718
      %v847 = vpop.f32.mrf.mxu0
      %v848 = vadd.f32 %v636, %v847
      %v849 = vpop.f32.mrf.mxu0
      %v850 = vpop.f32.mrf.mxu0
      %v851 = vadd.f32 %v639, %v850
      %v852 = vpop.f32.mrf.mxu0
      %853 = vmatprep.mubr.bf16.mxu0 0
      %854 = vmatmul.mubr.bf16.gmra.mxu0 %v721
      %v855 = vpop.f32.mrf.mxu0
      %v856 = vadd.f32 %v644, %v855
      %v857 = vpop.f32.mrf.mxu0
      %v858 = vpop.f32.mrf.mxu0
      %v859 = vadd.f32 %v647, %v858
      %v860 = vpop.f32.mrf.mxu0
      %861 = vmatprep.mubr.bf16.mxu0 0
      %862 = vmatmul.mubr.bf16.gmra.mxu0 %v724
      %v863 = vpop.f32.mrf.mxu0
      %v864 = vadd.f32 %v652, %v863
      %v865 = vpop.f32.mrf.mxu0
      %v866 = vpop.f32.mrf.mxu0
      %v867 = vadd.f32 %v655, %v866
      %v868 = vpop.f32.mrf.mxu0
      %869 = vmatprep.mubr.bf16.mxu0 0
      %870 = vmatmul.mubr.bf16.gmra.mxu0 %v727
      %v871 = vpop.f32.mrf.mxu0
      %v872 = vadd.f32 %v660, %v871
      %v873 = vpop.f32.mrf.mxu0
      %v874 = vpop.f32.mrf.mxu0
      %v875 = vadd.f32 %v663, %v874
      %v876 = vpop.f32.mrf.mxu0
      %877 = vmatprep.mubr.bf16.mxu0 0
      %878 = vmatmul.mubr.bf16.gmra.mxu0 %v730
      %v879 = vpop.f32.mrf.mxu0
      %v880 = vadd.f32 %v668, %v879
      %v881 = vpop.f32.mrf.mxu0
      %v882 = vpop.f32.mrf.mxu0
      %v883 = vadd.f32 %v671, %v882
      %v884 = vpop.f32.mrf.mxu0
      %885 = vmatprep.mubr.bf16.mxu0 0
      %886 = vmatmul.mubr.bf16.gmra.mxu0 %v733
      %v887 = vpop.f32.mrf.mxu0
      %v888 = vadd.f32 %v676, %v887
      %v889 = vpop.f32.mrf.mxu0
      %v890 = vpop.f32.mrf.mxu0
      %v891 = vadd.f32 %v679, %v890
      %v892 = vpop.f32.mrf.mxu0
      %893 = vmatprep.mubr.bf16.mxu0 0
      %894 = vmatmul.mubr.bf16.gmra.mxu0 %v736
      %v895 = vpop.f32.mrf.mxu0
      %v896 = vadd.f32 %v684, %v895
      %v897 = vpop.f32.mrf.mxu0
      %v898 = vpop.f32.mrf.mxu0
      %v899 = vadd.f32 %v687, %v898
      %v900 = vpop.f32.mrf.mxu0
      %901 = vdwg.mxu0
      %vm902 = vcmask 1045504
      %v903 = vrot.slane %v226, 2
      %v904 = vrot.slane %v227, 2
      %v905 = vsel %vm902, %v903, %v904
      %v906 = vrot.slane %v228, 2
      %v907 = vsel %vm902, %v904, %v906
      %v908 = vrot.slane %v229, 2
      %v909 = vrot.slane %v230, 2
      %v910 = vsel %vm902, %v908, %v909
      %v911 = vrot.slane %v231, 2
      %v912 = vsel %vm902, %v909, %v911
      %v913 = vrot.slane %v232, 2
      %v914 = vrot.slane %v233, 2
      %v915 = vsel %vm902, %v913, %v914
      %v916 = vrot.slane %v234, 2
      %v917 = vsel %vm902, %v914, %v916
      %v918 = vrot.slane %v235, 2
      %v919 = vrot.slane %v236, 2
      %v920 = vsel %vm902, %v918, %v919
      %v921 = vrot.slane %v237, 2
      %v922 = vsel %vm902, %v919, %v921
      %v923 = vrot.slane %v238, 2
      %v924 = vrot.slane %v239, 2
      %v925 = vsel %vm902, %v923, %v924
      %v926 = vrot.slane %v240, 2
      %v927 = vsel %vm902, %v924, %v926
      %v928 = vrot.slane %v241, 2
      %v929 = vrot.slane %v242, 2
      %v930 = vsel %vm902, %v928, %v929
      %v931 = vrot.slane %v243, 2
      %v932 = vsel %vm902, %v929, %v931
      %v933 = vrot.slane %v244, 2
      %v934 = vrot.slane %v245, 2
      %v935 = vsel %vm902, %v933, %v934
      %v936 = vrot.slane %v246, 2
      %v937 = vsel %vm902, %v934, %v936
      %v938 = vrot.slane %v247, 2
      %v939 = vrot.slane %v248, 2
      %v940 = vsel %vm902, %v938, %v939
      %v941 = vrot.slane %v249, 2
      %v942 = vsel %vm902, %v939, %v941
      %v943 = vrot.slane %v250, 2
      %v944 = vrot.slane %v251, 2
      %v945 = vsel %vm902, %v943, %v944
      %v946 = vrot.slane %v252, 2
      %v947 = vsel %vm902, %v944, %v946
      %v948 = vrot.slane %v253, 2
      %v949 = vrot.slane %v254, 2
      %v950 = vsel %vm902, %v948, %v949
      %v951 = vrot.slane %v255, 2
      %v952 = vsel %vm902, %v949, %v951
      %v953 = vrot.slane %v256, 2
      %v954 = vrot.slane %v257, 2
      %v955 = vsel %vm902, %v953, %v954
      %v956 = vrot.slane %v258, 2
      %v957 = vsel %vm902, %v954, %v956
      %v958 = vrot.slane %v259, 2
      %v959 = vrot.slane %v260, 2
      %v960 = vsel %vm902, %v958, %v959
      %v961 = vrot.slane %v261, 2
      %v962 = vsel %vm902, %v959, %v961
      %v963 = vrot.slane %v262, 2
      %v964 = vrot.slane %v263, 2
      %v965 = vsel %vm902, %v963, %v964
      %v966 = vrot.slane %v264, 2
      %v967 = vsel %vm902, %v964, %v966
      %v968 = vrot.slane %v265, 2
      %v969 = vrot.slane %v266, 2
      %v970 = vsel %vm902, %v968, %v969
      %v971 = vrot.slane %v267, 2
      %v972 = vsel %vm902, %v969, %v971
      %v973 = vrot.slane %v268, 2
      %v974 = vrot.slane %v269, 2
      %v975 = vsel %vm902, %v973, %v974
      %v976 = vrot.slane %v270, 2
      %v977 = vsel %vm902, %v974, %v976
      %v978 = vrot.slane %v271, 2
      %v979 = vrot.slane %v272, 2
      %v980 = vsel %vm902, %v978, %v979
      %v981 = vrot.slane %v273, 2
      %v982 = vsel %vm902, %v979, %v981
      %v1015 = vpack.c.bf16 %v907, %v905
      %v1016 = vpack.c.bf16 %v912, %v910
      %v1017 = vpack.c.bf16 %v917, %v915
      %v1018 = vpack.c.bf16 %v922, %v920
      %v1019 = vpack.c.bf16 %v927, %v925
      %v1020 = vpack.c.bf16 %v932, %v930
      %v1021 = vpack.c.bf16 %v937, %v935
      %v1022 = vpack.c.bf16 %v942, %v940
      %v1023 = vpack.c.bf16 %v947, %v945
      %v1024 = vpack.c.bf16 %v952, %v950
      %v1025 = vpack.c.bf16 %v957, %v955
      %v1026 = vpack.c.bf16 %v962, %v960
      %v1027 = vpack.c.bf16 %v967, %v965
      %v1028 = vpack.c.bf16 %v972, %v970
      %v1029 = vpack.c.bf16 %v977, %v975
      %v1030 = vpack.c.bf16 %v982, %v980
      %s1031 = scalar_lea.vmem %s1, 8
      %v1032 = vld [vmem:[%s1031] sm:$0xf]
      %v1034 = vsel %vm476, %v1015, 0
      %v1037 = vsel %vm476, %v1016, 0
      %v1040 = vsel %vm476, %v1017, 0
      %v1043 = vsel %vm476, %v1018, 0
      %v1046 = vsel %vm476, %v1019, 0
      %v1049 = vsel %vm476, %v1020, 0
      %v1052 = vsel %vm476, %v1021, 0
      %v1055 = vsel %vm476, %v1022, 0
      %v1058 = vsel %vm476, %v1023, 0
      %v1061 = vsel %vm476, %v1024, 0
      %v1064 = vsel %vm476, %v1025, 0
      %v1067 = vsel %vm476, %v1026, 0
      %v1070 = vsel %vm476, %v1027, 0
      %v1073 = vsel %vm476, %v1028, 0
      %v1076 = vsel %vm476, %v1029, 0
      %v1079 = vsel %vm476, %v1030, 0
      %v1082 = vsel %vm525, %v1032, 0
      %1084 = vmatprep.subr.bf16.mxu0 0
      %1085 = vmatpush1.bf16.msra.mxu0 0
      %1086 = vmatprep.subr.bf16.mxu0 0
      %1087 = vmatpush1.bf16.msra.mxu0 0
      %1088 = vmatprep.subr.bf16.mxu0 0
      %1089 = vmatpush1.bf16.msra.mxu0 0
      %1090 = vmatprep.subr.bf16.mxu0 0
      %1091 = vmatpush1.bf16.msra.mxu0 0
      %1092 = vmatprep.subr.bf16.mxu0 0
      %1093 = vmatpush1.bf16.msra.mxu0 0
      %1094 = vmatprep.subr.bf16.mxu0 0
      %1095 = vmatpush1.bf16.msra.mxu0 0
      %1096 = vmatprep.subr.bf16.mxu0 0
      %1097 = vmatpush1.bf16.msra.mxu0 0
      %1098 = vmatprep.subr.bf16.mxu0 0
      %1099 = vmatpush1.bf16.msra.mxu0 %v1082
      %1100 = vmatprep.subr.bf16.mxu0 0
      %1101 = vmatpush2.bf16.msra.mxu0 0
      %1102 = vmatprep.subr.bf16.mxu0 0
      %1103 = vmatpush2.bf16.msra.mxu0 0
      %1104 = vmatprep.subr.bf16.mxu0 0
      %1105 = vmatpush2.bf16.msra.mxu0 0
      %1106 = vmatprep.subr.bf16.mxu0 0
      %1107 = vmatpush2.bf16.msra.mxu0 0
      %1108 = vmatprep.subr.bf16.mxu0 0
      %1109 = vmatpush2.bf16.msra.mxu0 0
      %1110 = vmatprep.subr.bf16.mxu0 0
      %1111 = vmatpush2.bf16.msra.mxu0 0
      %1112 = vmatprep.subr.bf16.mxu0 0
      %1113 = vmatpush2.bf16.msra.mxu0 0
      %1114 = vmatprep.subr.bf16.mxu0 0
      %1115 = vmatpush2.bf16.msra.mxu0 0
      %1116 = vmatprep.mubr.bf16.mxu0 0
      %1117 = vmatmul.mubr.bf16.gmra.mxu0 %v1034
      %v1118 = vpop.f32.mrf.mxu0
      %v1119 = vadd.f32 0.0, %v1118
      %v1120 = vpop.f32.mrf.mxu0
      %v1121 = vpop.f32.mrf.mxu0
      %v1122 = vadd.f32 0.0, %v1121
      %v1123 = vpop.f32.mrf.mxu0
      %1124 = vmatprep.mubr.bf16.mxu0 0
      %1125 = vmatmul.mubr.bf16.gmra.mxu0 %v1037
      %v1126 = vpop.f32.mrf.mxu0
      %v1127 = vadd.f32 0.0, %v1126
      %v1128 = vpop.f32.mrf.mxu0
      %v1129 = vpop.f32.mrf.mxu0
      %v1130 = vadd.f32 0.0, %v1129
      %v1131 = vpop.f32.mrf.mxu0
      %1132 = vmatprep.mubr.bf16.mxu0 0
      %1133 = vmatmul.mubr.bf16.gmra.mxu0 %v1040
      %v1134 = vpop.f32.mrf.mxu0
      %v1135 = vadd.f32 0.0, %v1134
      %v1136 = vpop.f32.mrf.mxu0
      %v1137 = vpop.f32.mrf.mxu0
      %v1138 = vadd.f32 0.0, %v1137
      %v1139 = vpop.f32.mrf.mxu0
      %1140 = vmatprep.mubr.bf16.mxu0 0
      %1141 = vmatmul.mubr.bf16.gmra.mxu0 %v1043
      %v1142 = vpop.f32.mrf.mxu0
      %v1143 = vadd.f32 0.0, %v1142
      %v1144 = vpop.f32.mrf.mxu0
      %v1145 = vpop.f32.mrf.mxu0
      %v1146 = vadd.f32 0.0, %v1145
      %v1147 = vpop.f32.mrf.mxu0
      %1148 = vmatprep.mubr.bf16.mxu0 0
      %1149 = vmatmul.mubr.bf16.gmra.mxu0 %v1046
      %v1150 = vpop.f32.mrf.mxu0
      %v1151 = vadd.f32 0.0, %v1150
      %v1152 = vpop.f32.mrf.mxu0
      %v1153 = vpop.f32.mrf.mxu0
      %v1154 = vadd.f32 0.0, %v1153
      %v1155 = vpop.f32.mrf.mxu0
      %1156 = vmatprep.mubr.bf16.mxu0 0
      %1157 = vmatmul.mubr.bf16.gmra.mxu0 %v1049
      %v1158 = vpop.f32.mrf.mxu0
      %v1159 = vadd.f32 0.0, %v1158
      %v1160 = vpop.f32.mrf.mxu0
      %v1161 = vpop.f32.mrf.mxu0
      %v1162 = vadd.f32 0.0, %v1161
      %v1163 = vpop.f32.mrf.mxu0
      %1164 = vmatprep.mubr.bf16.mxu0 0
      %1165 = vmatmul.mubr.bf16.gmra.mxu0 %v1052
      %v1166 = vpop.f32.mrf.mxu0
      %v1167 = vadd.f32 0.0, %v1166
      %v1168 = vpop.f32.mrf.mxu0
      %v1169 = vpop.f32.mrf.mxu0
      %v1170 = vadd.f32 0.0, %v1169
      %v1171 = vpop.f32.mrf.mxu0
      %1172 = vmatprep.mubr.bf16.mxu0 0
      %1173 = vmatmul.mubr.bf16.gmra.mxu0 %v1055
      %v1174 = vpop.f32.mrf.mxu0
      %v1175 = vadd.f32 0.0, %v1174
      %v1176 = vpop.f32.mrf.mxu0
      %v1177 = vpop.f32.mrf.mxu0
      %v1178 = vadd.f32 0.0, %v1177
      %v1179 = vpop.f32.mrf.mxu0
      %1180 = vmatprep.mubr.bf16.mxu0 0
      %1181 = vmatmul.mubr.bf16.gmra.mxu0 %v1058
      %v1182 = vpop.f32.mrf.mxu0
      %v1183 = vadd.f32 0.0, %v1182
      %v1184 = vpop.f32.mrf.mxu0
      %v1185 = vpop.f32.mrf.mxu0
      %v1186 = vadd.f32 0.0, %v1185
      %v1187 = vpop.f32.mrf.mxu0
      %1188 = vmatprep.mubr.bf16.mxu0 0
      %1189 = vmatmul.mubr.bf16.gmra.mxu0 %v1061
      %v1190 = vpop.f32.mrf.mxu0
      %v1191 = vadd.f32 0.0, %v1190
      %v1192 = vpop.f32.mrf.mxu0
      %v1193 = vpop.f32.mrf.mxu0
      %v1194 = vadd.f32 0.0, %v1193
      %v1195 = vpop.f32.mrf.mxu0
      %1196 = vmatprep.mubr.bf16.mxu0 0
      %1197 = vmatmul.mubr.bf16.gmra.mxu0 %v1064
      %v1198 = vpop.f32.mrf.mxu0
      %v1199 = vadd.f32 0.0, %v1198
      %v1200 = vpop.f32.mrf.mxu0
      %v1201 = vpop.f32.mrf.mxu0
      %v1202 = vadd.f32 0.0, %v1201
      %v1203 = vpop.f32.mrf.mxu0
      %1204 = vmatprep.mubr.bf16.mxu0 0
      %1205 = vmatmul.mubr.bf16.gmra.mxu0 %v1067
      %v1206 = vpop.f32.mrf.mxu0
      %v1207 = vadd.f32 0.0, %v1206
      %v1208 = vpop.f32.mrf.mxu0
      %v1209 = vpop.f32.mrf.mxu0
      %v1210 = vadd.f32 0.0, %v1209
      %v1211 = vpop.f32.mrf.mxu0
      %1212 = vmatprep.mubr.bf16.mxu0 0
      %1213 = vmatmul.mubr.bf16.gmra.mxu0 %v1070
      %v1214 = vpop.f32.mrf.mxu0
      %v1215 = vadd.f32 0.0, %v1214
      %v1216 = vpop.f32.mrf.mxu0
      %v1217 = vpop.f32.mrf.mxu0
      %v1218 = vadd.f32 0.0, %v1217
      %v1219 = vpop.f32.mrf.mxu0
      %1220 = vmatprep.mubr.bf16.mxu0 0
      %1221 = vmatmul.mubr.bf16.gmra.mxu0 %v1073
      %v1222 = vpop.f32.mrf.mxu0
      %v1223 = vadd.f32 0.0, %v1222
      %v1224 = vpop.f32.mrf.mxu0
      %v1225 = vpop.f32.mrf.mxu0
      %v1226 = vadd.f32 0.0, %v1225
      %v1227 = vpop.f32.mrf.mxu0
      %1228 = vmatprep.mubr.bf16.mxu0 0
      %1229 = vmatmul.mubr.bf16.gmra.mxu0 %v1076
      %v1230 = vpop.f32.mrf.mxu0
      %v1231 = vadd.f32 0.0, %v1230
      %v1232 = vpop.f32.mrf.mxu0
      %v1233 = vpop.f32.mrf.mxu0
      %v1234 = vadd.f32 0.0, %v1233
      %v1235 = vpop.f32.mrf.mxu0
      %1236 = vmatprep.mubr.bf16.mxu0 0
      %1237 = vmatmul.mubr.bf16.gmra.mxu0 %v1079
      %v1238 = vpop.f32.mrf.mxu0
      %v1239 = vadd.f32 0.0, %v1238
      %v1240 = vpop.f32.mrf.mxu0
      %v1241 = vpop.f32.mrf.mxu0
      %v1242 = vadd.f32 0.0, %v1241
      %v1243 = vpop.f32.mrf.mxu0
      %1244 = vdwg.mxu0
      %v1245 = vadd.f32 %v776, %v1119
      %v1246 = vadd.f32 %v779, %v1122
      %v1247 = vadd.f32 %v784, %v1127
      %v1248 = vadd.f32 %v787, %v1130
      %v1249 = vadd.f32 %v792, %v1135
      %v1250 = vadd.f32 %v795, %v1138
      %v1251 = vadd.f32 %v800, %v1143
      %v1252 = vadd.f32 %v803, %v1146
      %v1253 = vadd.f32 %v808, %v1151
      %v1254 = vadd.f32 %v811, %v1154
      %v1255 = vadd.f32 %v816, %v1159
      %v1256 = vadd.f32 %v819, %v1162
      %v1257 = vadd.f32 %v824, %v1167
      %v1258 = vadd.f32 %v827, %v1170
      %v1259 = vadd.f32 %v832, %v1175
      %v1260 = vadd.f32 %v835, %v1178
      %v1261 = vadd.f32 %v840, %v1183
      %v1262 = vadd.f32 %v843, %v1186
      %v1263 = vadd.f32 %v848, %v1191
      %v1264 = vadd.f32 %v851, %v1194
      %v1265 = vadd.f32 %v856, %v1199
      %v1266 = vadd.f32 %v859, %v1202
      %v1267 = vadd.f32 %v864, %v1207
      %v1268 = vadd.f32 %v867, %v1210
      %v1269 = vadd.f32 %v872, %v1215
      %v1270 = vadd.f32 %v875, %v1218
      %v1271 = vadd.f32 %v880, %v1223
      %v1272 = vadd.f32 %v883, %v1226
      %v1273 = vadd.f32 %v888, %v1231
      %v1274 = vadd.f32 %v891, %v1234
      %v1275 = vadd.f32 %v896, %v1239
      %v1276 = vadd.f32 %v899, %v1242
      %v1277 = vpack.c.bf16 %v275, %v274
      %s1278 = scalar_lea.vmem %s1, 12
      %v1279 = vld [vmem:[%s1278] sm:$0xf]
      %v1281 = vsel %vm476, %v1277, 0
      %v1284 = vsel %vm525, %v1279, 0
      %1286 = vmatprep.subr.bf16.mxu0 0
      %1287 = vmatpush1.bf16.msra.mxu0 0
      %1288 = vmatprep.subr.bf16.mxu0 0
      %1289 = vmatpush1.bf16.msra.mxu0 0
      %1290 = vmatprep.subr.bf16.mxu0 0
      %1291 = vmatpush1.bf16.msra.mxu0 0
      %1292 = vmatprep.subr.bf16.mxu0 0
      %1293 = vmatpush1.bf16.msra.mxu0 0
      %1294 = vmatprep.subr.bf16.mxu0 0
      %1295 = vmatpush1.bf16.msra.mxu0 0
      %1296 = vmatprep.subr.bf16.mxu0 0
      %1297 = vmatpush1.bf16.msra.mxu0 0
      %1298 = vmatprep.subr.bf16.mxu0 0
      %1299 = vmatpush1.bf16.msra.mxu0 0
      %1300 = vmatprep.subr.bf16.mxu0 0
      %1301 = vmatpush1.bf16.msra.mxu0 %v1284
      %1302 = vmatprep.subr.bf16.mxu0 0
      %1303 = vmatpush2.bf16.msra.mxu0 0
      %1304 = vmatprep.subr.bf16.mxu0 0
      %1305 = vmatpush2.bf16.msra.mxu0 0
      %1306 = vmatprep.subr.bf16.mxu0 0
      %1307 = vmatpush2.bf16.msra.mxu0 0
      %1308 = vmatprep.subr.bf16.mxu0 0
      %1309 = vmatpush2.bf16.msra.mxu0 0
      %1310 = vmatprep.subr.bf16.mxu0 0
      %1311 = vmatpush2.bf16.msra.mxu0 0
      %1312 = vmatprep.subr.bf16.mxu0 0
      %1313 = vmatpush2.bf16.msra.mxu0 0
      %1314 = vmatprep.subr.bf16.mxu0 0
      %1315 = vmatpush2.bf16.msra.mxu0 0
      %1316 = vmatprep.subr.bf16.mxu0 0
      %1317 = vmatpush2.bf16.msra.mxu0 0
      %1318 = vmatprep.mubr.bf16.mxu0 0
      %1319 = vmatmul.mubr.bf16.gmra.mxu0 %v694
      %v1320 = vpop.f32.mrf.mxu0
      %v1321 = vadd.f32 0.0, %v1320
      %v1322 = vpop.f32.mrf.mxu0
      %v1323 = vpop.f32.mrf.mxu0
      %v1324 = vadd.f32 0.0, %v1323
      %v1325 = vpop.f32.mrf.mxu0
      %1326 = vmatprep.mubr.bf16.mxu0 0
      %1327 = vmatmul.mubr.bf16.gmra.mxu0 %v697
      %v1328 = vpop.f32.mrf.mxu0
      %v1329 = vadd.f32 0.0, %v1328
      %v1330 = vpop.f32.mrf.mxu0
      %v1331 = vpop.f32.mrf.mxu0
      %v1332 = vadd.f32 0.0, %v1331
      %v1333 = vpop.f32.mrf.mxu0
      %1334 = vmatprep.mubr.bf16.mxu0 0
      %1335 = vmatmul.mubr.bf16.gmra.mxu0 %v700
      %v1336 = vpop.f32.mrf.mxu0
      %v1337 = vadd.f32 0.0, %v1336
      %v1338 = vpop.f32.mrf.mxu0
      %v1339 = vpop.f32.mrf.mxu0
      %v1340 = vadd.f32 0.0, %v1339
      %v1341 = vpop.f32.mrf.mxu0
      %1342 = vmatprep.mubr.bf16.mxu0 0
      %1343 = vmatmul.mubr.bf16.gmra.mxu0 %v703
      %v1344 = vpop.f32.mrf.mxu0
      %v1345 = vadd.f32 0.0, %v1344
      %v1346 = vpop.f32.mrf.mxu0
      %v1347 = vpop.f32.mrf.mxu0
      %v1348 = vadd.f32 0.0, %v1347
      %v1349 = vpop.f32.mrf.mxu0
      %1350 = vmatprep.mubr.bf16.mxu0 0
      %1351 = vmatmul.mubr.bf16.gmra.mxu0 %v706
      %v1352 = vpop.f32.mrf.mxu0
      %v1353 = vadd.f32 0.0, %v1352
      %v1354 = vpop.f32.mrf.mxu0
      %v1355 = vpop.f32.mrf.mxu0
      %v1356 = vadd.f32 0.0, %v1355
      %v1357 = vpop.f32.mrf.mxu0
      %1358 = vmatprep.mubr.bf16.mxu0 0
      %1359 = vmatmul.mubr.bf16.gmra.mxu0 %v709
      %v1360 = vpop.f32.mrf.mxu0
      %v1361 = vadd.f32 0.0, %v1360
      %v1362 = vpop.f32.mrf.mxu0
      %v1363 = vpop.f32.mrf.mxu0
      %v1364 = vadd.f32 0.0, %v1363
      %v1365 = vpop.f32.mrf.mxu0
      %1366 = vmatprep.mubr.bf16.mxu0 0
      %1367 = vmatmul.mubr.bf16.gmra.mxu0 %v712
      %v1368 = vpop.f32.mrf.mxu0
      %v1369 = vadd.f32 0.0, %v1368
      %v1370 = vpop.f32.mrf.mxu0
      %v1371 = vpop.f32.mrf.mxu0
      %v1372 = vadd.f32 0.0, %v1371
      %v1373 = vpop.f32.mrf.mxu0
      %1374 = vmatprep.mubr.bf16.mxu0 0
      %1375 = vmatmul.mubr.bf16.gmra.mxu0 %v715
      %v1376 = vpop.f32.mrf.mxu0
      %v1377 = vadd.f32 0.0, %v1376
      %v1378 = vpop.f32.mrf.mxu0
      %v1379 = vpop.f32.mrf.mxu0
      %v1380 = vadd.f32 0.0, %v1379
      %v1381 = vpop.f32.mrf.mxu0
      %1382 = vmatprep.mubr.bf16.mxu0 0
      %1383 = vmatmul.mubr.bf16.gmra.mxu0 %v718
      %v1384 = vpop.f32.mrf.mxu0
      %v1385 = vadd.f32 0.0, %v1384
      %v1386 = vpop.f32.mrf.mxu0
      %v1387 = vpop.f32.mrf.mxu0
      %v1388 = vadd.f32 0.0, %v1387
      %v1389 = vpop.f32.mrf.mxu0
      %1390 = vmatprep.mubr.bf16.mxu0 0
      %1391 = vmatmul.mubr.bf16.gmra.mxu0 %v721
      %v1392 = vpop.f32.mrf.mxu0
      %v1393 = vadd.f32 0.0, %v1392
      %v1394 = vpop.f32.mrf.mxu0
      %v1395 = vpop.f32.mrf.mxu0
      %v1396 = vadd.f32 0.0, %v1395
      %v1397 = vpop.f32.mrf.mxu0
      %1398 = vmatprep.mubr.bf16.mxu0 0
      %1399 = vmatmul.mubr.bf16.gmra.mxu0 %v724
      %v1400 = vpop.f32.mrf.mxu0
      %v1401 = vadd.f32 0.0, %v1400
      %v1402 = vpop.f32.mrf.mxu0
      %v1403 = vpop.f32.mrf.mxu0
      %v1404 = vadd.f32 0.0, %v1403
      %v1405 = vpop.f32.mrf.mxu0
      %1406 = vmatprep.mubr.bf16.mxu0 0
      %1407 = vmatmul.mubr.bf16.gmra.mxu0 %v727
      %v1408 = vpop.f32.mrf.mxu0
      %v1409 = vadd.f32 0.0, %v1408
      %v1410 = vpop.f32.mrf.mxu0
      %v1411 = vpop.f32.mrf.mxu0
      %v1412 = vadd.f32 0.0, %v1411
      %v1413 = vpop.f32.mrf.mxu0
      %1414 = vmatprep.mubr.bf16.mxu0 0
      %1415 = vmatmul.mubr.bf16.gmra.mxu0 %v730
      %v1416 = vpop.f32.mrf.mxu0
      %v1417 = vadd.f32 0.0, %v1416
      %v1418 = vpop.f32.mrf.mxu0
      %v1419 = vpop.f32.mrf.mxu0
      %v1420 = vadd.f32 0.0, %v1419
      %v1421 = vpop.f32.mrf.mxu0
      %1422 = vmatprep.mubr.bf16.mxu0 0
      %1423 = vmatmul.mubr.bf16.gmra.mxu0 %v733
      %v1424 = vpop.f32.mrf.mxu0
      %v1425 = vadd.f32 0.0, %v1424
      %v1426 = vpop.f32.mrf.mxu0
      %v1427 = vpop.f32.mrf.mxu0
      %v1428 = vadd.f32 0.0, %v1427
      %v1429 = vpop.f32.mrf.mxu0
      %1430 = vmatprep.mubr.bf16.mxu0 0
      %1431 = vmatmul.mubr.bf16.gmra.mxu0 %v736
      %v1432 = vpop.f32.mrf.mxu0
      %v1433 = vadd.f32 0.0, %v1432
      %v1434 = vpop.f32.mrf.mxu0
      %v1435 = vpop.f32.mrf.mxu0
      %v1436 = vadd.f32 0.0, %v1435
      %v1437 = vpop.f32.mrf.mxu0
      %1438 = vmatprep.mubr.bf16.mxu0 0
      %1439 = vmatmul.mubr.bf16.gmra.mxu0 %v1281
      %v1440 = vpop.f32.mrf.mxu0
      %v1441 = vadd.f32 0.0, %v1440
      %v1442 = vpop.f32.mrf.mxu0
      %v1443 = vpop.f32.mrf.mxu0
      %v1444 = vadd.f32 0.0, %v1443
      %v1445 = vpop.f32.mrf.mxu0
      %1446 = vdwg.mxu0
      %v1447 = vadd.f32 %v1245, %v1321
      %v1448 = vadd.f32 %v1246, %v1324
      %v1449 = vadd.f32 %v1247, %v1329
      %v1450 = vadd.f32 %v1248, %v1332
      %v1451 = vadd.f32 %v1249, %v1337
      %v1452 = vadd.f32 %v1250, %v1340
      %v1453 = vadd.f32 %v1251, %v1345
      %v1454 = vadd.f32 %v1252, %v1348
      %v1455 = vadd.f32 %v1253, %v1353
      %v1456 = vadd.f32 %v1254, %v1356
      %v1457 = vadd.f32 %v1255, %v1361
      %v1458 = vadd.f32 %v1256, %v1364
      %v1459 = vadd.f32 %v1257, %v1369
      %v1460 = vadd.f32 %v1258, %v1372
      %v1461 = vadd.f32 %v1259, %v1377
      %v1462 = vadd.f32 %v1260, %v1380
      %v1463 = vadd.f32 %v1261, %v1385
      %v1464 = vadd.f32 %v1262, %v1388
      %v1465 = vadd.f32 %v1263, %v1393
      %v1466 = vadd.f32 %v1264, %v1396
      %v1467 = vadd.f32 %v1265, %v1401
      %v1468 = vadd.f32 %v1266, %v1404
      %v1469 = vadd.f32 %v1267, %v1409
      %v1470 = vadd.f32 %v1268, %v1412
      %v1471 = vadd.f32 %v1269, %v1417
      %v1472 = vadd.f32 %v1270, %v1420
      %v1473 = vadd.f32 %v1271, %v1425
      %v1474 = vadd.f32 %v1272, %v1428
      %v1475 = vadd.f32 %v1273, %v1433
      %v1476 = vadd.f32 %v1274, %v1436
      %v1477 = vadd.f32 %v1275, %v1441
      %v1478 = vadd.f32 %v1276, %v1444
      %v1482 = vrot.slane %v274, 1
      %v1483 = vrot.slane %v275, 1
      %v1484 = vsel %vm345, %v1482, %v1483
      %v1485 = vrot.slane %v276, 1
      %v1486 = vsel %vm345, %v1483, %v1485
      %v1489 = vpack.c.bf16 %v1486, %v1484
      %s1490 = scalar_lea.vmem %s1, 16
      %v1491 = vld [vmem:[%s1490] sm:$0xf]
      %v1493 = vsel %vm476, %v1489, 0
      %v1496 = vsel %vm525, %v1491, 0
      %1498 = vmatprep.subr.bf16.mxu0 0
      %1499 = vmatpush1.bf16.msra.mxu0 0
      %1500 = vmatprep.subr.bf16.mxu0 0
      %1501 = vmatpush1.bf16.msra.mxu0 0
      %1502 = vmatprep.subr.bf16.mxu0 0
      %1503 = vmatpush1.bf16.msra.mxu0 0
      %1504 = vmatprep.subr.bf16.mxu0 0
      %1505 = vmatpush1.bf16.msra.mxu0 0
      %1506 = vmatprep.subr.bf16.mxu0 0
      %1507 = vmatpush1.bf16.msra.mxu0 0
      %1508 = vmatprep.subr.bf16.mxu0 0
      %1509 = vmatpush1.bf16.msra.mxu0 0
      %1510 = vmatprep.subr.bf16.mxu0 0
      %1511 = vmatpush1.bf16.msra.mxu0 0
      %1512 = vmatprep.subr.bf16.mxu0 0
      %1513 = vmatpush1.bf16.msra.mxu0 %v1496
      %1514 = vmatprep.subr.bf16.mxu0 0
      %1515 = vmatpush2.bf16.msra.mxu0 0
      %1516 = vmatprep.subr.bf16.mxu0 0
      %1517 = vmatpush2.bf16.msra.mxu0 0
      %1518 = vmatprep.subr.bf16.mxu0 0
      %1519 = vmatpush2.bf16.msra.mxu0 0
      %1520 = vmatprep.subr.bf16.mxu0 0
      %1521 = vmatpush2.bf16.msra.mxu0 0
      %1522 = vmatprep.subr.bf16.mxu0 0
      %1523 = vmatpush2.bf16.msra.mxu0 0
      %1524 = vmatprep.subr.bf16.mxu0 0
      %1525 = vmatpush2.bf16.msra.mxu0 0
      %1526 = vmatprep.subr.bf16.mxu0 0
      %1527 = vmatpush2.bf16.msra.mxu0 0
      %1528 = vmatprep.subr.bf16.mxu0 0
      %1529 = vmatpush2.bf16.msra.mxu0 0
      %1530 = vmatprep.mubr.bf16.mxu0 0
      %1531 = vmatmul.mubr.bf16.gmra.mxu0 %v481
      %v1532 = vpop.f32.mrf.mxu0
      %v1533 = vadd.f32 0.0, %v1532
      %v1534 = vpop.f32.mrf.mxu0
      %v1535 = vpop.f32.mrf.mxu0
      %v1536 = vadd.f32 0.0, %v1535
      %v1537 = vpop.f32.mrf.mxu0
      %1538 = vmatprep.mubr.bf16.mxu0 0
      %1539 = vmatmul.mubr.bf16.gmra.mxu0 %v484
      %v1540 = vpop.f32.mrf.mxu0
      %v1541 = vadd.f32 0.0, %v1540
      %v1542 = vpop.f32.mrf.mxu0
      %v1543 = vpop.f32.mrf.mxu0
      %v1544 = vadd.f32 0.0, %v1543
      %v1545 = vpop.f32.mrf.mxu0
      %1546 = vmatprep.mubr.bf16.mxu0 0
      %1547 = vmatmul.mubr.bf16.gmra.mxu0 %v487
      %v1548 = vpop.f32.mrf.mxu0
      %v1549 = vadd.f32 0.0, %v1548
      %v1550 = vpop.f32.mrf.mxu0
      %v1551 = vpop.f32.mrf.mxu0
      %v1552 = vadd.f32 0.0, %v1551
      %v1553 = vpop.f32.mrf.mxu0
      %1554 = vmatprep.mubr.bf16.mxu0 0
      %1555 = vmatmul.mubr.bf16.gmra.mxu0 %v490
      %v1556 = vpop.f32.mrf.mxu0
      %v1557 = vadd.f32 0.0, %v1556
      %v1558 = vpop.f32.mrf.mxu0
      %v1559 = vpop.f32.mrf.mxu0
      %v1560 = vadd.f32 0.0, %v1559
      %v1561 = vpop.f32.mrf.mxu0
      %1562 = vmatprep.mubr.bf16.mxu0 0
      %1563 = vmatmul.mubr.bf16.gmra.mxu0 %v493
      %v1564 = vpop.f32.mrf.mxu0
      %v1565 = vadd.f32 0.0, %v1564
      %v1566 = vpop.f32.mrf.mxu0
      %v1567 = vpop.f32.mrf.mxu0
      %v1568 = vadd.f32 0.0, %v1567
      %v1569 = vpop.f32.mrf.mxu0
      %1570 = vmatprep.mubr.bf16.mxu0 0
      %1571 = vmatmul.mubr.bf16.gmra.mxu0 %v496
      %v1572 = vpop.f32.mrf.mxu0
      %v1573 = vadd.f32 0.0, %v1572
      %v1574 = vpop.f32.mrf.mxu0
      %v1575 = vpop.f32.mrf.mxu0
      %v1576 = vadd.f32 0.0, %v1575
      %v1577 = vpop.f32.mrf.mxu0
      %1578 = vmatprep.mubr.bf16.mxu0 0
      %1579 = vmatmul.mubr.bf16.gmra.mxu0 %v499
      %v1580 = vpop.f32.mrf.mxu0
      %v1581 = vadd.f32 0.0, %v1580
      %v1582 = vpop.f32.mrf.mxu0
      %v1583 = vpop.f32.mrf.mxu0
      %v1584 = vadd.f32 0.0, %v1583
      %v1585 = vpop.f32.mrf.mxu0
      %1586 = vmatprep.mubr.bf16.mxu0 0
      %1587 = vmatmul.mubr.bf16.gmra.mxu0 %v502
      %v1588 = vpop.f32.mrf.mxu0
      %v1589 = vadd.f32 0.0, %v1588
      %v1590 = vpop.f32.mrf.mxu0
      %v1591 = vpop.f32.mrf.mxu0
      %v1592 = vadd.f32 0.0, %v1591
      %v1593 = vpop.f32.mrf.mxu0
      %1594 = vmatprep.mubr.bf16.mxu0 0
      %1595 = vmatmul.mubr.bf16.gmra.mxu0 %v505
      %v1596 = vpop.f32.mrf.mxu0
      %v1597 = vadd.f32 0.0, %v1596
      %v1598 = vpop.f32.mrf.mxu0
      %v1599 = vpop.f32.mrf.mxu0
      %v1600 = vadd.f32 0.0, %v1599
      %v1601 = vpop.f32.mrf.mxu0
      %1602 = vmatprep.mubr.bf16.mxu0 0
      %1603 = vmatmul.mubr.bf16.gmra.mxu0 %v508
      %v1604 = vpop.f32.mrf.mxu0
      %v1605 = vadd.f32 0.0, %v1604
      %v1606 = vpop.f32.mrf.mxu0
      %v1607 = vpop.f32.mrf.mxu0
      %v1608 = vadd.f32 0.0, %v1607
      %v1609 = vpop.f32.mrf.mxu0
      %1610 = vmatprep.mubr.bf16.mxu0 0
      %1611 = vmatmul.mubr.bf16.gmra.mxu0 %v511
      %v1612 = vpop.f32.mrf.mxu0
      %v1613 = vadd.f32 0.0, %v1612
      %v1614 = vpop.f32.mrf.mxu0
      %v1615 = vpop.f32.mrf.mxu0
      %v1616 = vadd.f32 0.0, %v1615
      %v1617 = vpop.f32.mrf.mxu0
      %1618 = vmatprep.mubr.bf16.mxu0 0
      %1619 = vmatmul.mubr.bf16.gmra.mxu0 %v514
      %v1620 = vpop.f32.mrf.mxu0
      %v1621 = vadd.f32 0.0, %v1620
      %v1622 = vpop.f32.mrf.mxu0
      %v1623 = vpop.f32.mrf.mxu0
      %v1624 = vadd.f32 0.0, %v1623
      %v1625 = vpop.f32.mrf.mxu0
      %1626 = vmatprep.mubr.bf16.mxu0 0
      %1627 = vmatmul.mubr.bf16.gmra.mxu0 %v517
      %v1628 = vpop.f32.mrf.mxu0
      %v1629 = vadd.f32 0.0, %v1628
      %v1630 = vpop.f32.mrf.mxu0
      %v1631 = vpop.f32.mrf.mxu0
      %v1632 = vadd.f32 0.0, %v1631
      %v1633 = vpop.f32.mrf.mxu0
      %1634 = vmatprep.mubr.bf16.mxu0 0
      %1635 = vmatmul.mubr.bf16.gmra.mxu0 %v520
      %v1636 = vpop.f32.mrf.mxu0
      %v1637 = vadd.f32 0.0, %v1636
      %v1638 = vpop.f32.mrf.mxu0
      %v1639 = vpop.f32.mrf.mxu0
      %v1640 = vadd.f32 0.0, %v1639
      %v1641 = vpop.f32.mrf.mxu0
      %1642 = vmatprep.mubr.bf16.mxu0 0
      %1643 = vmatmul.mubr.bf16.gmra.mxu0 %v523
      %v1644 = vpop.f32.mrf.mxu0
      %v1645 = vadd.f32 0.0, %v1644
      %v1646 = vpop.f32.mrf.mxu0
      %v1647 = vpop.f32.mrf.mxu0
      %v1648 = vadd.f32 0.0, %v1647
      %v1649 = vpop.f32.mrf.mxu0
      %1650 = vmatprep.mubr.bf16.mxu0 0
      %1651 = vmatmul.mubr.bf16.gmra.mxu0 %v1493
      %v1652 = vpop.f32.mrf.mxu0
      %v1653 = vadd.f32 0.0, %v1652
      %v1654 = vpop.f32.mrf.mxu0
      %v1655 = vpop.f32.mrf.mxu0
      %v1656 = vadd.f32 0.0, %v1655
      %v1657 = vpop.f32.mrf.mxu0
      %1658 = vdwg.mxu0
      %v1659 = vadd.f32 %v1447, %v1533
      %v1660 = vadd.f32 %v1448, %v1536
      %v1661 = vadd.f32 %v1449, %v1541
      %v1662 = vadd.f32 %v1450, %v1544
      %v1663 = vadd.f32 %v1451, %v1549
      %v1664 = vadd.f32 %v1452, %v1552
      %v1665 = vadd.f32 %v1453, %v1557
      %v1666 = vadd.f32 %v1454, %v1560
      %v1667 = vadd.f32 %v1455, %v1565
      %v1668 = vadd.f32 %v1456, %v1568
      %v1669 = vadd.f32 %v1457, %v1573
      %v1670 = vadd.f32 %v1458, %v1576
      %v1671 = vadd.f32 %v1459, %v1581
      %v1672 = vadd.f32 %v1460, %v1584
      %v1673 = vadd.f32 %v1461, %v1589
      %v1674 = vadd.f32 %v1462, %v1592
      %v1675 = vadd.f32 %v1463, %v1597
      %v1676 = vadd.f32 %v1464, %v1600
      %v1677 = vadd.f32 %v1465, %v1605
      %v1678 = vadd.f32 %v1466, %v1608
      %v1679 = vadd.f32 %v1467, %v1613
      %v1680 = vadd.f32 %v1468, %v1616
      %v1681 = vadd.f32 %v1469, %v1621
      %v1682 = vadd.f32 %v1470, %v1624
      %v1683 = vadd.f32 %v1471, %v1629
      %v1684 = vadd.f32 %v1472, %v1632
      %v1685 = vadd.f32 %v1473, %v1637
      %v1686 = vadd.f32 %v1474, %v1640
      %v1687 = vadd.f32 %v1475, %v1645
      %v1688 = vadd.f32 %v1476, %v1648
      %v1689 = vadd.f32 %v1477, %v1653
      %v1690 = vadd.f32 %v1478, %v1656
      %v1691 = vrot.slane %v274, 2
      %v1692 = vrot.slane %v275, 2
      %v1693 = vsel %vm902, %v1691, %v1692
      %v1694 = vrot.slane %v276, 2
      %v1695 = vsel %vm902, %v1692, %v1694
      %v1698 = vpack.c.bf16 %v1695, %v1693
      %s1699 = scalar_lea.vmem %s1, 20
      %v1700 = vld [vmem:[%s1699] sm:$0xf]
      %v1702 = vsel %vm476, %v1698, 0
      %v1705 = vsel %vm525, %v1700, 0
      %1707 = vmatprep.subr.bf16.mxu0 0
      %1708 = vmatpush1.bf16.msra.mxu0 0
      %1709 = vmatprep.subr.bf16.mxu0 0
      %1710 = vmatpush1.bf16.msra.mxu0 0
      %1711 = vmatprep.subr.bf16.mxu0 0
      %1712 = vmatpush1.bf16.msra.mxu0 0
      %1713 = vmatprep.subr.bf16.mxu0 0
      %1714 = vmatpush1.bf16.msra.mxu0 0
      %1715 = vmatprep.subr.bf16.mxu0 0
      %1716 = vmatpush1.bf16.msra.mxu0 0
      %1717 = vmatprep.subr.bf16.mxu0 0
      %1718 = vmatpush1.bf16.msra.mxu0 0
      %1719 = vmatprep.subr.bf16.mxu0 0
      %1720 = vmatpush1.bf16.msra.mxu0 0
      %1721 = vmatprep.subr.bf16.mxu0 0
      %1722 = vmatpush1.bf16.msra.mxu0 %v1705
      %1723 = vmatprep.subr.bf16.mxu0 0
      %1724 = vmatpush2.bf16.msra.mxu0 0
      %1725 = vmatprep.subr.bf16.mxu0 0
      %1726 = vmatpush2.bf16.msra.mxu0 0
      %1727 = vmatprep.subr.bf16.mxu0 0
      %1728 = vmatpush2.bf16.msra.mxu0 0
      %1729 = vmatprep.subr.bf16.mxu0 0
      %1730 = vmatpush2.bf16.msra.mxu0 0
      %1731 = vmatprep.subr.bf16.mxu0 0
      %1732 = vmatpush2.bf16.msra.mxu0 0
      %1733 = vmatprep.subr.bf16.mxu0 0
      %1734 = vmatpush2.bf16.msra.mxu0 0
      %1735 = vmatprep.subr.bf16.mxu0 0
      %1736 = vmatpush2.bf16.msra.mxu0 0
      %1737 = vmatprep.subr.bf16.mxu0 0
      %1738 = vmatpush2.bf16.msra.mxu0 0
      %1739 = vmatprep.mubr.bf16.mxu0 0
      %1740 = vmatmul.mubr.bf16.gmra.mxu0 %v1037
      %v1741 = vpop.f32.mrf.mxu0
      %v1742 = vadd.f32 0.0, %v1741
      %v1743 = vpop.f32.mrf.mxu0
      %v1744 = vpop.f32.mrf.mxu0
      %v1745 = vadd.f32 0.0, %v1744
      %v1746 = vpop.f32.mrf.mxu0
      %1747 = vmatprep.mubr.bf16.mxu0 0
      %1748 = vmatmul.mubr.bf16.gmra.mxu0 %v1040
      %v1749 = vpop.f32.mrf.mxu0
      %v1750 = vadd.f32 0.0, %v1749
      %v1751 = vpop.f32.mrf.mxu0
      %v1752 = vpop.f32.mrf.mxu0
      %v1753 = vadd.f32 0.0, %v1752
      %v1754 = vpop.f32.mrf.mxu0
      %1755 = vmatprep.mubr.bf16.mxu0 0
      %1756 = vmatmul.mubr.bf16.gmra.mxu0 %v1043
      %v1757 = vpop.f32.mrf.mxu0
      %v1758 = vadd.f32 0.0, %v1757
      %v1759 = vpop.f32.mrf.mxu0
      %v1760 = vpop.f32.mrf.mxu0
      %v1761 = vadd.f32 0.0, %v1760
      %v1762 = vpop.f32.mrf.mxu0
      %1763 = vmatprep.mubr.bf16.mxu0 0
      %1764 = vmatmul.mubr.bf16.gmra.mxu0 %v1046
      %v1765 = vpop.f32.mrf.mxu0
      %v1766 = vadd.f32 0.0, %v1765
      %v1767 = vpop.f32.mrf.mxu0
      %v1768 = vpop.f32.mrf.mxu0
      %v1769 = vadd.f32 0.0, %v1768
      %v1770 = vpop.f32.mrf.mxu0
      %1771 = vmatprep.mubr.bf16.mxu0 0
      %1772 = vmatmul.mubr.bf16.gmra.mxu0 %v1049
      %v1773 = vpop.f32.mrf.mxu0
      %v1774 = vadd.f32 0.0, %v1773
      %v1775 = vpop.f32.mrf.mxu0
      %v1776 = vpop.f32.mrf.mxu0
      %v1777 = vadd.f32 0.0, %v1776
      %v1778 = vpop.f32.mrf.mxu0
      %1779 = vmatprep.mubr.bf16.mxu0 0
      %1780 = vmatmul.mubr.bf16.gmra.mxu0 %v1052
      %v1781 = vpop.f32.mrf.mxu0
      %v1782 = vadd.f32 0.0, %v1781
      %v1783 = vpop.f32.mrf.mxu0
      %v1784 = vpop.f32.mrf.mxu0
      %v1785 = vadd.f32 0.0, %v1784
      %v1786 = vpop.f32.mrf.mxu0
      %1787 = vmatprep.mubr.bf16.mxu0 0
      %1788 = vmatmul.mubr.bf16.gmra.mxu0 %v1055
      %v1789 = vpop.f32.mrf.mxu0
      %v1790 = vadd.f32 0.0, %v1789
      %v1791 = vpop.f32.mrf.mxu0
      %v1792 = vpop.f32.mrf.mxu0
      %v1793 = vadd.f32 0.0, %v1792
      %v1794 = vpop.f32.mrf.mxu0
      %1795 = vmatprep.mubr.bf16.mxu0 0
      %1796 = vmatmul.mubr.bf16.gmra.mxu0 %v1058
      %v1797 = vpop.f32.mrf.mxu0
      %v1798 = vadd.f32 0.0, %v1797
      %v1799 = vpop.f32.mrf.mxu0
      %v1800 = vpop.f32.mrf.mxu0
      %v1801 = vadd.f32 0.0, %v1800
      %v1802 = vpop.f32.mrf.mxu0
      %1803 = vmatprep.mubr.bf16.mxu0 0
      %1804 = vmatmul.mubr.bf16.gmra.mxu0 %v1061
      %v1805 = vpop.f32.mrf.mxu0
      %v1806 = vadd.f32 0.0, %v1805
      %v1807 = vpop.f32.mrf.mxu0
      %v1808 = vpop.f32.mrf.mxu0
      %v1809 = vadd.f32 0.0, %v1808
      %v1810 = vpop.f32.mrf.mxu0
      %1811 = vmatprep.mubr.bf16.mxu0 0
      %1812 = vmatmul.mubr.bf16.gmra.mxu0 %v1064
      %v1813 = vpop.f32.mrf.mxu0
      %v1814 = vadd.f32 0.0, %v1813
      %v1815 = vpop.f32.mrf.mxu0
      %v1816 = vpop.f32.mrf.mxu0
      %v1817 = vadd.f32 0.0, %v1816
      %v1818 = vpop.f32.mrf.mxu0
      %1819 = vmatprep.mubr.bf16.mxu0 0
      %1820 = vmatmul.mubr.bf16.gmra.mxu0 %v1067
      %v1821 = vpop.f32.mrf.mxu0
      %v1822 = vadd.f32 0.0, %v1821
      %v1823 = vpop.f32.mrf.mxu0
      %v1824 = vpop.f32.mrf.mxu0
      %v1825 = vadd.f32 0.0, %v1824
      %v1826 = vpop.f32.mrf.mxu0
      %1827 = vmatprep.mubr.bf16.mxu0 0
      %1828 = vmatmul.mubr.bf16.gmra.mxu0 %v1070
      %v1829 = vpop.f32.mrf.mxu0
      %v1830 = vadd.f32 0.0, %v1829
      %v1831 = vpop.f32.mrf.mxu0
      %v1832 = vpop.f32.mrf.mxu0
      %v1833 = vadd.f32 0.0, %v1832
      %v1834 = vpop.f32.mrf.mxu0
      %1835 = vmatprep.mubr.bf16.mxu0 0
      %1836 = vmatmul.mubr.bf16.gmra.mxu0 %v1073
      %v1837 = vpop.f32.mrf.mxu0
      %v1838 = vadd.f32 0.0, %v1837
      %v1839 = vpop.f32.mrf.mxu0
      %v1840 = vpop.f32.mrf.mxu0
      %v1841 = vadd.f32 0.0, %v1840
      %v1842 = vpop.f32.mrf.mxu0
      %1843 = vmatprep.mubr.bf16.mxu0 0
      %1844 = vmatmul.mubr.bf16.gmra.mxu0 %v1076
      %v1845 = vpop.f32.mrf.mxu0
      %v1846 = vadd.f32 0.0, %v1845
      %v1847 = vpop.f32.mrf.mxu0
      %v1848 = vpop.f32.mrf.mxu0
      %v1849 = vadd.f32 0.0, %v1848
      %v1850 = vpop.f32.mrf.mxu0
      %1851 = vmatprep.mubr.bf16.mxu0 0
      %1852 = vmatmul.mubr.bf16.gmra.mxu0 %v1079
      %v1853 = vpop.f32.mrf.mxu0
      %v1854 = vadd.f32 0.0, %v1853
      %v1855 = vpop.f32.mrf.mxu0
      %v1856 = vpop.f32.mrf.mxu0
      %v1857 = vadd.f32 0.0, %v1856
      %v1858 = vpop.f32.mrf.mxu0
      %1859 = vmatprep.mubr.bf16.mxu0 0
      %1860 = vmatmul.mubr.bf16.gmra.mxu0 %v1702
      %v1861 = vpop.f32.mrf.mxu0
      %v1862 = vadd.f32 0.0, %v1861
      %v1863 = vpop.f32.mrf.mxu0
      %v1864 = vpop.f32.mrf.mxu0
      %v1865 = vadd.f32 0.0, %v1864
      %v1866 = vpop.f32.mrf.mxu0
      %1867 = vdwg.mxu0
      %v1868 = vadd.f32 %v1659, %v1742
      %v1869 = vadd.f32 %v1660, %v1745
      %v1870 = vadd.f32 %v1661, %v1750
      %v1871 = vadd.f32 %v1662, %v1753
      %v1872 = vadd.f32 %v1663, %v1758
      %v1873 = vadd.f32 %v1664, %v1761
      %v1874 = vadd.f32 %v1665, %v1766
      %v1875 = vadd.f32 %v1666, %v1769
      %v1876 = vadd.f32 %v1667, %v1774
      %v1877 = vadd.f32 %v1668, %v1777
      %v1878 = vadd.f32 %v1669, %v1782
      %v1879 = vadd.f32 %v1670, %v1785
      %v1880 = vadd.f32 %v1671, %v1790
      %v1881 = vadd.f32 %v1672, %v1793
      %v1882 = vadd.f32 %v1673, %v1798
      %v1883 = vadd.f32 %v1674, %v1801
      %v1884 = vadd.f32 %v1675, %v1806
      %v1885 = vadd.f32 %v1676, %v1809
      %v1886 = vadd.f32 %v1677, %v1814
      %v1887 = vadd.f32 %v1678, %v1817
      %v1888 = vadd.f32 %v1679, %v1822
      %v1889 = vadd.f32 %v1680, %v1825
      %v1890 = vadd.f32 %v1681, %v1830
      %v1891 = vadd.f32 %v1682, %v1833
      %v1892 = vadd.f32 %v1683, %v1838
      %v1893 = vadd.f32 %v1684, %v1841
      %v1894 = vadd.f32 %v1685, %v1846
      %v1895 = vadd.f32 %v1686, %v1849
      %v1896 = vadd.f32 %v1687, %v1854
      %v1897 = vadd.f32 %v1688, %v1857
      %v1898 = vadd.f32 %v1689, %v1862
      %v1899 = vadd.f32 %v1690, %v1865
      %v1900 = vpack.c.bf16 %v278, %v277
      %s1901 = scalar_lea.vmem %s1, 24
      %v1902 = vld [vmem:[%s1901] sm:$0xf]
      %v1904 = vsel %vm476, %v1900, 0
      %v1907 = vsel %vm525, %v1902, 0
      %1909 = vmatprep.subr.bf16.mxu0 0
      %1910 = vmatpush1.bf16.msra.mxu0 0
      %1911 = vmatprep.subr.bf16.mxu0 0
      %1912 = vmatpush1.bf16.msra.mxu0 0
      %1913 = vmatprep.subr.bf16.mxu0 0
      %1914 = vmatpush1.bf16.msra.mxu0 0
      %1915 = vmatprep.subr.bf16.mxu0 0
      %1916 = vmatpush1.bf16.msra.mxu0 0
      %1917 = vmatprep.subr.bf16.mxu0 0
      %1918 = vmatpush1.bf16.msra.mxu0 0
      %1919 = vmatprep.subr.bf16.mxu0 0
      %1920 = vmatpush1.bf16.msra.mxu0 0
      %1921 = vmatprep.subr.bf16.mxu0 0
      %1922 = vmatpush1.bf16.msra.mxu0 0
      %1923 = vmatprep.subr.bf16.mxu0 0
      %1924 = vmatpush1.bf16.msra.mxu0 %v1907
      %1925 = vmatprep.subr.bf16.mxu0 0
      %1926 = vmatpush2.bf16.msra.mxu0 0
      %1927 = vmatprep.subr.bf16.mxu0 0
      %1928 = vmatpush2.bf16.msra.mxu0 0
      %1929 = vmatprep.subr.bf16.mxu0 0
      %1930 = vmatpush2.bf16.msra.mxu0 0
      %1931 = vmatprep.subr.bf16.mxu0 0
      %1932 = vmatpush2.bf16.msra.mxu0 0
      %1933 = vmatprep.subr.bf16.mxu0 0
      %1934 = vmatpush2.bf16.msra.mxu0 0
      %1935 = vmatprep.subr.bf16.mxu0 0
      %1936 = vmatpush2.bf16.msra.mxu0 0
      %1937 = vmatprep.subr.bf16.mxu0 0
      %1938 = vmatpush2.bf16.msra.mxu0 0
      %1939 = vmatprep.subr.bf16.mxu0 0
      %1940 = vmatpush2.bf16.msra.mxu0 0
      %1941 = vmatprep.mubr.bf16.mxu0 0
      %1942 = vmatmul.mubr.bf16.gmra.mxu0 %v697
      %v1943 = vpop.f32.mrf.mxu0
      %v1944 = vadd.f32 0.0, %v1943
      %v1945 = vpop.f32.mrf.mxu0
      %v1946 = vpop.f32.mrf.mxu0
      %v1947 = vadd.f32 0.0, %v1946
      %v1948 = vpop.f32.mrf.mxu0
      %1949 = vmatprep.mubr.bf16.mxu0 0
      %1950 = vmatmul.mubr.bf16.gmra.mxu0 %v700
      %v1951 = vpop.f32.mrf.mxu0
      %v1952 = vadd.f32 0.0, %v1951
      %v1953 = vpop.f32.mrf.mxu0
      %v1954 = vpop.f32.mrf.mxu0
      %v1955 = vadd.f32 0.0, %v1954
      %v1956 = vpop.f32.mrf.mxu0
      %1957 = vmatprep.mubr.bf16.mxu0 0
      %1958 = vmatmul.mubr.bf16.gmra.mxu0 %v703
      %v1959 = vpop.f32.mrf.mxu0
      %v1960 = vadd.f32 0.0, %v1959
      %v1961 = vpop.f32.mrf.mxu0
      %v1962 = vpop.f32.mrf.mxu0
      %v1963 = vadd.f32 0.0, %v1962
      %v1964 = vpop.f32.mrf.mxu0
      %1965 = vmatprep.mubr.bf16.mxu0 0
      %1966 = vmatmul.mubr.bf16.gmra.mxu0 %v706
      %v1967 = vpop.f32.mrf.mxu0
      %v1968 = vadd.f32 0.0, %v1967
      %v1969 = vpop.f32.mrf.mxu0
      %v1970 = vpop.f32.mrf.mxu0
      %v1971 = vadd.f32 0.0, %v1970
      %v1972 = vpop.f32.mrf.mxu0
      %1973 = vmatprep.mubr.bf16.mxu0 0
      %1974 = vmatmul.mubr.bf16.gmra.mxu0 %v709
      %v1975 = vpop.f32.mrf.mxu0
      %v1976 = vadd.f32 0.0, %v1975
      %v1977 = vpop.f32.mrf.mxu0
      %v1978 = vpop.f32.mrf.mxu0
      %v1979 = vadd.f32 0.0, %v1978
      %v1980 = vpop.f32.mrf.mxu0
      %1981 = vmatprep.mubr.bf16.mxu0 0
      %1982 = vmatmul.mubr.bf16.gmra.mxu0 %v712
      %v1983 = vpop.f32.mrf.mxu0
      %v1984 = vadd.f32 0.0, %v1983
      %v1985 = vpop.f32.mrf.mxu0
      %v1986 = vpop.f32.mrf.mxu0
      %v1987 = vadd.f32 0.0, %v1986
      %v1988 = vpop.f32.mrf.mxu0
      %1989 = vmatprep.mubr.bf16.mxu0 0
      %1990 = vmatmul.mubr.bf16.gmra.mxu0 %v715
      %v1991 = vpop.f32.mrf.mxu0
      %v1992 = vadd.f32 0.0, %v1991
      %v1993 = vpop.f32.mrf.mxu0
      %v1994 = vpop.f32.mrf.mxu0
      %v1995 = vadd.f32 0.0, %v1994
      %v1996 = vpop.f32.mrf.mxu0
      %1997 = vmatprep.mubr.bf16.mxu0 0
      %1998 = vmatmul.mubr.bf16.gmra.mxu0 %v718
      %v1999 = vpop.f32.mrf.mxu0
      %v2000 = vadd.f32 0.0, %v1999
      %v2001 = vpop.f32.mrf.mxu0
      %v2002 = vpop.f32.mrf.mxu0
      %v2003 = vadd.f32 0.0, %v2002
      %v2004 = vpop.f32.mrf.mxu0
      %2005 = vmatprep.mubr.bf16.mxu0 0
      %2006 = vmatmul.mubr.bf16.gmra.mxu0 %v721
      %v2007 = vpop.f32.mrf.mxu0
      %v2008 = vadd.f32 0.0, %v2007
      %v2009 = vpop.f32.mrf.mxu0
      %v2010 = vpop.f32.mrf.mxu0
      %v2011 = vadd.f32 0.0, %v2010
      %v2012 = vpop.f32.mrf.mxu0
      %2013 = vmatprep.mubr.bf16.mxu0 0
      %2014 = vmatmul.mubr.bf16.gmra.mxu0 %v724
      %v2015 = vpop.f32.mrf.mxu0
      %v2016 = vadd.f32 0.0, %v2015
      %v2017 = vpop.f32.mrf.mxu0
      %v2018 = vpop.f32.mrf.mxu0
      %v2019 = vadd.f32 0.0, %v2018
      %v2020 = vpop.f32.mrf.mxu0
      %2021 = vmatprep.mubr.bf16.mxu0 0
      %2022 = vmatmul.mubr.bf16.gmra.mxu0 %v727
      %v2023 = vpop.f32.mrf.mxu0
      %v2024 = vadd.f32 0.0, %v2023
      %v2025 = vpop.f32.mrf.mxu0
      %v2026 = vpop.f32.mrf.mxu0
      %v2027 = vadd.f32 0.0, %v2026
      %v2028 = vpop.f32.mrf.mxu0
      %2029 = vmatprep.mubr.bf16.mxu0 0
      %2030 = vmatmul.mubr.bf16.gmra.mxu0 %v730
      %v2031 = vpop.f32.mrf.mxu0
      %v2032 = vadd.f32 0.0, %v2031
      %v2033 = vpop.f32.mrf.mxu0
      %v2034 = vpop.f32.mrf.mxu0
      %v2035 = vadd.f32 0.0, %v2034
      %v2036 = vpop.f32.mrf.mxu0
      %2037 = vmatprep.mubr.bf16.mxu0 0
      %2038 = vmatmul.mubr.bf16.gmra.mxu0 %v733
      %v2039 = vpop.f32.mrf.mxu0
      %v2040 = vadd.f32 0.0, %v2039
      %v2041 = vpop.f32.mrf.mxu0
      %v2042 = vpop.f32.mrf.mxu0
      %v2043 = vadd.f32 0.0, %v2042
      %v2044 = vpop.f32.mrf.mxu0
      %2045 = vmatprep.mubr.bf16.mxu0 0
      %2046 = vmatmul.mubr.bf16.gmra.mxu0 %v736
      %v2047 = vpop.f32.mrf.mxu0
      %v2048 = vadd.f32 0.0, %v2047
      %v2049 = vpop.f32.mrf.mxu0
      %v2050 = vpop.f32.mrf.mxu0
      %v2051 = vadd.f32 0.0, %v2050
      %v2052 = vpop.f32.mrf.mxu0
      %2053 = vmatprep.mubr.bf16.mxu0 0
      %2054 = vmatmul.mubr.bf16.gmra.mxu0 %v1281
      %v2055 = vpop.f32.mrf.mxu0
      %v2056 = vadd.f32 0.0, %v2055
      %v2057 = vpop.f32.mrf.mxu0
      %v2058 = vpop.f32.mrf.mxu0
      %v2059 = vadd.f32 0.0, %v2058
      %v2060 = vpop.f32.mrf.mxu0
      %2061 = vmatprep.mubr.bf16.mxu0 0
      %2062 = vmatmul.mubr.bf16.gmra.mxu0 %v1904
      %v2063 = vpop.f32.mrf.mxu0
      %v2064 = vadd.f32 0.0, %v2063
      %v2065 = vpop.f32.mrf.mxu0
      %v2066 = vpop.f32.mrf.mxu0
      %v2067 = vadd.f32 0.0, %v2066
      %v2068 = vpop.f32.mrf.mxu0
      %2069 = vdwg.mxu0
      %v2070 = vadd.f32 %v1868, %v1944
      %v2071 = vadd.f32 %v1869, %v1947
      %v2072 = vadd.f32 %v1870, %v1952
      %v2073 = vadd.f32 %v1871, %v1955
      %v2074 = vadd.f32 %v1872, %v1960
      %v2075 = vadd.f32 %v1873, %v1963
      %v2076 = vadd.f32 %v1874, %v1968
      %v2077 = vadd.f32 %v1875, %v1971
      %v2078 = vadd.f32 %v1876, %v1976
      %v2079 = vadd.f32 %v1877, %v1979
      %v2080 = vadd.f32 %v1878, %v1984
      %v2081 = vadd.f32 %v1879, %v1987
      %v2082 = vadd.f32 %v1880, %v1992
      %v2083 = vadd.f32 %v1881, %v1995
      %v2084 = vadd.f32 %v1882, %v2000
      %v2085 = vadd.f32 %v1883, %v2003
      %v2086 = vadd.f32 %v1884, %v2008
      %v2087 = vadd.f32 %v1885, %v2011
      %v2088 = vadd.f32 %v1886, %v2016
      %v2089 = vadd.f32 %v1887, %v2019
      %v2090 = vadd.f32 %v1888, %v2024
      %v2091 = vadd.f32 %v1889, %v2027
      %v2092 = vadd.f32 %v1890, %v2032
      %v2093 = vadd.f32 %v1891, %v2035
      %v2094 = vadd.f32 %v1892, %v2040
      %v2095 = vadd.f32 %v1893, %v2043
      %v2096 = vadd.f32 %v1894, %v2048
      %v2097 = vadd.f32 %v1895, %v2051
      %v2098 = vadd.f32 %v1896, %v2056
      %v2099 = vadd.f32 %v1897, %v2059
      %v2100 = vadd.f32 %v1898, %v2064
      %v2101 = vadd.f32 %v1899, %v2067
      %v2105 = vrot.slane %v277, 1
      %v2106 = vrot.slane %v278, 1
      %v2107 = vsel %vm345, %v2105, %v2106
      %v2108 = vrot.slane %v279, 1
      %v2109 = vsel %vm345, %v2106, %v2108
      %v2112 = vpack.c.bf16 %v2109, %v2107
      %s2113 = scalar_lea.vmem %s1, 28
      %v2114 = vld [vmem:[%s2113] sm:$0xf]
      %v2116 = vsel %vm476, %v2112, 0
      %v2119 = vsel %vm525, %v2114, 0
      %2121 = vmatprep.subr.bf16.mxu0 0
      %2122 = vmatpush1.bf16.msra.mxu0 0
      %2123 = vmatprep.subr.bf16.mxu0 0
      %2124 = vmatpush1.bf16.msra.mxu0 0
      %2125 = vmatprep.subr.bf16.mxu0 0
      %2126 = vmatpush1.bf16.msra.mxu0 0
      %2127 = vmatprep.subr.bf16.mxu0 0
      %2128 = vmatpush1.bf16.msra.mxu0 0
      %2129 = vmatprep.subr.bf16.mxu0 0
      %2130 = vmatpush1.bf16.msra.mxu0 0
      %2131 = vmatprep.subr.bf16.mxu0 0
      %2132 = vmatpush1.bf16.msra.mxu0 0
      %2133 = vmatprep.subr.bf16.mxu0 0
      %2134 = vmatpush1.bf16.msra.mxu0 0
      %2135 = vmatprep.subr.bf16.mxu0 0
      %2136 = vmatpush1.bf16.msra.mxu0 %v2119
      %2137 = vmatprep.subr.bf16.mxu0 0
      %2138 = vmatpush2.bf16.msra.mxu0 0
      %2139 = vmatprep.subr.bf16.mxu0 0
      %2140 = vmatpush2.bf16.msra.mxu0 0
      %2141 = vmatprep.subr.bf16.mxu0 0
      %2142 = vmatpush2.bf16.msra.mxu0 0
      %2143 = vmatprep.subr.bf16.mxu0 0
      %2144 = vmatpush2.bf16.msra.mxu0 0
      %2145 = vmatprep.subr.bf16.mxu0 0
      %2146 = vmatpush2.bf16.msra.mxu0 0
      %2147 = vmatprep.subr.bf16.mxu0 0
      %2148 = vmatpush2.bf16.msra.mxu0 0
      %2149 = vmatprep.subr.bf16.mxu0 0
      %2150 = vmatpush2.bf16.msra.mxu0 0
      %2151 = vmatprep.subr.bf16.mxu0 0
      %2152 = vmatpush2.bf16.msra.mxu0 0
      %2153 = vmatprep.mubr.bf16.mxu0 0
      %2154 = vmatmul.mubr.bf16.gmra.mxu0 %v484
      %v2155 = vpop.f32.mrf.mxu0
      %v2156 = vadd.f32 0.0, %v2155
      %v2157 = vpop.f32.mrf.mxu0
      %v2158 = vpop.f32.mrf.mxu0
      %v2159 = vadd.f32 0.0, %v2158
      %v2160 = vpop.f32.mrf.mxu0
      %2161 = vmatprep.mubr.bf16.mxu0 0
      %2162 = vmatmul.mubr.bf16.gmra.mxu0 %v487
      %v2163 = vpop.f32.mrf.mxu0
      %v2164 = vadd.f32 0.0, %v2163
      %v2165 = vpop.f32.mrf.mxu0
      %v2166 = vpop.f32.mrf.mxu0
      %v2167 = vadd.f32 0.0, %v2166
      %v2168 = vpop.f32.mrf.mxu0
      %2169 = vmatprep.mubr.bf16.mxu0 0
      %2170 = vmatmul.mubr.bf16.gmra.mxu0 %v490
      %v2171 = vpop.f32.mrf.mxu0
      %v2172 = vadd.f32 0.0, %v2171
      %v2173 = vpop.f32.mrf.mxu0
      %v2174 = vpop.f32.mrf.mxu0
      %v2175 = vadd.f32 0.0, %v2174
      %v2176 = vpop.f32.mrf.mxu0
      %2177 = vmatprep.mubr.bf16.mxu0 0
      %2178 = vmatmul.mubr.bf16.gmra.mxu0 %v493
      %v2179 = vpop.f32.mrf.mxu0
      %v2180 = vadd.f32 0.0, %v2179
      %v2181 = vpop.f32.mrf.mxu0
      %v2182 = vpop.f32.mrf.mxu0
      %v2183 = vadd.f32 0.0, %v2182
      %v2184 = vpop.f32.mrf.mxu0
      %2185 = vmatprep.mubr.bf16.mxu0 0
      %2186 = vmatmul.mubr.bf16.gmra.mxu0 %v496
      %v2187 = vpop.f32.mrf.mxu0
      %v2188 = vadd.f32 0.0, %v2187
      %v2189 = vpop.f32.mrf.mxu0
      %v2190 = vpop.f32.mrf.mxu0
      %v2191 = vadd.f32 0.0, %v2190
      %v2192 = vpop.f32.mrf.mxu0
      %2193 = vmatprep.mubr.bf16.mxu0 0
      %2194 = vmatmul.mubr.bf16.gmra.mxu0 %v499
      %v2195 = vpop.f32.mrf.mxu0
      %v2196 = vadd.f32 0.0, %v2195
      %v2197 = vpop.f32.mrf.mxu0
      %v2198 = vpop.f32.mrf.mxu0
      %v2199 = vadd.f32 0.0, %v2198
      %v2200 = vpop.f32.mrf.mxu0
      %2201 = vmatprep.mubr.bf16.mxu0 0
      %2202 = vmatmul.mubr.bf16.gmra.mxu0 %v502
      %v2203 = vpop.f32.mrf.mxu0
      %v2204 = vadd.f32 0.0, %v2203
      %v2205 = vpop.f32.mrf.mxu0
      %v2206 = vpop.f32.mrf.mxu0
      %v2207 = vadd.f32 0.0, %v2206
      %v2208 = vpop.f32.mrf.mxu0
      %2209 = vmatprep.mubr.bf16.mxu0 0
      %2210 = vmatmul.mubr.bf16.gmra.mxu0 %v505
      %v2211 = vpop.f32.mrf.mxu0
      %v2212 = vadd.f32 0.0, %v2211
      %v2213 = vpop.f32.mrf.mxu0
      %v2214 = vpop.f32.mrf.mxu0
      %v2215 = vadd.f32 0.0, %v2214
      %v2216 = vpop.f32.mrf.mxu0
      %2217 = vmatprep.mubr.bf16.mxu0 0
      %2218 = vmatmul.mubr.bf16.gmra.mxu0 %v508
      %v2219 = vpop.f32.mrf.mxu0
      %v2220 = vadd.f32 0.0, %v2219
      %v2221 = vpop.f32.mrf.mxu0
      %v2222 = vpop.f32.mrf.mxu0
      %v2223 = vadd.f32 0.0, %v2222
      %v2224 = vpop.f32.mrf.mxu0
      %2225 = vmatprep.mubr.bf16.mxu0 0
      %2226 = vmatmul.mubr.bf16.gmra.mxu0 %v511
      %v2227 = vpop.f32.mrf.mxu0
      %v2228 = vadd.f32 0.0, %v2227
      %v2229 = vpop.f32.mrf.mxu0
      %v2230 = vpop.f32.mrf.mxu0
      %v2231 = vadd.f32 0.0, %v2230
      %v2232 = vpop.f32.mrf.mxu0
      %2233 = vmatprep.mubr.bf16.mxu0 0
      %2234 = vmatmul.mubr.bf16.gmra.mxu0 %v514
      %v2235 = vpop.f32.mrf.mxu0
      %v2236 = vadd.f32 0.0, %v2235
      %v2237 = vpop.f32.mrf.mxu0
      %v2238 = vpop.f32.mrf.mxu0
      %v2239 = vadd.f32 0.0, %v2238
      %v2240 = vpop.f32.mrf.mxu0
      %2241 = vmatprep.mubr.bf16.mxu0 0
      %2242 = vmatmul.mubr.bf16.gmra.mxu0 %v517
      %v2243 = vpop.f32.mrf.mxu0
      %v2244 = vadd.f32 0.0, %v2243
      %v2245 = vpop.f32.mrf.mxu0
      %v2246 = vpop.f32.mrf.mxu0
      %v2247 = vadd.f32 0.0, %v2246
      %v2248 = vpop.f32.mrf.mxu0
      %2249 = vmatprep.mubr.bf16.mxu0 0
      %2250 = vmatmul.mubr.bf16.gmra.mxu0 %v520
      %v2251 = vpop.f32.mrf.mxu0
      %v2252 = vadd.f32 0.0, %v2251
      %v2253 = vpop.f32.mrf.mxu0
      %v2254 = vpop.f32.mrf.mxu0
      %v2255 = vadd.f32 0.0, %v2254
      %v2256 = vpop.f32.mrf.mxu0
      %2257 = vmatprep.mubr.bf16.mxu0 0
      %2258 = vmatmul.mubr.bf16.gmra.mxu0 %v523
      %v2259 = vpop.f32.mrf.mxu0
      %v2260 = vadd.f32 0.0, %v2259
      %v2261 = vpop.f32.mrf.mxu0
      %v2262 = vpop.f32.mrf.mxu0
      %v2263 = vadd.f32 0.0, %v2262
      %v2264 = vpop.f32.mrf.mxu0
      %2265 = vmatprep.mubr.bf16.mxu0 0
      %2266 = vmatmul.mubr.bf16.gmra.mxu0 %v1493
      %v2267 = vpop.f32.mrf.mxu0
      %v2268 = vadd.f32 0.0, %v2267
      %v2269 = vpop.f32.mrf.mxu0
      %v2270 = vpop.f32.mrf.mxu0
      %v2271 = vadd.f32 0.0, %v2270
      %v2272 = vpop.f32.mrf.mxu0
      %2273 = vmatprep.mubr.bf16.mxu0 0
      %2274 = vmatmul.mubr.bf16.gmra.mxu0 %v2116
      %v2275 = vpop.f32.mrf.mxu0
      %v2276 = vadd.f32 0.0, %v2275
      %v2277 = vpop.f32.mrf.mxu0
      %v2278 = vpop.f32.mrf.mxu0
      %v2279 = vadd.f32 0.0, %v2278
      %v2280 = vpop.f32.mrf.mxu0
      %2281 = vdwg.mxu0
      %v2282 = vadd.f32 %v2070, %v2156
      %v2283 = vadd.f32 %v2071, %v2159
      %v2284 = vadd.f32 %v2072, %v2164
      %v2285 = vadd.f32 %v2073, %v2167
      %v2286 = vadd.f32 %v2074, %v2172
      %v2287 = vadd.f32 %v2075, %v2175
      %v2288 = vadd.f32 %v2076, %v2180
      %v2289 = vadd.f32 %v2077, %v2183
      %v2290 = vadd.f32 %v2078, %v2188
      %v2291 = vadd.f32 %v2079, %v2191
      %v2292 = vadd.f32 %v2080, %v2196
      %v2293 = vadd.f32 %v2081, %v2199
      %v2294 = vadd.f32 %v2082, %v2204
      %v2295 = vadd.f32 %v2083, %v2207
      %v2296 = vadd.f32 %v2084, %v2212
      %v2297 = vadd.f32 %v2085, %v2215
      %v2298 = vadd.f32 %v2086, %v2220
      %v2299 = vadd.f32 %v2087, %v2223
      %v2300 = vadd.f32 %v2088, %v2228
      %v2301 = vadd.f32 %v2089, %v2231
      %v2302 = vadd.f32 %v2090, %v2236
      %v2303 = vadd.f32 %v2091, %v2239
      %v2304 = vadd.f32 %v2092, %v2244
      %v2305 = vadd.f32 %v2093, %v2247
      %v2306 = vadd.f32 %v2094, %v2252
      %v2307 = vadd.f32 %v2095, %v2255
      %v2308 = vadd.f32 %v2096, %v2260
      %v2309 = vadd.f32 %v2097, %v2263
      %v2310 = vadd.f32 %v2098, %v2268
      %v2311 = vadd.f32 %v2099, %v2271
      %v2312 = vadd.f32 %v2100, %v2276
      %v2313 = vadd.f32 %v2101, %v2279
      %v2314 = vrot.slane %v277, 2
      %v2315 = vrot.slane %v278, 2
      %v2316 = vsel %vm902, %v2314, %v2315
      %v2317 = vrot.slane %v279, 2
      %v2318 = vsel %vm902, %v2315, %v2317
      %v2321 = vpack.c.bf16 %v2318, %v2316
      %s2322 = scalar_lea.vmem %s1, 32
      %v2323 = vld [vmem:[%s2322] sm:$0xf]
      %v2325 = vsel %vm476, %v2321, 0
      %v2328 = vsel %vm525, %v2323, 0
      %2330 = vmatprep.subr.bf16.mxu0 0
      %2331 = vmatpush1.bf16.msra.mxu0 0
      %2332 = vmatprep.subr.bf16.mxu0 0
      %2333 = vmatpush1.bf16.msra.mxu0 0
      %2334 = vmatprep.subr.bf16.mxu0 0
      %2335 = vmatpush1.bf16.msra.mxu0 0
      %2336 = vmatprep.subr.bf16.mxu0 0
      %2337 = vmatpush1.bf16.msra.mxu0 0
      %2338 = vmatprep.subr.bf16.mxu0 0
      %2339 = vmatpush1.bf16.msra.mxu0 0
      %2340 = vmatprep.subr.bf16.mxu0 0
      %2341 = vmatpush1.bf16.msra.mxu0 0
      %2342 = vmatprep.subr.bf16.mxu0 0
      %2343 = vmatpush1.bf16.msra.mxu0 0
      %2344 = vmatprep.subr.bf16.mxu0 0
      %2345 = vmatpush1.bf16.msra.mxu0 %v2328
      %2346 = vmatprep.subr.bf16.mxu0 0
      %2347 = vmatpush2.bf16.msra.mxu0 0
      %2348 = vmatprep.subr.bf16.mxu0 0
      %2349 = vmatpush2.bf16.msra.mxu0 0
      %2350 = vmatprep.subr.bf16.mxu0 0
      %2351 = vmatpush2.bf16.msra.mxu0 0
      %2352 = vmatprep.subr.bf16.mxu0 0
      %2353 = vmatpush2.bf16.msra.mxu0 0
      %2354 = vmatprep.subr.bf16.mxu0 0
      %2355 = vmatpush2.bf16.msra.mxu0 0
      %2356 = vmatprep.subr.bf16.mxu0 0
      %2357 = vmatpush2.bf16.msra.mxu0 0
      %2358 = vmatprep.subr.bf16.mxu0 0
      %2359 = vmatpush2.bf16.msra.mxu0 0
      %2360 = vmatprep.subr.bf16.mxu0 0
      %2361 = vmatpush2.bf16.msra.mxu0 0
      %2362 = vmatprep.mubr.bf16.mxu0 0
      %2363 = vmatmul.mubr.bf16.gmra.mxu0 %v1040
      %v2364 = vpop.f32.mrf.mxu0
      %v2365 = vadd.f32 0.0, %v2364
      %v2366 = vpop.f32.mrf.mxu0
      %v2367 = vpop.f32.mrf.mxu0
      %v2368 = vadd.f32 0.0, %v2367
      %v2369 = vpop.f32.mrf.mxu0
      %2370 = vmatprep.mubr.bf16.mxu0 0
      %2371 = vmatmul.mubr.bf16.gmra.mxu0 %v1043
      %v2372 = vpop.f32.mrf.mxu0
      %v2373 = vadd.f32 0.0, %v2372
      %v2374 = vpop.f32.mrf.mxu0
      %v2375 = vpop.f32.mrf.mxu0
      %v2376 = vadd.f32 0.0, %v2375
      %v2377 = vpop.f32.mrf.mxu0
      %2378 = vmatprep.mubr.bf16.mxu0 0
      %2379 = vmatmul.mubr.bf16.gmra.mxu0 %v1046
      %v2380 = vpop.f32.mrf.mxu0
      %v2381 = vadd.f32 0.0, %v2380
      %v2382 = vpop.f32.mrf.mxu0
      %v2383 = vpop.f32.mrf.mxu0
      %v2384 = vadd.f32 0.0, %v2383
      %v2385 = vpop.f32.mrf.mxu0
      %2386 = vmatprep.mubr.bf16.mxu0 0
      %2387 = vmatmul.mubr.bf16.gmra.mxu0 %v1049
      %v2388 = vpop.f32.mrf.mxu0
      %v2389 = vadd.f32 0.0, %v2388
      %v2390 = vpop.f32.mrf.mxu0
      %v2391 = vpop.f32.mrf.mxu0
      %v2392 = vadd.f32 0.0, %v2391
      %v2393 = vpop.f32.mrf.mxu0
      %2394 = vmatprep.mubr.bf16.mxu0 0
      %2395 = vmatmul.mubr.bf16.gmra.mxu0 %v1052
      %v2396 = vpop.f32.mrf.mxu0
      %v2397 = vadd.f32 0.0, %v2396
      %v2398 = vpop.f32.mrf.mxu0
      %v2399 = vpop.f32.mrf.mxu0
      %v2400 = vadd.f32 0.0, %v2399
      %v2401 = vpop.f32.mrf.mxu0
      %2402 = vmatprep.mubr.bf16.mxu0 0
      %2403 = vmatmul.mubr.bf16.gmra.mxu0 %v1055
      %v2404 = vpop.f32.mrf.mxu0
      %v2405 = vadd.f32 0.0, %v2404
      %v2406 = vpop.f32.mrf.mxu0
      %v2407 = vpop.f32.mrf.mxu0
      %v2408 = vadd.f32 0.0, %v2407
      %v2409 = vpop.f32.mrf.mxu0
      %2410 = vmatprep.mubr.bf16.mxu0 0
      %2411 = vmatmul.mubr.bf16.gmra.mxu0 %v1058
      %v2412 = vpop.f32.mrf.mxu0
      %v2413 = vadd.f32 0.0, %v2412
      %v2414 = vpop.f32.mrf.mxu0
      %v2415 = vpop.f32.mrf.mxu0
      %v2416 = vadd.f32 0.0, %v2415
      %v2417 = vpop.f32.mrf.mxu0
      %2418 = vmatprep.mubr.bf16.mxu0 0
      %2419 = vmatmul.mubr.bf16.gmra.mxu0 %v1061
      %v2420 = vpop.f32.mrf.mxu0
      %v2421 = vadd.f32 0.0, %v2420
      %v2422 = vpop.f32.mrf.mxu0
      %v2423 = vpop.f32.mrf.mxu0
      %v2424 = vadd.f32 0.0, %v2423
      %v2425 = vpop.f32.mrf.mxu0
      %2426 = vmatprep.mubr.bf16.mxu0 0
      %2427 = vmatmul.mubr.bf16.gmra.mxu0 %v1064
      %v2428 = vpop.f32.mrf.mxu0
      %v2429 = vadd.f32 0.0, %v2428
      %v2430 = vpop.f32.mrf.mxu0
      %v2431 = vpop.f32.mrf.mxu0
      %v2432 = vadd.f32 0.0, %v2431
      %v2433 = vpop.f32.mrf.mxu0
      %2434 = vmatprep.mubr.bf16.mxu0 0
      %2435 = vmatmul.mubr.bf16.gmra.mxu0 %v1067
      %v2436 = vpop.f32.mrf.mxu0
      %v2437 = vadd.f32 0.0, %v2436
      %v2438 = vpop.f32.mrf.mxu0
      %v2439 = vpop.f32.mrf.mxu0
      %v2440 = vadd.f32 0.0, %v2439
      %v2441 = vpop.f32.mrf.mxu0
      %2442 = vmatprep.mubr.bf16.mxu0 0
      %2443 = vmatmul.mubr.bf16.gmra.mxu0 %v1070
      %v2444 = vpop.f32.mrf.mxu0
      %v2445 = vadd.f32 0.0, %v2444
      %v2446 = vpop.f32.mrf.mxu0
      %v2447 = vpop.f32.mrf.mxu0
      %v2448 = vadd.f32 0.0, %v2447
      %v2449 = vpop.f32.mrf.mxu0
      %2450 = vmatprep.mubr.bf16.mxu0 0
      %2451 = vmatmul.mubr.bf16.gmra.mxu0 %v1073
      %v2452 = vpop.f32.mrf.mxu0
      %v2453 = vadd.f32 0.0, %v2452
      %v2454 = vpop.f32.mrf.mxu0
      %v2455 = vpop.f32.mrf.mxu0
      %v2456 = vadd.f32 0.0, %v2455
      %v2457 = vpop.f32.mrf.mxu0
      %2458 = vmatprep.mubr.bf16.mxu0 0
      %2459 = vmatmul.mubr.bf16.gmra.mxu0 %v1076
      %v2460 = vpop.f32.mrf.mxu0
      %v2461 = vadd.f32 0.0, %v2460
      %v2462 = vpop.f32.mrf.mxu0
      %v2463 = vpop.f32.mrf.mxu0
      %v2464 = vadd.f32 0.0, %v2463
      %v2465 = vpop.f32.mrf.mxu0
      %2466 = vmatprep.mubr.bf16.mxu0 0
      %2467 = vmatmul.mubr.bf16.gmra.mxu0 %v1079
      %v2468 = vpop.f32.mrf.mxu0
      %v2469 = vadd.f32 0.0, %v2468
      %v2470 = vpop.f32.mrf.mxu0
      %v2471 = vpop.f32.mrf.mxu0
      %v2472 = vadd.f32 0.0, %v2471
      %v2473 = vpop.f32.mrf.mxu0
      %2474 = vmatprep.mubr.bf16.mxu0 0
      %2475 = vmatmul.mubr.bf16.gmra.mxu0 %v1702
      %v2476 = vpop.f32.mrf.mxu0
      %v2477 = vadd.f32 0.0, %v2476
      %v2478 = vpop.f32.mrf.mxu0
      %v2479 = vpop.f32.mrf.mxu0
      %v2480 = vadd.f32 0.0, %v2479
      %v2481 = vpop.f32.mrf.mxu0
      %2482 = vmatprep.mubr.bf16.mxu0 0
      %2483 = vmatmul.mubr.bf16.gmra.mxu0 %v2325
      %v2484 = vpop.f32.mrf.mxu0
      %v2485 = vadd.f32 0.0, %v2484
      %v2486 = vpop.f32.mrf.mxu0
      %v2487 = vpop.f32.mrf.mxu0
      %v2488 = vadd.f32 0.0, %v2487
      %v2489 = vpop.f32.mrf.mxu0
      %2490 = vdwg.mxu0
      %v2491 = vadd.f32 %v2282, %v2365
      %v2492 = vadd.f32 %v2283, %v2368
      %v2493 = vadd.f32 %v2284, %v2373
      %v2494 = vadd.f32 %v2285, %v2376
      %v2495 = vadd.f32 %v2286, %v2381
      %v2496 = vadd.f32 %v2287, %v2384
      %v2497 = vadd.f32 %v2288, %v2389
      %v2498 = vadd.f32 %v2289, %v2392
      %v2499 = vadd.f32 %v2290, %v2397
      %v2500 = vadd.f32 %v2291, %v2400
      %v2501 = vadd.f32 %v2292, %v2405
      %v2502 = vadd.f32 %v2293, %v2408
      %v2503 = vadd.f32 %v2294, %v2413
      %v2504 = vadd.f32 %v2295, %v2416
      %v2505 = vadd.f32 %v2296, %v2421
      %v2506 = vadd.f32 %v2297, %v2424
      %v2507 = vadd.f32 %v2298, %v2429
      %v2508 = vadd.f32 %v2299, %v2432
      %v2509 = vadd.f32 %v2300, %v2437
      %v2510 = vadd.f32 %v2301, %v2440
      %v2511 = vadd.f32 %v2302, %v2445
      %v2512 = vadd.f32 %v2303, %v2448
      %v2513 = vadd.f32 %v2304, %v2453
      %v2514 = vadd.f32 %v2305, %v2456
      %v2515 = vadd.f32 %v2306, %v2461
      %v2516 = vadd.f32 %v2307, %v2464
      %v2517 = vadd.f32 %v2308, %v2469
      %v2518 = vadd.f32 %v2309, %v2472
      %v2519 = vadd.f32 %v2310, %v2477
      %v2520 = vadd.f32 %v2311, %v2480
      %v2521 = vadd.f32 %v2312, %v2485
      %v2522 = vadd.f32 %v2313, %v2488
      %v2523 = vld [vmem:[%s2] sm:$0x1]
      %v2525 = vlaneseq
      %v2526 = vshrl.u32 %v2525, 7
      %v2527 = vsub.s32 0, %v2526
      %v2528 = vrot.slane %v2523, %v2527
      %v2530 = vadd.f32 %v2491, %v2528
      %v2531 = vadd.f32 %v2492, %v2528
      %v2532 = vadd.f32 %v2493, %v2528
      %v2533 = vadd.f32 %v2494, %v2528
      %v2534 = vadd.f32 %v2495, %v2528
      %v2535 = vadd.f32 %v2496, %v2528
      %v2536 = vadd.f32 %v2497, %v2528
      %v2537 = vadd.f32 %v2498, %v2528
      %v2538 = vadd.f32 %v2499, %v2528
      %v2539 = vadd.f32 %v2500, %v2528
      %v2540 = vadd.f32 %v2501, %v2528
      %v2541 = vadd.f32 %v2502, %v2528
      %v2542 = vadd.f32 %v2503, %v2528
      %v2543 = vadd.f32 %v2504, %v2528
      %v2544 = vadd.f32 %v2505, %v2528
      %v2545 = vadd.f32 %v2506, %v2528
      %v2546 = vadd.f32 %v2507, %v2528
      %v2547 = vadd.f32 %v2508, %v2528
      %v2548 = vadd.f32 %v2509, %v2528
      %v2549 = vadd.f32 %v2510, %v2528
      %v2550 = vadd.f32 %v2511, %v2528
      %v2551 = vadd.f32 %v2512, %v2528
      %v2552 = vadd.f32 %v2513, %v2528
      %v2553 = vadd.f32 %v2514, %v2528
      %v2554 = vadd.f32 %v2515, %v2528
      %v2555 = vadd.f32 %v2516, %v2528
      %v2556 = vadd.f32 %v2517, %v2528
      %v2557 = vadd.f32 %v2518, %v2528
      %v2558 = vadd.f32 %v2519, %v2528
      %v2559 = vadd.f32 %v2520, %v2528
      %v2560 = vadd.f32 %v2521, %v2528
      %v2561 = vadd.f32 %v2522, %v2528
      %v2562 = vmax.f32 %v2530, 0.0
      %v2563 = vmax.f32 %v2531, 0.0
      %v2564 = vmax.f32 %v2532, 0.0
      %v2565 = vmax.f32 %v2533, 0.0
      %v2566 = vmax.f32 %v2534, 0.0
      %v2567 = vmax.f32 %v2535, 0.0
      %v2568 = vmax.f32 %v2536, 0.0
      %v2569 = vmax.f32 %v2537, 0.0
      %v2570 = vmax.f32 %v2538, 0.0
      %v2571 = vmax.f32 %v2539, 0.0
      %v2572 = vmax.f32 %v2540, 0.0
      %v2573 = vmax.f32 %v2541, 0.0
      %v2574 = vmax.f32 %v2542, 0.0
      %v2575 = vmax.f32 %v2543, 0.0
      %v2576 = vmax.f32 %v2544, 0.0
      %v2577 = vmax.f32 %v2545, 0.0
      %v2578 = vmax.f32 %v2546, 0.0
      %v2579 = vmax.f32 %v2547, 0.0
      %v2580 = vmax.f32 %v2548, 0.0
      %v2581 = vmax.f32 %v2549, 0.0
      %v2582 = vmax.f32 %v2550, 0.0
      %v2583 = vmax.f32 %v2551, 0.0
      %v2584 = vmax.f32 %v2552, 0.0
      %v2585 = vmax.f32 %v2553, 0.0
      %v2586 = vmax.f32 %v2554, 0.0
      %v2587 = vmax.f32 %v2555, 0.0
      %v2588 = vmax.f32 %v2556, 0.0
      %v2589 = vmax.f32 %v2557, 0.0
      %v2590 = vmax.f32 %v2558, 0.0
      %v2591 = vmax.f32 %v2559, 0.0
      %v2592 = vmax.f32 %v2560, 0.0
      %v2593 = vmax.f32 %v2561, 0.0
      %2594 = vst.msk [vmem:[#allocation2] sm:$0xff] %vm476, 0.0
      %2595 = vst.msk [vmem:[#allocation2 + $0x8] sm:$0xff] %vm476, 0.0
      %vm2596 = vcmask 58368
      %2597 = vst.msk [vmem:[#allocation2 + $0x10] sm:$0x3] %vm2596, 0.0
      %2598 = vst.msk [vmem:[#allocation2 + $0x18] sm:$0xff] %vm476, 0.0
      %2599 = vst.msk [vmem:[#allocation2 + $0x20] sm:$0xff] %vm476, 0.0
      %2600 = vst.msk [vmem:[#allocation2 + $0x28] sm:$0x3] %vm2596, 0.0
      %2601 = vst.msk [vmem:[#allocation2 + $0x30] sm:$0xff] %vm476, 0.0
      %2602 = vst.msk [vmem:[#allocation2 + $0x38] sm:$0xff] %vm476, 0.0
      %2603 = vst.msk [vmem:[#allocation2 + $0x40] sm:$0x3] %vm2596, 0.0
      %2604 = vst.msk [vmem:[#allocation2 + $0x48] sm:$0xff] %vm476, 0.0
      %2605 = vst.msk [vmem:[#allocation2 + $0x50] sm:$0xff] %vm476, 0.0
      %2606 = vst.msk [vmem:[#allocation2 + $0x58] sm:$0x3] %vm2596, 0.0
      %2607 = vst.msk [vmem:[#allocation2 + $0x60] sm:$0xff] %vm476, 0.0
      %2608 = vst.msk [vmem:[#allocation2 + $0x68] sm:$0xff] %vm476, 0.0
      %2609 = vst.msk [vmem:[#allocation2 + $0x70] sm:$0x3] %vm2596, 0.0
      %2610 = vst.msk [vmem:[#allocation2 + $0x78] sm:$0xff] %vm476, 0.0
      %2611 = vst.msk [vmem:[#allocation2 + $0x80] sm:$0xff] %vm476, 0.0
      %2612 = vst.msk [vmem:[#allocation2 + $0x88] sm:$0x3] %vm2596, 0.0
      %2613 = vst.msk [vmem:[#allocation2 + $0x90] sm:$0xff] %vm476, 0.0
      %2614 = vst.msk [vmem:[#allocation2 + $0x98] sm:$0xff] %vm476, 0.0
      %2615 = vst.msk [vmem:[#allocation2 + $0xa0] sm:$0x3] %vm2596, 0.0
      %2616 = vst.msk [vmem:[#allocation2 + $0xa8] sm:$0xff] %vm476, 0.0
      %2617 = vst.msk [vmem:[#allocation2 + $0xb0] sm:$0xff] %vm476, 0.0
      %2618 = vst.msk [vmem:[#allocation2 + $0xb8] sm:$0x3] %vm2596, 0.0
      %2619 = vst.msk [vmem:[#allocation2 + $0xc0] sm:$0xff] %vm476, 0.0
      %2620 = vst.msk [vmem:[#allocation2 + $0xc8] sm:$0xff] %vm476, 0.0
      %2621 = vst.msk [vmem:[#allocation2 + $0xd0] sm:$0x3] %vm2596, 0.0
      %2622 = vst.msk [vmem:[#allocation2 + $0xd8] sm:$0xff] %vm476, 0.0
      %2623 = vst.msk [vmem:[#allocation2 + $0xe0] sm:$0xff] %vm476, 0.0
      %2624 = vst.msk [vmem:[#allocation2 + $0xe8] sm:$0x3] %vm2596, 0.0
      %2625 = vst.msk [vmem:[#allocation2 + $0xf0] sm:$0xff] %vm476, 0.0
      %2626 = vst.msk [vmem:[#allocation2 + $0xf8] sm:$0xff] %vm476, 0.0
      %2627 = vst.msk [vmem:[#allocation2 + $0x100] sm:$0x3] %vm2596, 0.0
      %2628 = vst.msk [vmem:[#allocation2 + $0x108] sm:$0xff] %vm476, 0.0
      %2629 = vst.msk [vmem:[#allocation2 + $0x110] sm:$0xff] %vm476, 0.0
      %2630 = vst.msk [vmem:[#allocation2 + $0x118] sm:$0x3] %vm2596, 0.0
      %2631 = vst.msk [vmem:[#allocation2 + $0x120] sm:$0xff] %vm476, 0.0
      %2632 = vst.msk [vmem:[#allocation2 + $0x128] sm:$0xff] %vm476, 0.0
      %2633 = vst.msk [vmem:[#allocation2 + $0x130] sm:$0x3] %vm2596, 0.0
      %2634 = vst.msk [vmem:[#allocation2 + $0x138] sm:$0xff] %vm476, 0.0
      %2635 = vst.msk [vmem:[#allocation2 + $0x140] sm:$0xff] %vm476, 0.0
      %2636 = vst.msk [vmem:[#allocation2 + $0x148] sm:$0x3] %vm2596, 0.0
      %2637 = vst.msk [vmem:[#allocation2 + $0x150] sm:$0xff] %vm476, 0.0
      %2638 = vst.msk [vmem:[#allocation2 + $0x158] sm:$0xff] %vm476, 0.0
      %2639 = vst.msk [vmem:[#allocation2 + $0x160] sm:$0x3] %vm2596, 0.0
      %2640 = vst.msk [vmem:[#allocation2 + $0x168] sm:$0xff] %vm476, 0.0
      %2641 = vst.msk [vmem:[#allocation2 + $0x170] sm:$0xff] %vm476, 0.0
      %2642 = vst.msk [vmem:[#allocation2 + $0x178] sm:$0x3] %vm2596, 0.0
      %2643 = vst.msk [vmem:[#allocation2 + $0x180] sm:$0xff] %vm476, 0.0
      %2644 = vst.msk [vmem:[#allocation2 + $0x188] sm:$0xff] %vm476, 0.0
      %2645 = vst.msk [vmem:[#allocation2 + $0x190] sm:$0x3] %vm2596, 0.0
      %2646 = vst.msk [vmem:[#allocation2 + $0x198] sm:$0xff] %vm476, 0.0
      %2647 = vst.msk [vmem:[#allocation2 + $0x1a0] sm:$0xff] %vm476, 0.0
      %2648 = vst.msk [vmem:[#allocation2 + $0x1a8] sm:$0x3] %vm2596, 0.0
      %s2649 = scalar_lea.vmem [#allocation2], 24
      %2650 = vst.msk [vmem:[%s2649 + $0x1] sm:$0xff] %vm476, %v2562
      %2651 = vst.msk [vmem:[%s2649 + $0x9] sm:$0xff] %vm476, %v2563
      %2652 = vst.msk [vmem:[%s2649 + $0x19] sm:$0xff] %vm476, %v2564
      %2653 = vst.msk [vmem:[%s2649 + $0x21] sm:$0xff] %vm476, %v2565
      %2654 = vst.msk [vmem:[%s2649 + $0x31] sm:$0xff] %vm476, %v2566
      %2655 = vst.msk [vmem:[%s2649 + $0x39] sm:$0xff] %vm476, %v2567
      %2656 = vst.msk [vmem:[%s2649 + $0x49] sm:$0xff] %vm476, %v2568
      %2657 = vst.msk [vmem:[%s2649 + $0x51] sm:$0xff] %vm476, %v2569
      %2658 = vst.msk [vmem:[%s2649 + $0x61] sm:$0xff] %vm476, %v2570
      %2659 = vst.msk [vmem:[%s2649 + $0x69] sm:$0xff] %vm476, %v2571
      %2660 = vst.msk [vmem:[%s2649 + $0x79] sm:$0xff] %vm476, %v2572
      %2661 = vst.msk [vmem:[%s2649 + $0x81] sm:$0xff] %vm476, %v2573
      %2662 = vst.msk [vmem:[%s2649 + $0x91] sm:$0xff] %vm476, %v2574
      %2663 = vst.msk [vmem:[%s2649 + $0x99] sm:$0xff] %vm476, %v2575
      %2664 = vst.msk [vmem:[%s2649 + $0xa9] sm:$0xff] %vm476, %v2576
      %2665 = vst.msk [vmem:[%s2649 + $0xb1] sm:$0xff] %vm476, %v2577
      %2666 = vst.msk [vmem:[%s2649 + $0xc1] sm:$0xff] %vm476, %v2578
      %2667 = vst.msk [vmem:[%s2649 + $0xc9] sm:$0xff] %vm476, %v2579
      %2668 = vst.msk [vmem:[%s2649 + $0xd9] sm:$0xff] %vm476, %v2580
      %2669 = vst.msk [vmem:[%s2649 + $0xe1] sm:$0xff] %vm476, %v2581
      %2670 = vst.msk [vmem:[%s2649 + $0xf1] sm:$0xff] %vm476, %v2582
      %2671 = vst.msk [vmem:[%s2649 + $0xf9] sm:$0xff] %vm476, %v2583
      %2672 = vst.msk [vmem:[%s2649 + $0x109] sm:$0xff] %vm476, %v2584
      %2673 = vst.msk [vmem:[%s2649 + $0x111] sm:$0xff] %vm476, %v2585
      %2674 = vst.msk [vmem:[%s2649 + $0x121] sm:$0xff] %vm476, %v2586
      %2675 = vst.msk [vmem:[%s2649 + $0x129] sm:$0xff] %vm476, %v2587
      %2676 = vst.msk [vmem:[%s2649 + $0x139] sm:$0xff] %vm476, %v2588
      %2677 = vst.msk [vmem:[%s2649 + $0x141] sm:$0xff] %vm476, %v2589
      %2678 = vst.msk [vmem:[%s2649 + $0x151] sm:$0xff] %vm476, %v2590
      %2679 = vst.msk [vmem:[%s2649 + $0x159] sm:$0xff] %vm476, %v2591
      %2680 = vst.msk [vmem:[%s2649 + $0x169] sm:$0xff] %vm476, %v2592
      %2681 = vst.msk [vmem:[%s2649 + $0x171] sm:$0xff] %vm476, %v2593
      %v2682 = vld [vmem:[#allocation2] sm:$0xff]
      %v2683 = vld [vmem:[#allocation2 + $0x8] sm:$0xff]
      %v2684 = vld [vmem:[#allocation2 + $0x10] sm:$0x3]
      %v2685 = vld [vmem:[#allocation2 + $0x18] sm:$0xff]
      %v2686 = vld [vmem:[#allocation2 + $0x20] sm:$0xff]
      %v2687 = vld [vmem:[#allocation2 + $0x28] sm:$0x3]
      %v2688 = vld [vmem:[#allocation2 + $0x30] sm:$0xff]
      %v2689 = vld [vmem:[#allocation2 + $0x38] sm:$0xff]
      %v2690 = vld [vmem:[#allocation2 + $0x40] sm:$0x3]
      %v2691 = vld [vmem:[#allocation2 + $0x48] sm:$0xff]
      %v2692 = vld [vmem:[#allocation2 + $0x50] sm:$0xff]
      %v2693 = vld [vmem:[#allocation2 + $0x58] sm:$0x3]
      %v2694 = vld [vmem:[#allocation2 + $0x60] sm:$0xff]
      %v2695 = vld [vmem:[#allocation2 + $0x68] sm:$0xff]
      %v2696 = vld [vmem:[#allocation2 + $0x70] sm:$0x3]
      %v2697 = vld [vmem:[#allocation2 + $0x78] sm:$0xff]
      %v2698 = vld [vmem:[#allocation2 + $0x80] sm:$0xff]
      %v2699 = vld [vmem:[#allocation2 + $0x88] sm:$0x3]
      %v2700 = vld [vmem:[#allocation2 + $0x90] sm:$0xff]
      %v2701 = vld [vmem:[#allocation2 + $0x98] sm:$0xff]
      %v2702 = vld [vmem:[#allocation2 + $0xa0] sm:$0x3]
      %v2703 = vld [vmem:[#allocation2 + $0xa8] sm:$0xff]
      %v2704 = vld [vmem:[#allocation2 + $0xb0] sm:$0xff]
      %v2705 = vld [vmem:[#allocation2 + $0xb8] sm:$0x3]
      %v2706 = vld [vmem:[#allocation2 + $0xc0] sm:$0xff]
      %v2707 = vld [vmem:[#allocation2 + $0xc8] sm:$0xff]
      %v2708 = vld [vmem:[#allocation2 + $0xd0] sm:$0x3]
      %v2709 = vld [vmem:[#allocation2 + $0xd8] sm:$0xff]
      %v2710 = vld [vmem:[#allocation2 + $0xe0] sm:$0xff]
      %v2711 = vld [vmem:[#allocation2 + $0xe8] sm:$0x3]
      %v2712 = vld [vmem:[#allocation2 + $0xf0] sm:$0xff]
      %v2713 = vld [vmem:[#allocation2 + $0xf8] sm:$0xff]
      %v2714 = vld [vmem:[#allocation2 + $0x100] sm:$0x3]
      %v2715 = vld [vmem:[#allocation2 + $0x108] sm:$0xff]
      %v2716 = vld [vmem:[#allocation2 + $0x110] sm:$0xff]
      %v2717 = vld [vmem:[#allocation2 + $0x118] sm:$0x3]
      %v2718 = vld [vmem:[#allocation2 + $0x120] sm:$0xff]
      %v2719 = vld [vmem:[#allocation2 + $0x128] sm:$0xff]
      %v2720 = vld [vmem:[#allocation2 + $0x130] sm:$0x3]
      %v2721 = vld [vmem:[#allocation2 + $0x138] sm:$0xff]
      %v2722 = vld [vmem:[#allocation2 + $0x140] sm:$0xff]
      %v2723 = vld [vmem:[#allocation2 + $0x148] sm:$0x3]
      %v2724 = vld [vmem:[#allocation2 + $0x150] sm:$0xff]
      %v2725 = vld [vmem:[#allocation2 + $0x158] sm:$0xff]
      %v2726 = vld [vmem:[#allocation2 + $0x160] sm:$0x3]
      %v2727 = vld [vmem:[#allocation2 + $0x168] sm:$0xff]
      %v2728 = vld [vmem:[#allocation2 + $0x170] sm:$0xff]
      %v2729 = vld [vmem:[#allocation2 + $0x178] sm:$0x3]
      %v2730 = vld [vmem:[#allocation2 + $0x180] sm:$0xff]
      %v2731 = vld [vmem:[#allocation2 + $0x188] sm:$0xff]
      %v2732 = vld [vmem:[#allocation2 + $0x190] sm:$0x3]
      %v2733 = vld [vmem:[#allocation2 + $0x198] sm:$0xff]
      %v2734 = vld [vmem:[#allocation2 + $0x1a0] sm:$0xff]
      %v2735 = vld [vmem:[#allocation2 + $0x1a8] sm:$0x3]
      %v2736 = vpack.c.bf16 %v2683, %v2682
      %v2737 = vpack.c.bf16 %v2686, %v2685
      %v2738 = vpack.c.bf16 %v2689, %v2688
      %v2739 = vpack.c.bf16 %v2692, %v2691
      %v2740 = vpack.c.bf16 %v2695, %v2694
      %v2741 = vpack.c.bf16 %v2698, %v2697
      %v2742 = vpack.c.bf16 %v2701, %v2700
      %v2743 = vpack.c.bf16 %v2704, %v2703
      %v2744 = vpack.c.bf16 %v2707, %v2706
      %v2745 = vpack.c.bf16 %v2710, %v2709
      %v2746 = vpack.c.bf16 %v2713, %v2712
      %v2747 = vpack.c.bf16 %v2716, %v2715
      %v2748 = vpack.c.bf16 %v2719, %v2718
      %v2749 = vpack.c.bf16 %v2722, %v2721
      %v2750 = vpack.c.bf16 %v2725, %v2724
      %v2751 = vpack.c.bf16 %v2728, %v2727
      %v2752 = vld [vmem:[%s3] sm:$0xf]
      %v2801 = vrot.slane %v2682, 1
      %v2802 = vrot.slane %v2683, 1
      %v2803 = vsel %vm345, %v2801, %v2802
      %v2804 = vrot.slane %v2684, 1
      %v2805 = vsel %vm345, %v2802, %v2804
      %v2806 = vrot.slane %v2685, 1
      %v2807 = vrot.slane %v2686, 1
      %v2808 = vsel %vm345, %v2806, %v2807
      %v2809 = vrot.slane %v2687, 1
      %v2810 = vsel %vm345, %v2807, %v2809
      %v2811 = vrot.slane %v2688, 1
      %v2812 = vrot.slane %v2689, 1
      %v2813 = vsel %vm345, %v2811, %v2812
      %v2814 = vrot.slane %v2690, 1
      %v2815 = vsel %vm345, %v2812, %v2814
      %v2816 = vrot.slane %v2691, 1
      %v2817 = vrot.slane %v2692, 1
      %v2818 = vsel %vm345, %v2816, %v2817
      %v2819 = vrot.slane %v2693, 1
      %v2820 = vsel %vm345, %v2817, %v2819
      %v2821 = vrot.slane %v2694, 1
      %v2822 = vrot.slane %v2695, 1
      %v2823 = vsel %vm345, %v2821, %v2822
      %v2824 = vrot.slane %v2696, 1
      %v2825 = vsel %vm345, %v2822, %v2824
      %v2826 = vrot.slane %v2697, 1
      %v2827 = vrot.slane %v2698, 1
      %v2828 = vsel %vm345, %v2826, %v2827
      %v2829 = vrot.slane %v2699, 1
      %v2830 = vsel %vm345, %v2827, %v2829
      %v2831 = vrot.slane %v2700, 1
      %v2832 = vrot.slane %v2701, 1
      %v2833 = vsel %vm345, %v2831, %v2832
      %v2834 = vrot.slane %v2702, 1
      %v2835 = vsel %vm345, %v2832, %v2834
      %v2836 = vrot.slane %v2703, 1
      %v2837 = vrot.slane %v2704, 1
      %v2838 = vsel %vm345, %v2836, %v2837
      %v2839 = vrot.slane %v2705, 1
      %v2840 = vsel %vm345, %v2837, %v2839
      %v2841 = vrot.slane %v2706, 1
      %v2842 = vrot.slane %v2707, 1
      %v2843 = vsel %vm345, %v2841, %v2842
      %v2844 = vrot.slane %v2708, 1
      %v2845 = vsel %vm345, %v2842, %v2844
      %v2846 = vrot.slane %v2709, 1
      %v2847 = vrot.slane %v2710, 1
      %v2848 = vsel %vm345, %v2846, %v2847
      %v2849 = vrot.slane %v2711, 1
      %v2850 = vsel %vm345, %v2847, %v2849
      %v2851 = vrot.slane %v2712, 1
      %v2852 = vrot.slane %v2713, 1
      %v2853 = vsel %vm345, %v2851, %v2852
      %v2854 = vrot.slane %v2714, 1
      %v2855 = vsel %vm345, %v2852, %v2854
      %v2856 = vrot.slane %v2715, 1
      %v2857 = vrot.slane %v2716, 1
      %v2858 = vsel %vm345, %v2856, %v2857
      %v2859 = vrot.slane %v2717, 1
      %v2860 = vsel %vm345, %v2857, %v2859
      %v2861 = vrot.slane %v2718, 1
      %v2862 = vrot.slane %v2719, 1
      %v2863 = vsel %vm345, %v2861, %v2862
      %v2864 = vrot.slane %v2720, 1
      %v2865 = vsel %vm345, %v2862, %v2864
      %v2866 = vrot.slane %v2721, 1
      %v2867 = vrot.slane %v2722, 1
      %v2868 = vsel %vm345, %v2866, %v2867
      %v2869 = vrot.slane %v2723, 1
      %v2870 = vsel %vm345, %v2867, %v2869
      %v2871 = vrot.slane %v2724, 1
      %v2872 = vrot.slane %v2725, 1
      %v2873 = vsel %vm345, %v2871, %v2872
      %v2874 = vrot.slane %v2726, 1
      %v2875 = vsel %vm345, %v2872, %v2874
      %v2876 = vrot.slane %v2727, 1
      %v2877 = vrot.slane %v2728, 1
      %v2878 = vsel %vm345, %v2876, %v2877
      %v2879 = vrot.slane %v2729, 1
      %v2880 = vsel %vm345, %v2877, %v2879
      %v2913 = vpack.c.bf16 %v2805, %v2803
      %v2914 = vpack.c.bf16 %v2810, %v2808
      %v2915 = vpack.c.bf16 %v2815, %v2813
      %v2916 = vpack.c.bf16 %v2820, %v2818
      %v2917 = vpack.c.bf16 %v2825, %v2823
      %v2918 = vpack.c.bf16 %v2830, %v2828
      %v2919 = vpack.c.bf16 %v2835, %v2833
      %v2920 = vpack.c.bf16 %v2840, %v2838
      %v2921 = vpack.c.bf16 %v2845, %v2843
      %v2922 = vpack.c.bf16 %v2850, %v2848
      %v2923 = vpack.c.bf16 %v2855, %v2853
      %v2924 = vpack.c.bf16 %v2860, %v2858
      %v2925 = vpack.c.bf16 %v2865, %v2863
      %v2926 = vpack.c.bf16 %v2870, %v2868
      %v2927 = vpack.c.bf16 %v2875, %v2873
      %v2928 = vpack.c.bf16 %v2880, %v2878
      %s2929 = scalar_lea.vmem %s3, 4
      %v2930 = vld [vmem:[%s2929] sm:$0xf]
      %v2932 = vsel %vm476, %v2913, 0
      %v2935 = vsel %vm476, %v2914, 0
      %v2938 = vsel %vm476, %v2915, 0
      %v2941 = vsel %vm476, %v2916, 0
      %v2944 = vsel %vm476, %v2917, 0
      %v2947 = vsel %vm476, %v2918, 0
      %v2950 = vsel %vm476, %v2919, 0
      %v2953 = vsel %vm476, %v2920, 0
      %v2956 = vsel %vm476, %v2921, 0
      %v2959 = vsel %vm476, %v2922, 0
      %v2962 = vsel %vm476, %v2923, 0
      %v2965 = vsel %vm476, %v2924, 0
      %v2968 = vsel %vm476, %v2925, 0
      %v2971 = vsel %vm476, %v2926, 0
      %v2974 = vsel %vm476, %v2927, 0
      %v2977 = vsel %vm476, %v2928, 0
      %v2980 = vsel %vm525, %v2930, 0
      %2982 = vmatprep.subr.bf16.mxu0 0
      %2983 = vmatpush1.bf16.msra.mxu0 0
      %2984 = vmatprep.subr.bf16.mxu0 0
      %2985 = vmatpush1.bf16.msra.mxu0 0
      %2986 = vmatprep.subr.bf16.mxu0 0
      %2987 = vmatpush1.bf16.msra.mxu0 0
      %2988 = vmatprep.subr.bf16.mxu0 0
      %2989 = vmatpush1.bf16.msra.mxu0 0
      %2990 = vmatprep.subr.bf16.mxu0 0
      %2991 = vmatpush1.bf16.msra.mxu0 0
      %2992 = vmatprep.subr.bf16.mxu0 0
      %2993 = vmatpush1.bf16.msra.mxu0 0
      %2994 = vmatprep.subr.bf16.mxu0 0
      %2995 = vmatpush1.bf16.msra.mxu0 0
      %2996 = vmatprep.subr.bf16.mxu0 0
      %2997 = vmatpush1.bf16.msra.mxu0 %v2980
      %2998 = vmatprep.subr.bf16.mxu0 0
      %2999 = vmatpush2.bf16.msra.mxu0 0
      %3000 = vmatprep.subr.bf16.mxu0 0
      %3001 = vmatpush2.bf16.msra.mxu0 0
      %3002 = vmatprep.subr.bf16.mxu0 0
      %3003 = vmatpush2.bf16.msra.mxu0 0
      %3004 = vmatprep.subr.bf16.mxu0 0
      %3005 = vmatpush2.bf16.msra.mxu0 0
      %3006 = vmatprep.subr.bf16.mxu0 0
      %3007 = vmatpush2.bf16.msra.mxu0 0
      %3008 = vmatprep.subr.bf16.mxu0 0
      %3009 = vmatpush2.bf16.msra.mxu0 0
      %3010 = vmatprep.subr.bf16.mxu0 0
      %3011 = vmatpush2.bf16.msra.mxu0 0
      %3012 = vmatprep.subr.bf16.mxu0 0
      %3013 = vmatpush2.bf16.msra.mxu0 0
      %3014 = vmatprep.mubr.bf16.mxu0 0
      %3015 = vmatmul.mubr.bf16.gmra.mxu0 %v2932
      %v3016 = vpop.f32.mrf.mxu0
      %v3017 = vadd.f32 0.0, %v3016
      %v3018 = vpop.f32.mrf.mxu0
      %v3019 = vpop.f32.mrf.mxu0
      %v3020 = vadd.f32 0.0, %v3019
      %v3021 = vpop.f32.mrf.mxu0
      %3022 = vmatprep.mubr.bf16.mxu0 0
      %3023 = vmatmul.mubr.bf16.gmra.mxu0 %v2935
      %v3024 = vpop.f32.mrf.mxu0
      %v3025 = vadd.f32 0.0, %v3024
      %v3026 = vpop.f32.mrf.mxu0
      %v3027 = vpop.f32.mrf.mxu0
      %v3028 = vadd.f32 0.0, %v3027
      %v3029 = vpop.f32.mrf.mxu0
      %3030 = vmatprep.mubr.bf16.mxu0 0
      %3031 = vmatmul.mubr.bf16.gmra.mxu0 %v2938
      %v3032 = vpop.f32.mrf.mxu0
      %v3033 = vadd.f32 0.0, %v3032
      %v3034 = vpop.f32.mrf.mxu0
      %v3035 = vpop.f32.mrf.mxu0
      %v3036 = vadd.f32 0.0, %v3035
      %v3037 = vpop.f32.mrf.mxu0
      %3038 = vmatprep.mubr.bf16.mxu0 0
      %3039 = vmatmul.mubr.bf16.gmra.mxu0 %v2941
      %v3040 = vpop.f32.mrf.mxu0
      %v3041 = vadd.f32 0.0, %v3040
      %v3042 = vpop.f32.mrf.mxu0
      %v3043 = vpop.f32.mrf.mxu0
      %v3044 = vadd.f32 0.0, %v3043
      %v3045 = vpop.f32.mrf.mxu0
      %3046 = vmatprep.mubr.bf16.mxu0 0
      %3047 = vmatmul.mubr.bf16.gmra.mxu0 %v2944
      %v3048 = vpop.f32.mrf.mxu0
      %v3049 = vadd.f32 0.0, %v3048
      %v3050 = vpop.f32.mrf.mxu0
      %v3051 = vpop.f32.mrf.mxu0
      %v3052 = vadd.f32 0.0, %v3051
      %v3053 = vpop.f32.mrf.mxu0
      %3054 = vmatprep.mubr.bf16.mxu0 0
      %3055 = vmatmul.mubr.bf16.gmra.mxu0 %v2947
      %v3056 = vpop.f32.mrf.mxu0
      %v3057 = vadd.f32 0.0, %v3056
      %v3058 = vpop.f32.mrf.mxu0
      %v3059 = vpop.f32.mrf.mxu0
      %v3060 = vadd.f32 0.0, %v3059
      %v3061 = vpop.f32.mrf.mxu0
      %3062 = vmatprep.mubr.bf16.mxu0 0
      %3063 = vmatmul.mubr.bf16.gmra.mxu0 %v2950
      %v3064 = vpop.f32.mrf.mxu0
      %v3065 = vadd.f32 0.0, %v3064
      %v3066 = vpop.f32.mrf.mxu0
      %v3067 = vpop.f32.mrf.mxu0
      %v3068 = vadd.f32 0.0, %v3067
      %v3069 = vpop.f32.mrf.mxu0
      %3070 = vmatprep.mubr.bf16.mxu0 0
      %3071 = vmatmul.mubr.bf16.gmra.mxu0 %v2953
      %v3072 = vpop.f32.mrf.mxu0
      %v3073 = vadd.f32 0.0, %v3072
      %v3074 = vpop.f32.mrf.mxu0
      %v3075 = vpop.f32.mrf.mxu0
      %v3076 = vadd.f32 0.0, %v3075
      %v3077 = vpop.f32.mrf.mxu0
      %3078 = vmatprep.mubr.bf16.mxu0 0
      %3079 = vmatmul.mubr.bf16.gmra.mxu0 %v2956
      %v3080 = vpop.f32.mrf.mxu0
      %v3081 = vadd.f32 0.0, %v3080
      %v3082 = vpop.f32.mrf.mxu0
      %v3083 = vpop.f32.mrf.mxu0
      %v3084 = vadd.f32 0.0, %v3083
      %v3085 = vpop.f32.mrf.mxu0
      %3086 = vmatprep.mubr.bf16.mxu0 0
      %3087 = vmatmul.mubr.bf16.gmra.mxu0 %v2959
      %v3088 = vpop.f32.mrf.mxu0
      %v3089 = vadd.f32 0.0, %v3088
      %v3090 = vpop.f32.mrf.mxu0
      %v3091 = vpop.f32.mrf.mxu0
      %v3092 = vadd.f32 0.0, %v3091
      %v3093 = vpop.f32.mrf.mxu0
      %3094 = vmatprep.mubr.bf16.mxu0 0
      %3095 = vmatmul.mubr.bf16.gmra.mxu0 %v2962
      %v3096 = vpop.f32.mrf.mxu0
      %v3097 = vadd.f32 0.0, %v3096
      %v3098 = vpop.f32.mrf.mxu0
      %v3099 = vpop.f32.mrf.mxu0
      %v3100 = vadd.f32 0.0, %v3099
      %v3101 = vpop.f32.mrf.mxu0
      %3102 = vmatprep.mubr.bf16.mxu0 0
      %3103 = vmatmul.mubr.bf16.gmra.mxu0 %v2965
      %v3104 = vpop.f32.mrf.mxu0
      %v3105 = vadd.f32 0.0, %v3104
      %v3106 = vpop.f32.mrf.mxu0
      %v3107 = vpop.f32.mrf.mxu0
      %v3108 = vadd.f32 0.0, %v3107
      %v3109 = vpop.f32.mrf.mxu0
      %3110 = vmatprep.mubr.bf16.mxu0 0
      %3111 = vmatmul.mubr.bf16.gmra.mxu0 %v2968
      %v3112 = vpop.f32.mrf.mxu0
      %v3113 = vadd.f32 0.0, %v3112
      %v3114 = vpop.f32.mrf.mxu0
      %v3115 = vpop.f32.mrf.mxu0
      %v3116 = vadd.f32 0.0, %v3115
      %v3117 = vpop.f32.mrf.mxu0
      %3118 = vmatprep.mubr.bf16.mxu0 0
      %3119 = vmatmul.mubr.bf16.gmra.mxu0 %v2971
      %v3120 = vpop.f32.mrf.mxu0
      %v3121 = vadd.f32 0.0, %v3120
      %v3122 = vpop.f32.mrf.mxu0
      %v3123 = vpop.f32.mrf.mxu0
      %v3124 = vadd.f32 0.0, %v3123
      %v3125 = vpop.f32.mrf.mxu0
      %3126 = vmatprep.mubr.bf16.mxu0 0
      %3127 = vmatmul.mubr.bf16.gmra.mxu0 %v2974
      %v3128 = vpop.f32.mrf.mxu0
      %v3129 = vadd.f32 0.0, %v3128
      %v3130 = vpop.f32.mrf.mxu0
      %v3131 = vpop.f32.mrf.mxu0
      %v3132 = vadd.f32 0.0, %v3131
      %v3133 = vpop.f32.mrf.mxu0
      %3134 = vmatprep.mubr.bf16.mxu0 0
      %3135 = vmatmul.mubr.bf16.gmra.mxu0 %v2977
      %v3136 = vpop.f32.mrf.mxu0
      %v3137 = vadd.f32 0.0, %v3136
      %v3138 = vpop.f32.mrf.mxu0
      %v3139 = vpop.f32.mrf.mxu0
      %v3140 = vadd.f32 0.0, %v3139
      %v3141 = vpop.f32.mrf.mxu0
      %3142 = vdwg.mxu0
      %v3144 = vsel %vm476, %v2736, 0
      %v3147 = vsel %vm476, %v2737, 0
      %v3150 = vsel %vm476, %v2738, 0
      %v3153 = vsel %vm476, %v2739, 0
      %v3156 = vsel %vm476, %v2740, 0
      %v3159 = vsel %vm476, %v2741, 0
      %v3162 = vsel %vm476, %v2742, 0
      %v3165 = vsel %vm476, %v2743, 0
      %v3168 = vsel %vm476, %v2744, 0
      %v3171 = vsel %vm476, %v2745, 0
      %v3174 = vsel %vm476, %v2746, 0
      %v3177 = vsel %vm476, %v2747, 0
      %v3180 = vsel %vm476, %v2748, 0
      %v3183 = vsel %vm476, %v2749, 0
      %v3186 = vsel %vm476, %v2750, 0
      %v3189 = vsel %vm476, %v2751, 0
      %v3192 = vsel %vm525, %v2752, 0
      %3194 = vmatprep.subr.bf16.mxu0 0
      %3195 = vmatpush1.bf16.msra.mxu0 0
      %3196 = vmatprep.subr.bf16.mxu0 0
      %3197 = vmatpush1.bf16.msra.mxu0 0
      %3198 = vmatprep.subr.bf16.mxu0 0
      %3199 = vmatpush1.bf16.msra.mxu0 0
      %3200 = vmatprep.subr.bf16.mxu0 0
      %3201 = vmatpush1.bf16.msra.mxu0 0
      %3202 = vmatprep.subr.bf16.mxu0 0
      %3203 = vmatpush1.bf16.msra.mxu0 0
      %3204 = vmatprep.subr.bf16.mxu0 0
      %3205 = vmatpush1.bf16.msra.mxu0 0
      %3206 = vmatprep.subr.bf16.mxu0 0
      %3207 = vmatpush1.bf16.msra.mxu0 0
      %3208 = vmatprep.subr.bf16.mxu0 0
      %3209 = vmatpush1.bf16.msra.mxu0 %v3192
      %3210 = vmatprep.subr.bf16.mxu0 0
      %3211 = vmatpush2.bf16.msra.mxu0 0
      %3212 = vmatprep.subr.bf16.mxu0 0
      %3213 = vmatpush2.bf16.msra.mxu0 0
      %3214 = vmatprep.subr.bf16.mxu0 0
      %3215 = vmatpush2.bf16.msra.mxu0 0
      %3216 = vmatprep.subr.bf16.mxu0 0
      %3217 = vmatpush2.bf16.msra.mxu0 0
      %3218 = vmatprep.subr.bf16.mxu0 0
      %3219 = vmatpush2.bf16.msra.mxu0 0
      %3220 = vmatprep.subr.bf16.mxu0 0
      %3221 = vmatpush2.bf16.msra.mxu0 0
      %3222 = vmatprep.subr.bf16.mxu0 0
      %3223 = vmatpush2.bf16.msra.mxu0 0
      %3224 = vmatprep.subr.bf16.mxu0 0
      %3225 = vmatpush2.bf16.msra.mxu0 0
      %3226 = vmatprep.mubr.bf16.mxu0 0
      %3227 = vmatmul.mubr.bf16.gmra.mxu0 %v3144
      %v3228 = vpop.f32.mrf.mxu0
      %v3229 = vadd.f32 %v3017, %v3228
      %v3230 = vpop.f32.mrf.mxu0
      %v3231 = vpop.f32.mrf.mxu0
      %v3232 = vadd.f32 %v3020, %v3231
      %v3233 = vpop.f32.mrf.mxu0
      %3234 = vmatprep.mubr.bf16.mxu0 0
      %3235 = vmatmul.mubr.bf16.gmra.mxu0 %v3147
      %v3236 = vpop.f32.mrf.mxu0
      %v3237 = vadd.f32 %v3025, %v3236
      %v3238 = vpop.f32.mrf.mxu0
      %v3239 = vpop.f32.mrf.mxu0
      %v3240 = vadd.f32 %v3028, %v3239
      %v3241 = vpop.f32.mrf.mxu0
      %3242 = vmatprep.mubr.bf16.mxu0 0
      %3243 = vmatmul.mubr.bf16.gmra.mxu0 %v3150
      %v3244 = vpop.f32.mrf.mxu0
      %v3245 = vadd.f32 %v3033, %v3244
      %v3246 = vpop.f32.mrf.mxu0
      %v3247 = vpop.f32.mrf.mxu0
      %v3248 = vadd.f32 %v3036, %v3247
      %v3249 = vpop.f32.mrf.mxu0
      %3250 = vmatprep.mubr.bf16.mxu0 0
      %3251 = vmatmul.mubr.bf16.gmra.mxu0 %v3153
      %v3252 = vpop.f32.mrf.mxu0
      %v3253 = vadd.f32 %v3041, %v3252
      %v3254 = vpop.f32.mrf.mxu0
      %v3255 = vpop.f32.mrf.mxu0
      %v3256 = vadd.f32 %v3044, %v3255
      %v3257 = vpop.f32.mrf.mxu0
      %3258 = vmatprep.mubr.bf16.mxu0 0
      %3259 = vmatmul.mubr.bf16.gmra.mxu0 %v3156
      %v3260 = vpop.f32.mrf.mxu0
      %v3261 = vadd.f32 %v3049, %v3260
      %v3262 = vpop.f32.mrf.mxu0
      %v3263 = vpop.f32.mrf.mxu0
      %v3264 = vadd.f32 %v3052, %v3263
      %v3265 = vpop.f32.mrf.mxu0
      %3266 = vmatprep.mubr.bf16.mxu0 0
      %3267 = vmatmul.mubr.bf16.gmra.mxu0 %v3159
      %v3268 = vpop.f32.mrf.mxu0
      %v3269 = vadd.f32 %v3057, %v3268
      %v3270 = vpop.f32.mrf.mxu0
      %v3271 = vpop.f32.mrf.mxu0
      %v3272 = vadd.f32 %v3060, %v3271
      %v3273 = vpop.f32.mrf.mxu0
      %3274 = vmatprep.mubr.bf16.mxu0 0
      %3275 = vmatmul.mubr.bf16.gmra.mxu0 %v3162
      %v3276 = vpop.f32.mrf.mxu0
      %v3277 = vadd.f32 %v3065, %v3276
      %v3278 = vpop.f32.mrf.mxu0
      %v3279 = vpop.f32.mrf.mxu0
      %v3280 = vadd.f32 %v3068, %v3279
      %v3281 = vpop.f32.mrf.mxu0
      %3282 = vmatprep.mubr.bf16.mxu0 0
      %3283 = vmatmul.mubr.bf16.gmra.mxu0 %v3165
      %v3284 = vpop.f32.mrf.mxu0
      %v3285 = vadd.f32 %v3073, %v3284
      %v3286 = vpop.f32.mrf.mxu0
      %v3287 = vpop.f32.mrf.mxu0
      %v3288 = vadd.f32 %v3076, %v3287
      %v3289 = vpop.f32.mrf.mxu0
      %3290 = vmatprep.mubr.bf16.mxu0 0
      %3291 = vmatmul.mubr.bf16.gmra.mxu0 %v3168
      %v3292 = vpop.f32.mrf.mxu0
      %v3293 = vadd.f32 %v3081, %v3292
      %v3294 = vpop.f32.mrf.mxu0
      %v3295 = vpop.f32.mrf.mxu0
      %v3296 = vadd.f32 %v3084, %v3295
      %v3297 = vpop.f32.mrf.mxu0
      %3298 = vmatprep.mubr.bf16.mxu0 0
      %3299 = vmatmul.mubr.bf16.gmra.mxu0 %v3171
      %v3300 = vpop.f32.mrf.mxu0
      %v3301 = vadd.f32 %v3089, %v3300
      %v3302 = vpop.f32.mrf.mxu0
      %v3303 = vpop.f32.mrf.mxu0
      %v3304 = vadd.f32 %v3092, %v3303
      %v3305 = vpop.f32.mrf.mxu0
      %3306 = vmatprep.mubr.bf16.mxu0 0
      %3307 = vmatmul.mubr.bf16.gmra.mxu0 %v3174
      %v3308 = vpop.f32.mrf.mxu0
      %v3309 = vadd.f32 %v3097, %v3308
      %v3310 = vpop.f32.mrf.mxu0
      %v3311 = vpop.f32.mrf.mxu0
      %v3312 = vadd.f32 %v3100, %v3311
      %v3313 = vpop.f32.mrf.mxu0
      %3314 = vmatprep.mubr.bf16.mxu0 0
      %3315 = vmatmul.mubr.bf16.gmra.mxu0 %v3177
      %v3316 = vpop.f32.mrf.mxu0
      %v3317 = vadd.f32 %v3105, %v3316
      %v3318 = vpop.f32.mrf.mxu0
      %v3319 = vpop.f32.mrf.mxu0
      %v3320 = vadd.f32 %v3108, %v3319
      %v3321 = vpop.f32.mrf.mxu0
      %3322 = vmatprep.mubr.bf16.mxu0 0
      %3323 = vmatmul.mubr.bf16.gmra.mxu0 %v3180
      %v3324 = vpop.f32.mrf.mxu0
      %v3325 = vadd.f32 %v3113, %v3324
      %v3326 = vpop.f32.mrf.mxu0
      %v3327 = vpop.f32.mrf.mxu0
      %v3328 = vadd.f32 %v3116, %v3327
      %v3329 = vpop.f32.mrf.mxu0
      %3330 = vmatprep.mubr.bf16.mxu0 0
      %3331 = vmatmul.mubr.bf16.gmra.mxu0 %v3183
      %v3332 = vpop.f32.mrf.mxu0
      %v3333 = vadd.f32 %v3121, %v3332
      %v3334 = vpop.f32.mrf.mxu0
      %v3335 = vpop.f32.mrf.mxu0
      %v3336 = vadd.f32 %v3124, %v3335
      %v3337 = vpop.f32.mrf.mxu0
      %3338 = vmatprep.mubr.bf16.mxu0 0
      %3339 = vmatmul.mubr.bf16.gmra.mxu0 %v3186
      %v3340 = vpop.f32.mrf.mxu0
      %v3341 = vadd.f32 %v3129, %v3340
      %v3342 = vpop.f32.mrf.mxu0
      %v3343 = vpop.f32.mrf.mxu0
      %v3344 = vadd.f32 %v3132, %v3343
      %v3345 = vpop.f32.mrf.mxu0
      %3346 = vmatprep.mubr.bf16.mxu0 0
      %3347 = vmatmul.mubr.bf16.gmra.mxu0 %v3189
      %v3348 = vpop.f32.mrf.mxu0
      %v3349 = vadd.f32 %v3137, %v3348
      %v3350 = vpop.f32.mrf.mxu0
      %v3351 = vpop.f32.mrf.mxu0
      %v3352 = vadd.f32 %v3140, %v3351
      %v3353 = vpop.f32.mrf.mxu0
      %3354 = vdwg.mxu0
      %v3355 = vrot.slane %v2682, 2
      %v3356 = vrot.slane %v2683, 2
      %v3357 = vsel %vm902, %v3355, %v3356
      %v3358 = vrot.slane %v2684, 2
      %v3359 = vsel %vm902, %v3356, %v3358
      %v3360 = vrot.slane %v2685, 2
      %v3361 = vrot.slane %v2686, 2
      %v3362 = vsel %vm902, %v3360, %v3361
      %v3363 = vrot.slane %v2687, 2
      %v3364 = vsel %vm902, %v3361, %v3363
      %v3365 = vrot.slane %v2688, 2
      %v3366 = vrot.slane %v2689, 2
      %v3367 = vsel %vm902, %v3365, %v3366
      %v3368 = vrot.slane %v2690, 2
      %v3369 = vsel %vm902, %v3366, %v3368
      %v3370 = vrot.slane %v2691, 2
      %v3371 = vrot.slane %v2692, 2
      %v3372 = vsel %vm902, %v3370, %v3371
      %v3373 = vrot.slane %v2693, 2
      %v3374 = vsel %vm902, %v3371, %v3373
      %v3375 = vrot.slane %v2694, 2
      %v3376 = vrot.slane %v2695, 2
      %v3377 = vsel %vm902, %v3375, %v3376
      %v3378 = vrot.slane %v2696, 2
      %v3379 = vsel %vm902, %v3376, %v3378
      %v3380 = vrot.slane %v2697, 2
      %v3381 = vrot.slane %v2698, 2
      %v3382 = vsel %vm902, %v3380, %v3381
      %v3383 = vrot.slane %v2699, 2
      %v3384 = vsel %vm902, %v3381, %v3383
      %v3385 = vrot.slane %v2700, 2
      %v3386 = vrot.slane %v2701, 2
      %v3387 = vsel %vm902, %v3385, %v3386
      %v3388 = vrot.slane %v2702, 2
      %v3389 = vsel %vm902, %v3386, %v3388
      %v3390 = vrot.slane %v2703, 2
      %v3391 = vrot.slane %v2704, 2
      %v3392 = vsel %vm902, %v3390, %v3391
      %v3393 = vrot.slane %v2705, 2
      %v3394 = vsel %vm902, %v3391, %v3393
      %v3395 = vrot.slane %v2706, 2
      %v3396 = vrot.slane %v2707, 2
      %v3397 = vsel %vm902, %v3395, %v3396
      %v3398 = vrot.slane %v2708, 2
      %v3399 = vsel %vm902, %v3396, %v3398
      %v3400 = vrot.slane %v2709, 2
      %v3401 = vrot.slane %v2710, 2
      %v3402 = vsel %vm902, %v3400, %v3401
      %v3403 = vrot.slane %v2711, 2
      %v3404 = vsel %vm902, %v3401, %v3403
      %v3405 = vrot.slane %v2712, 2
      %v3406 = vrot.slane %v2713, 2
      %v3407 = vsel %vm902, %v3405, %v3406
      %v3408 = vrot.slane %v2714, 2
      %v3409 = vsel %vm902, %v3406, %v3408
      %v3410 = vrot.slane %v2715, 2
      %v3411 = vrot.slane %v2716, 2
      %v3412 = vsel %vm902, %v3410, %v3411
      %v3413 = vrot.slane %v2717, 2
      %v3414 = vsel %vm902, %v3411, %v3413
      %v3415 = vrot.slane %v2718, 2
      %v3416 = vrot.slane %v2719, 2
      %v3417 = vsel %vm902, %v3415, %v3416
      %v3418 = vrot.slane %v2720, 2
      %v3419 = vsel %vm902, %v3416, %v3418
      %v3420 = vrot.slane %v2721, 2
      %v3421 = vrot.slane %v2722, 2
      %v3422 = vsel %vm902, %v3420, %v3421
      %v3423 = vrot.slane %v2723, 2
      %v3424 = vsel %vm902, %v3421, %v3423
      %v3425 = vrot.slane %v2724, 2
      %v3426 = vrot.slane %v2725, 2
      %v3427 = vsel %vm902, %v3425, %v3426
      %v3428 = vrot.slane %v2726, 2
      %v3429 = vsel %vm902, %v3426, %v3428
      %v3430 = vrot.slane %v2727, 2
      %v3431 = vrot.slane %v2728, 2
      %v3432 = vsel %vm902, %v3430, %v3431
      %v3433 = vrot.slane %v2729, 2
      %v3434 = vsel %vm902, %v3431, %v3433
      %v3467 = vpack.c.bf16 %v3359, %v3357
      %v3468 = vpack.c.bf16 %v3364, %v3362
      %v3469 = vpack.c.bf16 %v3369, %v3367
      %v3470 = vpack.c.bf16 %v3374, %v3372
      %v3471 = vpack.c.bf16 %v3379, %v3377
      %v3472 = vpack.c.bf16 %v3384, %v3382
      %v3473 = vpack.c.bf16 %v3389, %v3387
      %v3474 = vpack.c.bf16 %v3394, %v3392
      %v3475 = vpack.c.bf16 %v3399, %v3397
      %v3476 = vpack.c.bf16 %v3404, %v3402
      %v3477 = vpack.c.bf16 %v3409, %v3407
      %v3478 = vpack.c.bf16 %v3414, %v3412
      %v3479 = vpack.c.bf16 %v3419, %v3417
      %v3480 = vpack.c.bf16 %v3424, %v3422
      %v3481 = vpack.c.bf16 %v3429, %v3427
      %v3482 = vpack.c.bf16 %v3434, %v3432
      %s3483 = scalar_lea.vmem %s3, 8
      %v3484 = vld [vmem:[%s3483] sm:$0xf]
      %v3486 = vsel %vm476, %v3467, 0
      %v3489 = vsel %vm476, %v3468, 0
      %v3492 = vsel %vm476, %v3469, 0
      %v3495 = vsel %vm476, %v3470, 0
      %v3498 = vsel %vm476, %v3471, 0
      %v3501 = vsel %vm476, %v3472, 0
      %v3504 = vsel %vm476, %v3473, 0
      %v3507 = vsel %vm476, %v3474, 0
      %v3510 = vsel %vm476, %v3475, 0
      %v3513 = vsel %vm476, %v3476, 0
      %v3516 = vsel %vm476, %v3477, 0
      %v3519 = vsel %vm476, %v3478, 0
      %v3522 = vsel %vm476, %v3479, 0
      %v3525 = vsel %vm476, %v3480, 0
      %v3528 = vsel %vm476, %v3481, 0
      %v3531 = vsel %vm476, %v3482, 0
      %v3534 = vsel %vm525, %v3484, 0
      %3536 = vmatprep.subr.bf16.mxu0 0
      %3537 = vmatpush1.bf16.msra.mxu0 0
      %3538 = vmatprep.subr.bf16.mxu0 0
      %3539 = vmatpush1.bf16.msra.mxu0 0
      %3540 = vmatprep.subr.bf16.mxu0 0
      %3541 = vmatpush1.bf16.msra.mxu0 0
      %3542 = vmatprep.subr.bf16.mxu0 0
      %3543 = vmatpush1.bf16.msra.mxu0 0
      %3544 = vmatprep.subr.bf16.mxu0 0
      %3545 = vmatpush1.bf16.msra.mxu0 0
      %3546 = vmatprep.subr.bf16.mxu0 0
      %3547 = vmatpush1.bf16.msra.mxu0 0
      %3548 = vmatprep.subr.bf16.mxu0 0
      %3549 = vmatpush1.bf16.msra.mxu0 0
      %3550 = vmatprep.subr.bf16.mxu0 0
      %3551 = vmatpush1.bf16.msra.mxu0 %v3534
      %3552 = vmatprep.subr.bf16.mxu0 0
      %3553 = vmatpush2.bf16.msra.mxu0 0
      %3554 = vmatprep.subr.bf16.mxu0 0
      %3555 = vmatpush2.bf16.msra.mxu0 0
      %3556 = vmatprep.subr.bf16.mxu0 0
      %3557 = vmatpush2.bf16.msra.mxu0 0
      %3558 = vmatprep.subr.bf16.mxu0 0
      %3559 = vmatpush2.bf16.msra.mxu0 0
      %3560 = vmatprep.subr.bf16.mxu0 0
      %3561 = vmatpush2.bf16.msra.mxu0 0
      %3562 = vmatprep.subr.bf16.mxu0 0
      %3563 = vmatpush2.bf16.msra.mxu0 0
      %3564 = vmatprep.subr.bf16.mxu0 0
      %3565 = vmatpush2.bf16.msra.mxu0 0
      %3566 = vmatprep.subr.bf16.mxu0 0
      %3567 = vmatpush2.bf16.msra.mxu0 0
      %3568 = vmatprep.mubr.bf16.mxu0 0
      %3569 = vmatmul.mubr.bf16.gmra.mxu0 %v3486
      %v3570 = vpop.f32.mrf.mxu0
      %v3571 = vadd.f32 0.0, %v3570
      %v3572 = vpop.f32.mrf.mxu0
      %v3573 = vpop.f32.mrf.mxu0
      %v3574 = vadd.f32 0.0, %v3573
      %v3575 = vpop.f32.mrf.mxu0
      %3576 = vmatprep.mubr.bf16.mxu0 0
      %3577 = vmatmul.mubr.bf16.gmra.mxu0 %v3489
      %v3578 = vpop.f32.mrf.mxu0
      %v3579 = vadd.f32 0.0, %v3578
      %v3580 = vpop.f32.mrf.mxu0
      %v3581 = vpop.f32.mrf.mxu0
      %v3582 = vadd.f32 0.0, %v3581
      %v3583 = vpop.f32.mrf.mxu0
      %3584 = vmatprep.mubr.bf16.mxu0 0
      %3585 = vmatmul.mubr.bf16.gmra.mxu0 %v3492
      %v3586 = vpop.f32.mrf.mxu0
      %v3587 = vadd.f32 0.0, %v3586
      %v3588 = vpop.f32.mrf.mxu0
      %v3589 = vpop.f32.mrf.mxu0
      %v3590 = vadd.f32 0.0, %v3589
      %v3591 = vpop.f32.mrf.mxu0
      %3592 = vmatprep.mubr.bf16.mxu0 0
      %3593 = vmatmul.mubr.bf16.gmra.mxu0 %v3495
      %v3594 = vpop.f32.mrf.mxu0
      %v3595 = vadd.f32 0.0, %v3594
      %v3596 = vpop.f32.mrf.mxu0
      %v3597 = vpop.f32.mrf.mxu0
      %v3598 = vadd.f32 0.0, %v3597
      %v3599 = vpop.f32.mrf.mxu0
      %3600 = vmatprep.mubr.bf16.mxu0 0
      %3601 = vmatmul.mubr.bf16.gmra.mxu0 %v3498
      %v3602 = vpop.f32.mrf.mxu0
      %v3603 = vadd.f32 0.0, %v3602
      %v3604 = vpop.f32.mrf.mxu0
      %v3605 = vpop.f32.mrf.mxu0
      %v3606 = vadd.f32 0.0, %v3605
      %v3607 = vpop.f32.mrf.mxu0
      %3608 = vmatprep.mubr.bf16.mxu0 0
      %3609 = vmatmul.mubr.bf16.gmra.mxu0 %v3501
      %v3610 = vpop.f32.mrf.mxu0
      %v3611 = vadd.f32 0.0, %v3610
      %v3612 = vpop.f32.mrf.mxu0
      %v3613 = vpop.f32.mrf.mxu0
      %v3614 = vadd.f32 0.0, %v3613
      %v3615 = vpop.f32.mrf.mxu0
      %3616 = vmatprep.mubr.bf16.mxu0 0
      %3617 = vmatmul.mubr.bf16.gmra.mxu0 %v3504
      %v3618 = vpop.f32.mrf.mxu0
      %v3619 = vadd.f32 0.0, %v3618
      %v3620 = vpop.f32.mrf.mxu0
      %v3621 = vpop.f32.mrf.mxu0
      %v3622 = vadd.f32 0.0, %v3621
      %v3623 = vpop.f32.mrf.mxu0
      %3624 = vmatprep.mubr.bf16.mxu0 0
      %3625 = vmatmul.mubr.bf16.gmra.mxu0 %v3507
      %v3626 = vpop.f32.mrf.mxu0
      %v3627 = vadd.f32 0.0, %v3626
      %v3628 = vpop.f32.mrf.mxu0
      %v3629 = vpop.f32.mrf.mxu0
      %v3630 = vadd.f32 0.0, %v3629
      %v3631 = vpop.f32.mrf.mxu0
      %3632 = vmatprep.mubr.bf16.mxu0 0
      %3633 = vmatmul.mubr.bf16.gmra.mxu0 %v3510
      %v3634 = vpop.f32.mrf.mxu0
      %v3635 = vadd.f32 0.0, %v3634
      %v3636 = vpop.f32.mrf.mxu0
      %v3637 = vpop.f32.mrf.mxu0
      %v3638 = vadd.f32 0.0, %v3637
      %v3639 = vpop.f32.mrf.mxu0
      %3640 = vmatprep.mubr.bf16.mxu0 0
      %3641 = vmatmul.mubr.bf16.gmra.mxu0 %v3513
      %v3642 = vpop.f32.mrf.mxu0
      %v3643 = vadd.f32 0.0, %v3642
      %v3644 = vpop.f32.mrf.mxu0
      %v3645 = vpop.f32.mrf.mxu0
      %v3646 = vadd.f32 0.0, %v3645
      %v3647 = vpop.f32.mrf.mxu0
      %3648 = vmatprep.mubr.bf16.mxu0 0
      %3649 = vmatmul.mubr.bf16.gmra.mxu0 %v3516
      %v3650 = vpop.f32.mrf.mxu0
      %v3651 = vadd.f32 0.0, %v3650
      %v3652 = vpop.f32.mrf.mxu0
      %v3653 = vpop.f32.mrf.mxu0
      %v3654 = vadd.f32 0.0, %v3653
      %v3655 = vpop.f32.mrf.mxu0
      %3656 = vmatprep.mubr.bf16.mxu0 0
      %3657 = vmatmul.mubr.bf16.gmra.mxu0 %v3519
      %v3658 = vpop.f32.mrf.mxu0
      %v3659 = vadd.f32 0.0, %v3658
      %v3660 = vpop.f32.mrf.mxu0
      %v3661 = vpop.f32.mrf.mxu0
      %v3662 = vadd.f32 0.0, %v3661
      %v3663 = vpop.f32.mrf.mxu0
      %3664 = vmatprep.mubr.bf16.mxu0 0
      %3665 = vmatmul.mubr.bf16.gmra.mxu0 %v3522
      %v3666 = vpop.f32.mrf.mxu0
      %v3667 = vadd.f32 0.0, %v3666
      %v3668 = vpop.f32.mrf.mxu0
      %v3669 = vpop.f32.mrf.mxu0
      %v3670 = vadd.f32 0.0, %v3669
      %v3671 = vpop.f32.mrf.mxu0
      %3672 = vmatprep.mubr.bf16.mxu0 0
      %3673 = vmatmul.mubr.bf16.gmra.mxu0 %v3525
      %v3674 = vpop.f32.mrf.mxu0
      %v3675 = vadd.f32 0.0, %v3674
      %v3676 = vpop.f32.mrf.mxu0
      %v3677 = vpop.f32.mrf.mxu0
      %v3678 = vadd.f32 0.0, %v3677
      %v3679 = vpop.f32.mrf.mxu0
      %3680 = vmatprep.mubr.bf16.mxu0 0
      %3681 = vmatmul.mubr.bf16.gmra.mxu0 %v3528
      %v3682 = vpop.f32.mrf.mxu0
      %v3683 = vadd.f32 0.0, %v3682
      %v3684 = vpop.f32.mrf.mxu0
      %v3685 = vpop.f32.mrf.mxu0
      %v3686 = vadd.f32 0.0, %v3685
      %v3687 = vpop.f32.mrf.mxu0
      %3688 = vmatprep.mubr.bf16.mxu0 0
      %3689 = vmatmul.mubr.bf16.gmra.mxu0 %v3531
      %v3690 = vpop.f32.mrf.mxu0
      %v3691 = vadd.f32 0.0, %v3690
      %v3692 = vpop.f32.mrf.mxu0
      %v3693 = vpop.f32.mrf.mxu0
      %v3694 = vadd.f32 0.0, %v3693
      %v3695 = vpop.f32.mrf.mxu0
      %3696 = vdwg.mxu0
      %v3697 = vadd.f32 %v3229, %v3571
      %v3698 = vadd.f32 %v3232, %v3574
      %v3699 = vadd.f32 %v3237, %v3579
      %v3700 = vadd.f32 %v3240, %v3582
      %v3701 = vadd.f32 %v3245, %v3587
      %v3702 = vadd.f32 %v3248, %v3590
      %v3703 = vadd.f32 %v3253, %v3595
      %v3704 = vadd.f32 %v3256, %v3598
      %v3705 = vadd.f32 %v3261, %v3603
      %v3706 = vadd.f32 %v3264, %v3606
      %v3707 = vadd.f32 %v3269, %v3611
      %v3708 = vadd.f32 %v3272, %v3614
      %v3709 = vadd.f32 %v3277, %v3619
      %v3710 = vadd.f32 %v3280, %v3622
      %v3711 = vadd.f32 %v3285, %v3627
      %v3712 = vadd.f32 %v3288, %v3630
      %v3713 = vadd.f32 %v3293, %v3635
      %v3714 = vadd.f32 %v3296, %v3638
      %v3715 = vadd.f32 %v3301, %v3643
      %v3716 = vadd.f32 %v3304, %v3646
      %v3717 = vadd.f32 %v3309, %v3651
      %v3718 = vadd.f32 %v3312, %v3654
      %v3719 = vadd.f32 %v3317, %v3659
      %v3720 = vadd.f32 %v3320, %v3662
      %v3721 = vadd.f32 %v3325, %v3667
      %v3722 = vadd.f32 %v3328, %v3670
      %v3723 = vadd.f32 %v3333, %v3675
      %v3724 = vadd.f32 %v3336, %v3678
      %v3725 = vadd.f32 %v3341, %v3683
      %v3726 = vadd.f32 %v3344, %v3686
      %v3727 = vadd.f32 %v3349, %v3691
      %v3728 = vadd.f32 %v3352, %v3694
      %v3729 = vpack.c.bf16 %v2731, %v2730
      %s3730 = scalar_lea.vmem %s3, 12
      %v3731 = vld [vmem:[%s3730] sm:$0xf]
      %v3733 = vsel %vm476, %v3729, 0
      %v3736 = vsel %vm525, %v3731, 0
      %3738 = vmatprep.subr.bf16.mxu0 0
      %3739 = vmatpush1.bf16.msra.mxu0 0
      %3740 = vmatprep.subr.bf16.mxu0 0
      %3741 = vmatpush1.bf16.msra.mxu0 0
      %3742 = vmatprep.subr.bf16.mxu0 0
      %3743 = vmatpush1.bf16.msra.mxu0 0
      %3744 = vmatprep.subr.bf16.mxu0 0
      %3745 = vmatpush1.bf16.msra.mxu0 0
      %3746 = vmatprep.subr.bf16.mxu0 0
      %3747 = vmatpush1.bf16.msra.mxu0 0
      %3748 = vmatprep.subr.bf16.mxu0 0
      %3749 = vmatpush1.bf16.msra.mxu0 0
      %3750 = vmatprep.subr.bf16.mxu0 0
      %3751 = vmatpush1.bf16.msra.mxu0 0
      %3752 = vmatprep.subr.bf16.mxu0 0
      %3753 = vmatpush1.bf16.msra.mxu0 %v3736
      %3754 = vmatprep.subr.bf16.mxu0 0
      %3755 = vmatpush2.bf16.msra.mxu0 0
      %3756 = vmatprep.subr.bf16.mxu0 0
      %3757 = vmatpush2.bf16.msra.mxu0 0
      %3758 = vmatprep.subr.bf16.mxu0 0
      %3759 = vmatpush2.bf16.msra.mxu0 0
      %3760 = vmatprep.subr.bf16.mxu0 0
      %3761 = vmatpush2.bf16.msra.mxu0 0
      %3762 = vmatprep.subr.bf16.mxu0 0
      %3763 = vmatpush2.bf16.msra.mxu0 0
      %3764 = vmatprep.subr.bf16.mxu0 0
      %3765 = vmatpush2.bf16.msra.mxu0 0
      %3766 = vmatprep.subr.bf16.mxu0 0
      %3767 = vmatpush2.bf16.msra.mxu0 0
      %3768 = vmatprep.subr.bf16.mxu0 0
      %3769 = vmatpush2.bf16.msra.mxu0 0
      %3770 = vmatprep.mubr.bf16.mxu0 0
      %3771 = vmatmul.mubr.bf16.gmra.mxu0 %v3147
      %v3772 = vpop.f32.mrf.mxu0
      %v3773 = vadd.f32 0.0, %v3772
      %v3774 = vpop.f32.mrf.mxu0
      %v3775 = vpop.f32.mrf.mxu0
      %v3776 = vadd.f32 0.0, %v3775
      %v3777 = vpop.f32.mrf.mxu0
      %3778 = vmatprep.mubr.bf16.mxu0 0
      %3779 = vmatmul.mubr.bf16.gmra.mxu0 %v3150
      %v3780 = vpop.f32.mrf.mxu0
      %v3781 = vadd.f32 0.0, %v3780
      %v3782 = vpop.f32.mrf.mxu0
      %v3783 = vpop.f32.mrf.mxu0
      %v3784 = vadd.f32 0.0, %v3783
      %v3785 = vpop.f32.mrf.mxu0
      %3786 = vmatprep.mubr.bf16.mxu0 0
      %3787 = vmatmul.mubr.bf16.gmra.mxu0 %v3153
      %v3788 = vpop.f32.mrf.mxu0
      %v3789 = vadd.f32 0.0, %v3788
      %v3790 = vpop.f32.mrf.mxu0
      %v3791 = vpop.f32.mrf.mxu0
      %v3792 = vadd.f32 0.0, %v3791
      %v3793 = vpop.f32.mrf.mxu0
      %3794 = vmatprep.mubr.bf16.mxu0 0
      %3795 = vmatmul.mubr.bf16.gmra.mxu0 %v3156
      %v3796 = vpop.f32.mrf.mxu0
      %v3797 = vadd.f32 0.0, %v3796
      %v3798 = vpop.f32.mrf.mxu0
      %v3799 = vpop.f32.mrf.mxu0
      %v3800 = vadd.f32 0.0, %v3799
      %v3801 = vpop.f32.mrf.mxu0
      %3802 = vmatprep.mubr.bf16.mxu0 0
      %3803 = vmatmul.mubr.bf16.gmra.mxu0 %v3159
      %v3804 = vpop.f32.mrf.mxu0
      %v3805 = vadd.f32 0.0, %v3804
      %v3806 = vpop.f32.mrf.mxu0
      %v3807 = vpop.f32.mrf.mxu0
      %v3808 = vadd.f32 0.0, %v3807
      %v3809 = vpop.f32.mrf.mxu0
      %3810 = vmatprep.mubr.bf16.mxu0 0
      %3811 = vmatmul.mubr.bf16.gmra.mxu0 %v3162
      %v3812 = vpop.f32.mrf.mxu0
      %v3813 = vadd.f32 0.0, %v3812
      %v3814 = vpop.f32.mrf.mxu0
      %v3815 = vpop.f32.mrf.mxu0
      %v3816 = vadd.f32 0.0, %v3815
      %v3817 = vpop.f32.mrf.mxu0
      %3818 = vmatprep.mubr.bf16.mxu0 0
      %3819 = vmatmul.mubr.bf16.gmra.mxu0 %v3165
      %v3820 = vpop.f32.mrf.mxu0
      %v3821 = vadd.f32 0.0, %v3820
      %v3822 = vpop.f32.mrf.mxu0
      %v3823 = vpop.f32.mrf.mxu0
      %v3824 = vadd.f32 0.0, %v3823
      %v3825 = vpop.f32.mrf.mxu0
      %3826 = vmatprep.mubr.bf16.mxu0 0
      %3827 = vmatmul.mubr.bf16.gmra.mxu0 %v3168
      %v3828 = vpop.f32.mrf.mxu0
      %v3829 = vadd.f32 0.0, %v3828
      %v3830 = vpop.f32.mrf.mxu0
      %v3831 = vpop.f32.mrf.mxu0
      %v3832 = vadd.f32 0.0, %v3831
      %v3833 = vpop.f32.mrf.mxu0
      %3834 = vmatprep.mubr.bf16.mxu0 0
      %3835 = vmatmul.mubr.bf16.gmra.mxu0 %v3171
      %v3836 = vpop.f32.mrf.mxu0
      %v3837 = vadd.f32 0.0, %v3836
      %v3838 = vpop.f32.mrf.mxu0
      %v3839 = vpop.f32.mrf.mxu0
      %v3840 = vadd.f32 0.0, %v3839
      %v3841 = vpop.f32.mrf.mxu0
      %3842 = vmatprep.mubr.bf16.mxu0 0
      %3843 = vmatmul.mubr.bf16.gmra.mxu0 %v3174
      %v3844 = vpop.f32.mrf.mxu0
      %v3845 = vadd.f32 0.0, %v3844
      %v3846 = vpop.f32.mrf.mxu0
      %v3847 = vpop.f32.mrf.mxu0
      %v3848 = vadd.f32 0.0, %v3847
      %v3849 = vpop.f32.mrf.mxu0
      %3850 = vmatprep.mubr.bf16.mxu0 0
      %3851 = vmatmul.mubr.bf16.gmra.mxu0 %v3177
      %v3852 = vpop.f32.mrf.mxu0
      %v3853 = vadd.f32 0.0, %v3852
      %v3854 = vpop.f32.mrf.mxu0
      %v3855 = vpop.f32.mrf.mxu0
      %v3856 = vadd.f32 0.0, %v3855
      %v3857 = vpop.f32.mrf.mxu0
      %3858 = vmatprep.mubr.bf16.mxu0 0
      %3859 = vmatmul.mubr.bf16.gmra.mxu0 %v3180
      %v3860 = vpop.f32.mrf.mxu0
      %v3861 = vadd.f32 0.0, %v3860
      %v3862 = vpop.f32.mrf.mxu0
      %v3863 = vpop.f32.mrf.mxu0
      %v3864 = vadd.f32 0.0, %v3863
      %v3865 = vpop.f32.mrf.mxu0
      %3866 = vmatprep.mubr.bf16.mxu0 0
      %3867 = vmatmul.mubr.bf16.gmra.mxu0 %v3183
      %v3868 = vpop.f32.mrf.mxu0
      %v3869 = vadd.f32 0.0, %v3868
      %v3870 = vpop.f32.mrf.mxu0
      %v3871 = vpop.f32.mrf.mxu0
      %v3872 = vadd.f32 0.0, %v3871
      %v3873 = vpop.f32.mrf.mxu0
      %3874 = vmatprep.mubr.bf16.mxu0 0
      %3875 = vmatmul.mubr.bf16.gmra.mxu0 %v3186
      %v3876 = vpop.f32.mrf.mxu0
      %v3877 = vadd.f32 0.0, %v3876
      %v3878 = vpop.f32.mrf.mxu0
      %v3879 = vpop.f32.mrf.mxu0
      %v3880 = vadd.f32 0.0, %v3879
      %v3881 = vpop.f32.mrf.mxu0
      %3882 = vmatprep.mubr.bf16.mxu0 0
      %3883 = vmatmul.mubr.bf16.gmra.mxu0 %v3189
      %v3884 = vpop.f32.mrf.mxu0
      %v3885 = vadd.f32 0.0, %v3884
      %v3886 = vpop.f32.mrf.mxu0
      %v3887 = vpop.f32.mrf.mxu0
      %v3888 = vadd.f32 0.0, %v3887
      %v3889 = vpop.f32.mrf.mxu0
      %3890 = vmatprep.mubr.bf16.mxu0 0
      %3891 = vmatmul.mubr.bf16.gmra.mxu0 %v3733
      %v3892 = vpop.f32.mrf.mxu0
      %v3893 = vadd.f32 0.0, %v3892
      %v3894 = vpop.f32.mrf.mxu0
      %v3895 = vpop.f32.mrf.mxu0
      %v3896 = vadd.f32 0.0, %v3895
      %v3897 = vpop.f32.mrf.mxu0
      %3898 = vdwg.mxu0
      %v3899 = vadd.f32 %v3697, %v3773
      %v3900 = vadd.f32 %v3698, %v3776
      %v3901 = vadd.f32 %v3699, %v3781
      %v3902 = vadd.f32 %v3700, %v3784
      %v3903 = vadd.f32 %v3701, %v3789
      %v3904 = vadd.f32 %v3702, %v3792
      %v3905 = vadd.f32 %v3703, %v3797
      %v3906 = vadd.f32 %v3704, %v3800
      %v3907 = vadd.f32 %v3705, %v3805
      %v3908 = vadd.f32 %v3706, %v3808
      %v3909 = vadd.f32 %v3707, %v3813
      %v3910 = vadd.f32 %v3708, %v3816
      %v3911 = vadd.f32 %v3709, %v3821
      %v3912 = vadd.f32 %v3710, %v3824
      %v3913 = vadd.f32 %v3711, %v3829
      %v3914 = vadd.f32 %v3712, %v3832
      %v3915 = vadd.f32 %v3713, %v3837
      %v3916 = vadd.f32 %v3714, %v3840
      %v3917 = vadd.f32 %v3715, %v3845
      %v3918 = vadd.f32 %v3716, %v3848
      %v3919 = vadd.f32 %v3717, %v3853
      %v3920 = vadd.f32 %v3718, %v3856
      %v3921 = vadd.f32 %v3719, %v3861
      %v3922 = vadd.f32 %v3720, %v3864
      %v3923 = vadd.f32 %v3721, %v3869
      %v3924 = vadd.f32 %v3722, %v3872
      %v3925 = vadd.f32 %v3723, %v3877
      %v3926 = vadd.f32 %v3724, %v3880
      %v3927 = vadd.f32 %v3725, %v3885
      %v3928 = vadd.f32 %v3726, %v3888
      %v3929 = vadd.f32 %v3727, %v3893
      %v3930 = vadd.f32 %v3728, %v3896
      %v3934 = vrot.slane %v2730, 1
      %v3935 = vrot.slane %v2731, 1
      %v3936 = vsel %vm345, %v3934, %v3935
      %v3937 = vrot.slane %v2732, 1
      %v3938 = vsel %vm345, %v3935, %v3937
      %v3941 = vpack.c.bf16 %v3938, %v3936
      %s3942 = scalar_lea.vmem %s3, 16
      %v3943 = vld [vmem:[%s3942] sm:$0xf]
      %v3945 = vsel %vm476, %v3941, 0
      %v3948 = vsel %vm525, %v3943, 0
      %3950 = vmatprep.subr.bf16.mxu0 0
      %3951 = vmatpush1.bf16.msra.mxu0 0
      %3952 = vmatprep.subr.bf16.mxu0 0
      %3953 = vmatpush1.bf16.msra.mxu0 0
      %3954 = vmatprep.subr.bf16.mxu0 0
      %3955 = vmatpush1.bf16.msra.mxu0 0
      %3956 = vmatprep.subr.bf16.mxu0 0
      %3957 = vmatpush1.bf16.msra.mxu0 0
      %3958 = vmatprep.subr.bf16.mxu0 0
      %3959 = vmatpush1.bf16.msra.mxu0 0
      %3960 = vmatprep.subr.bf16.mxu0 0
      %3961 = vmatpush1.bf16.msra.mxu0 0
      %3962 = vmatprep.subr.bf16.mxu0 0
      %3963 = vmatpush1.bf16.msra.mxu0 0
      %3964 = vmatprep.subr.bf16.mxu0 0
      %3965 = vmatpush1.bf16.msra.mxu0 %v3948
      %3966 = vmatprep.subr.bf16.mxu0 0
      %3967 = vmatpush2.bf16.msra.mxu0 0
      %3968 = vmatprep.subr.bf16.mxu0 0
      %3969 = vmatpush2.bf16.msra.mxu0 0
      %3970 = vmatprep.subr.bf16.mxu0 0
      %3971 = vmatpush2.bf16.msra.mxu0 0
      %3972 = vmatprep.subr.bf16.mxu0 0
      %3973 = vmatpush2.bf16.msra.mxu0 0
      %3974 = vmatprep.subr.bf16.mxu0 0
      %3975 = vmatpush2.bf16.msra.mxu0 0
      %3976 = vmatprep.subr.bf16.mxu0 0
      %3977 = vmatpush2.bf16.msra.mxu0 0
      %3978 = vmatprep.subr.bf16.mxu0 0
      %3979 = vmatpush2.bf16.msra.mxu0 0
      %3980 = vmatprep.subr.bf16.mxu0 0
      %3981 = vmatpush2.bf16.msra.mxu0 0
      %3982 = vmatprep.mubr.bf16.mxu0 0
      %3983 = vmatmul.mubr.bf16.gmra.mxu0 %v2935
      %v3984 = vpop.f32.mrf.mxu0
      %v3985 = vadd.f32 0.0, %v3984
      %v3986 = vpop.f32.mrf.mxu0
      %v3987 = vpop.f32.mrf.mxu0
      %v3988 = vadd.f32 0.0, %v3987
      %v3989 = vpop.f32.mrf.mxu0
      %3990 = vmatprep.mubr.bf16.mxu0 0
      %3991 = vmatmul.mubr.bf16.gmra.mxu0 %v2938
      %v3992 = vpop.f32.mrf.mxu0
      %v3993 = vadd.f32 0.0, %v3992
      %v3994 = vpop.f32.mrf.mxu0
      %v3995 = vpop.f32.mrf.mxu0
      %v3996 = vadd.f32 0.0, %v3995
      %v3997 = vpop.f32.mrf.mxu0
      %3998 = vmatprep.mubr.bf16.mxu0 0
      %3999 = vmatmul.mubr.bf16.gmra.mxu0 %v2941
      %v4000 = vpop.f32.mrf.mxu0
      %v4001 = vadd.f32 0.0, %v4000
      %v4002 = vpop.f32.mrf.mxu0
      %v4003 = vpop.f32.mrf.mxu0
      %v4004 = vadd.f32 0.0, %v4003
      %v4005 = vpop.f32.mrf.mxu0
      %4006 = vmatprep.mubr.bf16.mxu0 0
      %4007 = vmatmul.mubr.bf16.gmra.mxu0 %v2944
      %v4008 = vpop.f32.mrf.mxu0
      %v4009 = vadd.f32 0.0, %v4008
      %v4010 = vpop.f32.mrf.mxu0
      %v4011 = vpop.f32.mrf.mxu0
      %v4012 = vadd.f32 0.0, %v4011
      %v4013 = vpop.f32.mrf.mxu0
      %4014 = vmatprep.mubr.bf16.mxu0 0
      %4015 = vmatmul.mubr.bf16.gmra.mxu0 %v2947
      %v4016 = vpop.f32.mrf.mxu0
      %v4017 = vadd.f32 0.0, %v4016
      %v4018 = vpop.f32.mrf.mxu0
      %v4019 = vpop.f32.mrf.mxu0
      %v4020 = vadd.f32 0.0, %v4019
      %v4021 = vpop.f32.mrf.mxu0
      %4022 = vmatprep.mubr.bf16.mxu0 0
      %4023 = vmatmul.mubr.bf16.gmra.mxu0 %v2950
      %v4024 = vpop.f32.mrf.mxu0
      %v4025 = vadd.f32 0.0, %v4024
      %v4026 = vpop.f32.mrf.mxu0
      %v4027 = vpop.f32.mrf.mxu0
      %v4028 = vadd.f32 0.0, %v4027
      %v4029 = vpop.f32.mrf.mxu0
      %4030 = vmatprep.mubr.bf16.mxu0 0
      %4031 = vmatmul.mubr.bf16.gmra.mxu0 %v2953
      %v4032 = vpop.f32.mrf.mxu0
      %v4033 = vadd.f32 0.0, %v4032
      %v4034 = vpop.f32.mrf.mxu0
      %v4035 = vpop.f32.mrf.mxu0
      %v4036 = vadd.f32 0.0, %v4035
      %v4037 = vpop.f32.mrf.mxu0
      %4038 = vmatprep.mubr.bf16.mxu0 0
      %4039 = vmatmul.mubr.bf16.gmra.mxu0 %v2956
      %v4040 = vpop.f32.mrf.mxu0
      %v4041 = vadd.f32 0.0, %v4040
      %v4042 = vpop.f32.mrf.mxu0
      %v4043 = vpop.f32.mrf.mxu0
      %v4044 = vadd.f32 0.0, %v4043
      %v4045 = vpop.f32.mrf.mxu0
      %4046 = vmatprep.mubr.bf16.mxu0 0
      %4047 = vmatmul.mubr.bf16.gmra.mxu0 %v2959
      %v4048 = vpop.f32.mrf.mxu0
      %v4049 = vadd.f32 0.0, %v4048
      %v4050 = vpop.f32.mrf.mxu0
      %v4051 = vpop.f32.mrf.mxu0
      %v4052 = vadd.f32 0.0, %v4051
      %v4053 = vpop.f32.mrf.mxu0
      %4054 = vmatprep.mubr.bf16.mxu0 0
      %4055 = vmatmul.mubr.bf16.gmra.mxu0 %v2962
      %v4056 = vpop.f32.mrf.mxu0
      %v4057 = vadd.f32 0.0, %v4056
      %v4058 = vpop.f32.mrf.mxu0
      %v4059 = vpop.f32.mrf.mxu0
      %v4060 = vadd.f32 0.0, %v4059
      %v4061 = vpop.f32.mrf.mxu0
      %4062 = vmatprep.mubr.bf16.mxu0 0
      %4063 = vmatmul.mubr.bf16.gmra.mxu0 %v2965
      %v4064 = vpop.f32.mrf.mxu0
      %v4065 = vadd.f32 0.0, %v4064
      %v4066 = vpop.f32.mrf.mxu0
      %v4067 = vpop.f32.mrf.mxu0
      %v4068 = vadd.f32 0.0, %v4067
      %v4069 = vpop.f32.mrf.mxu0
      %4070 = vmatprep.mubr.bf16.mxu0 0
      %4071 = vmatmul.mubr.bf16.gmra.mxu0 %v2968
      %v4072 = vpop.f32.mrf.mxu0
      %v4073 = vadd.f32 0.0, %v4072
      %v4074 = vpop.f32.mrf.mxu0
      %v4075 = vpop.f32.mrf.mxu0
      %v4076 = vadd.f32 0.0, %v4075
      %v4077 = vpop.f32.mrf.mxu0
      %4078 = vmatprep.mubr.bf16.mxu0 0
      %4079 = vmatmul.mubr.bf16.gmra.mxu0 %v2971
      %v4080 = vpop.f32.mrf.mxu0
      %v4081 = vadd.f32 0.0, %v4080
      %v4082 = vpop.f32.mrf.mxu0
      %v4083 = vpop.f32.mrf.mxu0
      %v4084 = vadd.f32 0.0, %v4083
      %v4085 = vpop.f32.mrf.mxu0
      %4086 = vmatprep.mubr.bf16.mxu0 0
      %4087 = vmatmul.mubr.bf16.gmra.mxu0 %v2974
      %v4088 = vpop.f32.mrf.mxu0
      %v4089 = vadd.f32 0.0, %v4088
      %v4090 = vpop.f32.mrf.mxu0
      %v4091 = vpop.f32.mrf.mxu0
      %v4092 = vadd.f32 0.0, %v4091
      %v4093 = vpop.f32.mrf.mxu0
      %4094 = vmatprep.mubr.bf16.mxu0 0
      %4095 = vmatmul.mubr.bf16.gmra.mxu0 %v2977
      %v4096 = vpop.f32.mrf.mxu0
      %v4097 = vadd.f32 0.0, %v4096
      %v4098 = vpop.f32.mrf.mxu0
      %v4099 = vpop.f32.mrf.mxu0
      %v4100 = vadd.f32 0.0, %v4099
      %v4101 = vpop.f32.mrf.mxu0
      %4102 = vmatprep.mubr.bf16.mxu0 0
      %4103 = vmatmul.mubr.bf16.gmra.mxu0 %v3945
      %v4104 = vpop.f32.mrf.mxu0
      %v4105 = vadd.f32 0.0, %v4104
      %v4106 = vpop.f32.mrf.mxu0
      %v4107 = vpop.f32.mrf.mxu0
      %v4108 = vadd.f32 0.0, %v4107
      %v4109 = vpop.f32.mrf.mxu0
      %4110 = vdwg.mxu0
      %v4111 = vadd.f32 %v3899, %v3985
      %v4112 = vadd.f32 %v3900, %v3988
      %v4113 = vadd.f32 %v3901, %v3993
      %v4114 = vadd.f32 %v3902, %v3996
      %v4115 = vadd.f32 %v3903, %v4001
      %v4116 = vadd.f32 %v3904, %v4004
      %v4117 = vadd.f32 %v3905, %v4009
      %v4118 = vadd.f32 %v3906, %v4012
      %v4119 = vadd.f32 %v3907, %v4017
      %v4120 = vadd.f32 %v3908, %v4020
      %v4121 = vadd.f32 %v3909, %v4025
      %v4122 = vadd.f32 %v3910, %v4028
      %v4123 = vadd.f32 %v3911, %v4033
      %v4124 = vadd.f32 %v3912, %v4036
      %v4125 = vadd.f32 %v3913, %v4041
      %v4126 = vadd.f32 %v3914, %v4044
      %v4127 = vadd.f32 %v3915, %v4049
      %v4128 = vadd.f32 %v3916, %v4052
      %v4129 = vadd.f32 %v3917, %v4057
      %v4130 = vadd.f32 %v3918, %v4060
      %v4131 = vadd.f32 %v3919, %v4065
      %v4132 = vadd.f32 %v3920, %v4068
      %v4133 = vadd.f32 %v3921, %v4073
      %v4134 = vadd.f32 %v3922, %v4076
      %v4135 = vadd.f32 %v3923, %v4081
      %v4136 = vadd.f32 %v3924, %v4084
      %v4137 = vadd.f32 %v3925, %v4089
      %v4138 = vadd.f32 %v3926, %v4092
      %v4139 = vadd.f32 %v3927, %v4097
      %v4140 = vadd.f32 %v3928, %v4100
      %v4141 = vadd.f32 %v3929, %v4105
      %v4142 = vadd.f32 %v3930, %v4108
      %v4143 = vrot.slane %v2730, 2
      %v4144 = vrot.slane %v2731, 2
      %v4145 = vsel %vm902, %v4143, %v4144
      %v4146 = vrot.slane %v2732, 2
      %v4147 = vsel %vm902, %v4144, %v4146
      %v4150 = vpack.c.bf16 %v4147, %v4145
      %s4151 = scalar_lea.vmem %s3, 20
      %v4152 = vld [vmem:[%s4151] sm:$0xf]
      %v4154 = vsel %vm476, %v4150, 0
      %v4157 = vsel %vm525, %v4152, 0
      %4159 = vmatprep.subr.bf16.mxu0 0
      %4160 = vmatpush1.bf16.msra.mxu0 0
      %4161 = vmatprep.subr.bf16.mxu0 0
      %4162 = vmatpush1.bf16.msra.mxu0 0
      %4163 = vmatprep.subr.bf16.mxu0 0
      %4164 = vmatpush1.bf16.msra.mxu0 0
      %4165 = vmatprep.subr.bf16.mxu0 0
      %4166 = vmatpush1.bf16.msra.mxu0 0
      %4167 = vmatprep.subr.bf16.mxu0 0
      %4168 = vmatpush1.bf16.msra.mxu0 0
      %4169 = vmatprep.subr.bf16.mxu0 0
      %4170 = vmatpush1.bf16.msra.mxu0 0
      %4171 = vmatprep.subr.bf16.mxu0 0
      %4172 = vmatpush1.bf16.msra.mxu0 0
      %4173 = vmatprep.subr.bf16.mxu0 0
      %4174 = vmatpush1.bf16.msra.mxu0 %v4157
      %4175 = vmatprep.subr.bf16.mxu0 0
      %4176 = vmatpush2.bf16.msra.mxu0 0
      %4177 = vmatprep.subr.bf16.mxu0 0
      %4178 = vmatpush2.bf16.msra.mxu0 0
      %4179 = vmatprep.subr.bf16.mxu0 0
      %4180 = vmatpush2.bf16.msra.mxu0 0
      %4181 = vmatprep.subr.bf16.mxu0 0
      %4182 = vmatpush2.bf16.msra.mxu0 0
      %4183 = vmatprep.subr.bf16.mxu0 0
      %4184 = vmatpush2.bf16.msra.mxu0 0
      %4185 = vmatprep.subr.bf16.mxu0 0
      %4186 = vmatpush2.bf16.msra.mxu0 0
      %4187 = vmatprep.subr.bf16.mxu0 0
      %4188 = vmatpush2.bf16.msra.mxu0 0
      %4189 = vmatprep.subr.bf16.mxu0 0
      %4190 = vmatpush2.bf16.msra.mxu0 0
      %4191 = vmatprep.mubr.bf16.mxu0 0
      %4192 = vmatmul.mubr.bf16.gmra.mxu0 %v3489
      %v4193 = vpop.f32.mrf.mxu0
      %v4194 = vadd.f32 0.0, %v4193
      %v4195 = vpop.f32.mrf.mxu0
      %v4196 = vpop.f32.mrf.mxu0
      %v4197 = vadd.f32 0.0, %v4196
      %v4198 = vpop.f32.mrf.mxu0
      %4199 = vmatprep.mubr.bf16.mxu0 0
      %4200 = vmatmul.mubr.bf16.gmra.mxu0 %v3492
      %v4201 = vpop.f32.mrf.mxu0
      %v4202 = vadd.f32 0.0, %v4201
      %v4203 = vpop.f32.mrf.mxu0
      %v4204 = vpop.f32.mrf.mxu0
      %v4205 = vadd.f32 0.0, %v4204
      %v4206 = vpop.f32.mrf.mxu0
      %4207 = vmatprep.mubr.bf16.mxu0 0
      %4208 = vmatmul.mubr.bf16.gmra.mxu0 %v3495
      %v4209 = vpop.f32.mrf.mxu0
      %v4210 = vadd.f32 0.0, %v4209
      %v4211 = vpop.f32.mrf.mxu0
      %v4212 = vpop.f32.mrf.mxu0
      %v4213 = vadd.f32 0.0, %v4212
      %v4214 = vpop.f32.mrf.mxu0
      %4215 = vmatprep.mubr.bf16.mxu0 0
      %4216 = vmatmul.mubr.bf16.gmra.mxu0 %v3498
      %v4217 = vpop.f32.mrf.mxu0
      %v4218 = vadd.f32 0.0, %v4217
      %v4219 = vpop.f32.mrf.mxu0
      %v4220 = vpop.f32.mrf.mxu0
      %v4221 = vadd.f32 0.0, %v4220
      %v4222 = vpop.f32.mrf.mxu0
      %4223 = vmatprep.mubr.bf16.mxu0 0
      %4224 = vmatmul.mubr.bf16.gmra.mxu0 %v3501
      %v4225 = vpop.f32.mrf.mxu0
      %v4226 = vadd.f32 0.0, %v4225
      %v4227 = vpop.f32.mrf.mxu0
      %v4228 = vpop.f32.mrf.mxu0
      %v4229 = vadd.f32 0.0, %v4228
      %v4230 = vpop.f32.mrf.mxu0
      %4231 = vmatprep.mubr.bf16.mxu0 0
      %4232 = vmatmul.mubr.bf16.gmra.mxu0 %v3504
      %v4233 = vpop.f32.mrf.mxu0
      %v4234 = vadd.f32 0.0, %v4233
      %v4235 = vpop.f32.mrf.mxu0
      %v4236 = vpop.f32.mrf.mxu0
      %v4237 = vadd.f32 0.0, %v4236
      %v4238 = vpop.f32.mrf.mxu0
      %4239 = vmatprep.mubr.bf16.mxu0 0
      %4240 = vmatmul.mubr.bf16.gmra.mxu0 %v3507
      %v4241 = vpop.f32.mrf.mxu0
      %v4242 = vadd.f32 0.0, %v4241
      %v4243 = vpop.f32.mrf.mxu0
      %v4244 = vpop.f32.mrf.mxu0
      %v4245 = vadd.f32 0.0, %v4244
      %v4246 = vpop.f32.mrf.mxu0
      %4247 = vmatprep.mubr.bf16.mxu0 0
      %4248 = vmatmul.mubr.bf16.gmra.mxu0 %v3510
      %v4249 = vpop.f32.mrf.mxu0
      %v4250 = vadd.f32 0.0, %v4249
      %v4251 = vpop.f32.mrf.mxu0
      %v4252 = vpop.f32.mrf.mxu0
      %v4253 = vadd.f32 0.0, %v4252
      %v4254 = vpop.f32.mrf.mxu0
      %4255 = vmatprep.mubr.bf16.mxu0 0
      %4256 = vmatmul.mubr.bf16.gmra.mxu0 %v3513
      %v4257 = vpop.f32.mrf.mxu0
      %v4258 = vadd.f32 0.0, %v4257
      %v4259 = vpop.f32.mrf.mxu0
      %v4260 = vpop.f32.mrf.mxu0
      %v4261 = vadd.f32 0.0, %v4260
      %v4262 = vpop.f32.mrf.mxu0
      %4263 = vmatprep.mubr.bf16.mxu0 0
      %4264 = vmatmul.mubr.bf16.gmra.mxu0 %v3516
      %v4265 = vpop.f32.mrf.mxu0
      %v4266 = vadd.f32 0.0, %v4265
      %v4267 = vpop.f32.mrf.mxu0
      %v4268 = vpop.f32.mrf.mxu0
      %v4269 = vadd.f32 0.0, %v4268
      %v4270 = vpop.f32.mrf.mxu0
      %4271 = vmatprep.mubr.bf16.mxu0 0
      %4272 = vmatmul.mubr.bf16.gmra.mxu0 %v3519
      %v4273 = vpop.f32.mrf.mxu0
      %v4274 = vadd.f32 0.0, %v4273
      %v4275 = vpop.f32.mrf.mxu0
      %v4276 = vpop.f32.mrf.mxu0
      %v4277 = vadd.f32 0.0, %v4276
      %v4278 = vpop.f32.mrf.mxu0
      %4279 = vmatprep.mubr.bf16.mxu0 0
      %4280 = vmatmul.mubr.bf16.gmra.mxu0 %v3522
      %v4281 = vpop.f32.mrf.mxu0
      %v4282 = vadd.f32 0.0, %v4281
      %v4283 = vpop.f32.mrf.mxu0
      %v4284 = vpop.f32.mrf.mxu0
      %v4285 = vadd.f32 0.0, %v4284
      %v4286 = vpop.f32.mrf.mxu0
      %4287 = vmatprep.mubr.bf16.mxu0 0
      %4288 = vmatmul.mubr.bf16.gmra.mxu0 %v3525
      %v4289 = vpop.f32.mrf.mxu0
      %v4290 = vadd.f32 0.0, %v4289
      %v4291 = vpop.f32.mrf.mxu0
      %v4292 = vpop.f32.mrf.mxu0
      %v4293 = vadd.f32 0.0, %v4292
      %v4294 = vpop.f32.mrf.mxu0
      %4295 = vmatprep.mubr.bf16.mxu0 0
      %4296 = vmatmul.mubr.bf16.gmra.mxu0 %v3528
      %v4297 = vpop.f32.mrf.mxu0
      %v4298 = vadd.f32 0.0, %v4297
      %v4299 = vpop.f32.mrf.mxu0
      %v4300 = vpop.f32.mrf.mxu0
      %v4301 = vadd.f32 0.0, %v4300
      %v4302 = vpop.f32.mrf.mxu0
      %4303 = vmatprep.mubr.bf16.mxu0 0
      %4304 = vmatmul.mubr.bf16.gmra.mxu0 %v3531
      %v4305 = vpop.f32.mrf.mxu0
      %v4306 = vadd.f32 0.0, %v4305
      %v4307 = vpop.f32.mrf.mxu0
      %v4308 = vpop.f32.mrf.mxu0
      %v4309 = vadd.f32 0.0, %v4308
      %v4310 = vpop.f32.mrf.mxu0
      %4311 = vmatprep.mubr.bf16.mxu0 0
      %4312 = vmatmul.mubr.bf16.gmra.mxu0 %v4154
      %v4313 = vpop.f32.mrf.mxu0
      %v4314 = vadd.f32 0.0, %v4313
      %v4315 = vpop.f32.mrf.mxu0
      %v4316 = vpop.f32.mrf.mxu0
      %v4317 = vadd.f32 0.0, %v4316
      %v4318 = vpop.f32.mrf.mxu0
      %4319 = vdwg.mxu0
      %v4320 = vadd.f32 %v4111, %v4194
      %v4321 = vadd.f32 %v4112, %v4197
      %v4322 = vadd.f32 %v4113, %v4202
      %v4323 = vadd.f32 %v4114, %v4205
      %v4324 = vadd.f32 %v4115, %v4210
      %v4325 = vadd.f32 %v4116, %v4213
      %v4326 = vadd.f32 %v4117, %v4218
      %v4327 = vadd.f32 %v4118, %v4221
      %v4328 = vadd.f32 %v4119, %v4226
      %v4329 = vadd.f32 %v4120, %v4229
      %v4330 = vadd.f32 %v4121, %v4234
      %v4331 = vadd.f32 %v4122, %v4237
      %v4332 = vadd.f32 %v4123, %v4242
      %v4333 = vadd.f32 %v4124, %v4245
      %v4334 = vadd.f32 %v4125, %v4250
      %v4335 = vadd.f32 %v4126, %v4253
      %v4336 = vadd.f32 %v4127, %v4258
      %v4337 = vadd.f32 %v4128, %v4261
      %v4338 = vadd.f32 %v4129, %v4266
      %v4339 = vadd.f32 %v4130, %v4269
      %v4340 = vadd.f32 %v4131, %v4274
      %v4341 = vadd.f32 %v4132, %v4277
      %v4342 = vadd.f32 %v4133, %v4282
      %v4343 = vadd.f32 %v4134, %v4285
      %v4344 = vadd.f32 %v4135, %v4290
      %v4345 = vadd.f32 %v4136, %v4293
      %v4346 = vadd.f32 %v4137, %v4298
      %v4347 = vadd.f32 %v4138, %v4301
      %v4348 = vadd.f32 %v4139, %v4306
      %v4349 = vadd.f32 %v4140, %v4309
      %v4350 = vadd.f32 %v4141, %v4314
      %v4351 = vadd.f32 %v4142, %v4317
      %v4352 = vpack.c.bf16 %v2734, %v2733
      %s4353 = scalar_lea.vmem %s3, 24
      %v4354 = vld [vmem:[%s4353] sm:$0xf]
      %v4356 = vsel %vm476, %v4352, 0
      %v4359 = vsel %vm525, %v4354, 0
      %4361 = vmatprep.subr.bf16.mxu0 0
      %4362 = vmatpush1.bf16.msra.mxu0 0
      %4363 = vmatprep.subr.bf16.mxu0 0
      %4364 = vmatpush1.bf16.msra.mxu0 0
      %4365 = vmatprep.subr.bf16.mxu0 0
      %4366 = vmatpush1.bf16.msra.mxu0 0
      %4367 = vmatprep.subr.bf16.mxu0 0
      %4368 = vmatpush1.bf16.msra.mxu0 0
      %4369 = vmatprep.subr.bf16.mxu0 0
      %4370 = vmatpush1.bf16.msra.mxu0 0
      %4371 = vmatprep.subr.bf16.mxu0 0
      %4372 = vmatpush1.bf16.msra.mxu0 0
      %4373 = vmatprep.subr.bf16.mxu0 0
      %4374 = vmatpush1.bf16.msra.mxu0 0
      %4375 = vmatprep.subr.bf16.mxu0 0
      %4376 = vmatpush1.bf16.msra.mxu0 %v4359
      %4377 = vmatprep.subr.bf16.mxu0 0
      %4378 = vmatpush2.bf16.msra.mxu0 0
      %4379 = vmatprep.subr.bf16.mxu0 0
      %4380 = vmatpush2.bf16.msra.mxu0 0
      %4381 = vmatprep.subr.bf16.mxu0 0
      %4382 = vmatpush2.bf16.msra.mxu0 0
      %4383 = vmatprep.subr.bf16.mxu0 0
      %4384 = vmatpush2.bf16.msra.mxu0 0
      %4385 = vmatprep.subr.bf16.mxu0 0
      %4386 = vmatpush2.bf16.msra.mxu0 0
      %4387 = vmatprep.subr.bf16.mxu0 0
      %4388 = vmatpush2.bf16.msra.mxu0 0
      %4389 = vmatprep.subr.bf16.mxu0 0
      %4390 = vmatpush2.bf16.msra.mxu0 0
      %4391 = vmatprep.subr.bf16.mxu0 0
      %4392 = vmatpush2.bf16.msra.mxu0 0
      %4393 = vmatprep.mubr.bf16.mxu0 0
      %4394 = vmatmul.mubr.bf16.gmra.mxu0 %v3150
      %v4395 = vpop.f32.mrf.mxu0
      %v4396 = vadd.f32 0.0, %v4395
      %v4397 = vpop.f32.mrf.mxu0
      %v4398 = vpop.f32.mrf.mxu0
      %v4399 = vadd.f32 0.0, %v4398
      %v4400 = vpop.f32.mrf.mxu0
      %4401 = vmatprep.mubr.bf16.mxu0 0
      %4402 = vmatmul.mubr.bf16.gmra.mxu0 %v3153
      %v4403 = vpop.f32.mrf.mxu0
      %v4404 = vadd.f32 0.0, %v4403
      %v4405 = vpop.f32.mrf.mxu0
      %v4406 = vpop.f32.mrf.mxu0
      %v4407 = vadd.f32 0.0, %v4406
      %v4408 = vpop.f32.mrf.mxu0
      %4409 = vmatprep.mubr.bf16.mxu0 0
      %4410 = vmatmul.mubr.bf16.gmra.mxu0 %v3156
      %v4411 = vpop.f32.mrf.mxu0
      %v4412 = vadd.f32 0.0, %v4411
      %v4413 = vpop.f32.mrf.mxu0
      %v4414 = vpop.f32.mrf.mxu0
      %v4415 = vadd.f32 0.0, %v4414
      %v4416 = vpop.f32.mrf.mxu0
      %4417 = vmatprep.mubr.bf16.mxu0 0
      %4418 = vmatmul.mubr.bf16.gmra.mxu0 %v3159
      %v4419 = vpop.f32.mrf.mxu0
      %v4420 = vadd.f32 0.0, %v4419
      %v4421 = vpop.f32.mrf.mxu0
      %v4422 = vpop.f32.mrf.mxu0
      %v4423 = vadd.f32 0.0, %v4422
      %v4424 = vpop.f32.mrf.mxu0
      %4425 = vmatprep.mubr.bf16.mxu0 0
      %4426 = vmatmul.mubr.bf16.gmra.mxu0 %v3162
      %v4427 = vpop.f32.mrf.mxu0
      %v4428 = vadd.f32 0.0, %v4427
      %v4429 = vpop.f32.mrf.mxu0
      %v4430 = vpop.f32.mrf.mxu0
      %v4431 = vadd.f32 0.0, %v4430
      %v4432 = vpop.f32.mrf.mxu0
      %4433 = vmatprep.mubr.bf16.mxu0 0
      %4434 = vmatmul.mubr.bf16.gmra.mxu0 %v3165
      %v4435 = vpop.f32.mrf.mxu0
      %v4436 = vadd.f32 0.0, %v4435
      %v4437 = vpop.f32.mrf.mxu0
      %v4438 = vpop.f32.mrf.mxu0
      %v4439 = vadd.f32 0.0, %v4438
      %v4440 = vpop.f32.mrf.mxu0
      %4441 = vmatprep.mubr.bf16.mxu0 0
      %4442 = vmatmul.mubr.bf16.gmra.mxu0 %v3168
      %v4443 = vpop.f32.mrf.mxu0
      %v4444 = vadd.f32 0.0, %v4443
      %v4445 = vpop.f32.mrf.mxu0
      %v4446 = vpop.f32.mrf.mxu0
      %v4447 = vadd.f32 0.0, %v4446
      %v4448 = vpop.f32.mrf.mxu0
      %4449 = vmatprep.mubr.bf16.mxu0 0
      %4450 = vmatmul.mubr.bf16.gmra.mxu0 %v3171
      %v4451 = vpop.f32.mrf.mxu0
      %v4452 = vadd.f32 0.0, %v4451
      %v4453 = vpop.f32.mrf.mxu0
      %v4454 = vpop.f32.mrf.mxu0
      %v4455 = vadd.f32 0.0, %v4454
      %v4456 = vpop.f32.mrf.mxu0
      %4457 = vmatprep.mubr.bf16.mxu0 0
      %4458 = vmatmul.mubr.bf16.gmra.mxu0 %v3174
      %v4459 = vpop.f32.mrf.mxu0
      %v4460 = vadd.f32 0.0, %v4459
      %v4461 = vpop.f32.mrf.mxu0
      %v4462 = vpop.f32.mrf.mxu0
      %v4463 = vadd.f32 0.0, %v4462
      %v4464 = vpop.f32.mrf.mxu0
      %4465 = vmatprep.mubr.bf16.mxu0 0
      %4466 = vmatmul.mubr.bf16.gmra.mxu0 %v3177
      %v4467 = vpop.f32.mrf.mxu0
      %v4468 = vadd.f32 0.0, %v4467
      %v4469 = vpop.f32.mrf.mxu0
      %v4470 = vpop.f32.mrf.mxu0
      %v4471 = vadd.f32 0.0, %v4470
      %v4472 = vpop.f32.mrf.mxu0
      %4473 = vmatprep.mubr.bf16.mxu0 0
      %4474 = vmatmul.mubr.bf16.gmra.mxu0 %v3180
      %v4475 = vpop.f32.mrf.mxu0
      %v4476 = vadd.f32 0.0, %v4475
      %v4477 = vpop.f32.mrf.mxu0
      %v4478 = vpop.f32.mrf.mxu0
      %v4479 = vadd.f32 0.0, %v4478
      %v4480 = vpop.f32.mrf.mxu0
      %4481 = vmatprep.mubr.bf16.mxu0 0
      %4482 = vmatmul.mubr.bf16.gmra.mxu0 %v3183
      %v4483 = vpop.f32.mrf.mxu0
      %v4484 = vadd.f32 0.0, %v4483
      %v4485 = vpop.f32.mrf.mxu0
      %v4486 = vpop.f32.mrf.mxu0
      %v4487 = vadd.f32 0.0, %v4486
      %v4488 = vpop.f32.mrf.mxu0
      %4489 = vmatprep.mubr.bf16.mxu0 0
      %4490 = vmatmul.mubr.bf16.gmra.mxu0 %v3186
      %v4491 = vpop.f32.mrf.mxu0
      %v4492 = vadd.f32 0.0, %v4491
      %v4493 = vpop.f32.mrf.mxu0
      %v4494 = vpop.f32.mrf.mxu0
      %v4495 = vadd.f32 0.0, %v4494
      %v4496 = vpop.f32.mrf.mxu0
      %4497 = vmatprep.mubr.bf16.mxu0 0
      %4498 = vmatmul.mubr.bf16.gmra.mxu0 %v3189
      %v4499 = vpop.f32.mrf.mxu0
      %v4500 = vadd.f32 0.0, %v4499
      %v4501 = vpop.f32.mrf.mxu0
      %v4502 = vpop.f32.mrf.mxu0
      %v4503 = vadd.f32 0.0, %v4502
      %v4504 = vpop.f32.mrf.mxu0
      %4505 = vmatprep.mubr.bf16.mxu0 0
      %4506 = vmatmul.mubr.bf16.gmra.mxu0 %v3733
      %v4507 = vpop.f32.mrf.mxu0
      %v4508 = vadd.f32 0.0, %v4507
      %v4509 = vpop.f32.mrf.mxu0
      %v4510 = vpop.f32.mrf.mxu0
      %v4511 = vadd.f32 0.0, %v4510
      %v4512 = vpop.f32.mrf.mxu0
      %4513 = vmatprep.mubr.bf16.mxu0 0
      %4514 = vmatmul.mubr.bf16.gmra.mxu0 %v4356
      %v4515 = vpop.f32.mrf.mxu0
      %v4516 = vadd.f32 0.0, %v4515
      %v4517 = vpop.f32.mrf.mxu0
      %v4518 = vpop.f32.mrf.mxu0
      %v4519 = vadd.f32 0.0, %v4518
      %v4520 = vpop.f32.mrf.mxu0
      %4521 = vdwg.mxu0
      %v4522 = vadd.f32 %v4320, %v4396
      %v4523 = vadd.f32 %v4321, %v4399
      %v4524 = vadd.f32 %v4322, %v4404
      %v4525 = vadd.f32 %v4323, %v4407
      %v4526 = vadd.f32 %v4324, %v4412
      %v4527 = vadd.f32 %v4325, %v4415
      %v4528 = vadd.f32 %v4326, %v4420
      %v4529 = vadd.f32 %v4327, %v4423
      %v4530 = vadd.f32 %v4328, %v4428
      %v4531 = vadd.f32 %v4329, %v4431
      %v4532 = vadd.f32 %v4330, %v4436
      %v4533 = vadd.f32 %v4331, %v4439
      %v4534 = vadd.f32 %v4332, %v4444
      %v4535 = vadd.f32 %v4333, %v4447
      %v4536 = vadd.f32 %v4334, %v4452
      %v4537 = vadd.f32 %v4335, %v4455
      %v4538 = vadd.f32 %v4336, %v4460
      %v4539 = vadd.f32 %v4337, %v4463
      %v4540 = vadd.f32 %v4338, %v4468
      %v4541 = vadd.f32 %v4339, %v4471
      %v4542 = vadd.f32 %v4340, %v4476
      %v4543 = vadd.f32 %v4341, %v4479
      %v4544 = vadd.f32 %v4342, %v4484
      %v4545 = vadd.f32 %v4343, %v4487
      %v4546 = vadd.f32 %v4344, %v4492
      %v4547 = vadd.f32 %v4345, %v4495
      %v4548 = vadd.f32 %v4346, %v4500
      %v4549 = vadd.f32 %v4347, %v4503
      %v4550 = vadd.f32 %v4348, %v4508
      %v4551 = vadd.f32 %v4349, %v4511
      %v4552 = vadd.f32 %v4350, %v4516
      %v4553 = vadd.f32 %v4351, %v4519
      %v4557 = vrot.slane %v2733, 1
      %v4558 = vrot.slane %v2734, 1
      %v4559 = vsel %vm345, %v4557, %v4558
      %v4560 = vrot.slane %v2735, 1
      %v4561 = vsel %vm345, %v4558, %v4560
      %v4564 = vpack.c.bf16 %v4561, %v4559
      %s4565 = scalar_lea.vmem %s3, 28
      %v4566 = vld [vmem:[%s4565] sm:$0xf]
      %v4568 = vsel %vm476, %v4564, 0
      %v4571 = vsel %vm525, %v4566, 0
      %4573 = vmatprep.subr.bf16.mxu0 0
      %4574 = vmatpush1.bf16.msra.mxu0 0
      %4575 = vmatprep.subr.bf16.mxu0 0
      %4576 = vmatpush1.bf16.msra.mxu0 0
      %4577 = vmatprep.subr.bf16.mxu0 0
      %4578 = vmatpush1.bf16.msra.mxu0 0
      %4579 = vmatprep.subr.bf16.mxu0 0
      %4580 = vmatpush1.bf16.msra.mxu0 0
      %4581 = vmatprep.subr.bf16.mxu0 0
      %4582 = vmatpush1.bf16.msra.mxu0 0
      %4583 = vmatprep.subr.bf16.mxu0 0
      %4584 = vmatpush1.bf16.msra.mxu0 0
      %4585 = vmatprep.subr.bf16.mxu0 0
      %4586 = vmatpush1.bf16.msra.mxu0 0
      %4587 = vmatprep.subr.bf16.mxu0 0
      %4588 = vmatpush1.bf16.msra.mxu0 %v4571
      %4589 = vmatprep.subr.bf16.mxu0 0
      %4590 = vmatpush2.bf16.msra.mxu0 0
      %4591 = vmatprep.subr.bf16.mxu0 0
      %4592 = vmatpush2.bf16.msra.mxu0 0
      %4593 = vmatprep.subr.bf16.mxu0 0
      %4594 = vmatpush2.bf16.msra.mxu0 0
      %4595 = vmatprep.subr.bf16.mxu0 0
      %4596 = vmatpush2.bf16.msra.mxu0 0
      %4597 = vmatprep.subr.bf16.mxu0 0
      %4598 = vmatpush2.bf16.msra.mxu0 0
      %4599 = vmatprep.subr.bf16.mxu0 0
      %4600 = vmatpush2.bf16.msra.mxu0 0
      %4601 = vmatprep.subr.bf16.mxu0 0
      %4602 = vmatpush2.bf16.msra.mxu0 0
      %4603 = vmatprep.subr.bf16.mxu0 0
      %4604 = vmatpush2.bf16.msra.mxu0 0
      %4605 = vmatprep.mubr.bf16.mxu0 0
      %4606 = vmatmul.mubr.bf16.gmra.mxu0 %v2938
      %v4607 = vpop.f32.mrf.mxu0
      %v4608 = vadd.f32 0.0, %v4607
      %v4609 = vpop.f32.mrf.mxu0
      %v4610 = vpop.f32.mrf.mxu0
      %v4611 = vadd.f32 0.0, %v4610
      %v4612 = vpop.f32.mrf.mxu0
      %4613 = vmatprep.mubr.bf16.mxu0 0
      %4614 = vmatmul.mubr.bf16.gmra.mxu0 %v2941
      %v4615 = vpop.f32.mrf.mxu0
      %v4616 = vadd.f32 0.0, %v4615
      %v4617 = vpop.f32.mrf.mxu0
      %v4618 = vpop.f32.mrf.mxu0
      %v4619 = vadd.f32 0.0, %v4618
      %v4620 = vpop.f32.mrf.mxu0
      %4621 = vmatprep.mubr.bf16.mxu0 0
      %4622 = vmatmul.mubr.bf16.gmra.mxu0 %v2944
      %v4623 = vpop.f32.mrf.mxu0
      %v4624 = vadd.f32 0.0, %v4623
      %v4625 = vpop.f32.mrf.mxu0
      %v4626 = vpop.f32.mrf.mxu0
      %v4627 = vadd.f32 0.0, %v4626
      %v4628 = vpop.f32.mrf.mxu0
      %4629 = vmatprep.mubr.bf16.mxu0 0
      %4630 = vmatmul.mubr.bf16.gmra.mxu0 %v2947
      %v4631 = vpop.f32.mrf.mxu0
      %v4632 = vadd.f32 0.0, %v4631
      %v4633 = vpop.f32.mrf.mxu0
      %v4634 = vpop.f32.mrf.mxu0
      %v4635 = vadd.f32 0.0, %v4634
      %v4636 = vpop.f32.mrf.mxu0
      %4637 = vmatprep.mubr.bf16.mxu0 0
      %4638 = vmatmul.mubr.bf16.gmra.mxu0 %v2950
      %v4639 = vpop.f32.mrf.mxu0
      %v4640 = vadd.f32 0.0, %v4639
      %v4641 = vpop.f32.mrf.mxu0
      %v4642 = vpop.f32.mrf.mxu0
      %v4643 = vadd.f32 0.0, %v4642
      %v4644 = vpop.f32.mrf.mxu0
      %4645 = vmatprep.mubr.bf16.mxu0 0
      %4646 = vmatmul.mubr.bf16.gmra.mxu0 %v2953
      %v4647 = vpop.f32.mrf.mxu0
      %v4648 = vadd.f32 0.0, %v4647
      %v4649 = vpop.f32.mrf.mxu0
      %v4650 = vpop.f32.mrf.mxu0
      %v4651 = vadd.f32 0.0, %v4650
      %v4652 = vpop.f32.mrf.mxu0
      %4653 = vmatprep.mubr.bf16.mxu0 0
      %4654 = vmatmul.mubr.bf16.gmra.mxu0 %v2956
      %v4655 = vpop.f32.mrf.mxu0
      %v4656 = vadd.f32 0.0, %v4655
      %v4657 = vpop.f32.mrf.mxu0
      %v4658 = vpop.f32.mrf.mxu0
      %v4659 = vadd.f32 0.0, %v4658
      %v4660 = vpop.f32.mrf.mxu0
      %4661 = vmatprep.mubr.bf16.mxu0 0
      %4662 = vmatmul.mubr.bf16.gmra.mxu0 %v2959
      %v4663 = vpop.f32.mrf.mxu0
      %v4664 = vadd.f32 0.0, %v4663
      %v4665 = vpop.f32.mrf.mxu0
      %v4666 = vpop.f32.mrf.mxu0
      %v4667 = vadd.f32 0.0, %v4666
      %v4668 = vpop.f32.mrf.mxu0
      %4669 = vmatprep.mubr.bf16.mxu0 0
      %4670 = vmatmul.mubr.bf16.gmra.mxu0 %v2962
      %v4671 = vpop.f32.mrf.mxu0
      %v4672 = vadd.f32 0.0, %v4671
      %v4673 = vpop.f32.mrf.mxu0
      %v4674 = vpop.f32.mrf.mxu0
      %v4675 = vadd.f32 0.0, %v4674
      %v4676 = vpop.f32.mrf.mxu0
      %4677 = vmatprep.mubr.bf16.mxu0 0
      %4678 = vmatmul.mubr.bf16.gmra.mxu0 %v2965
      %v4679 = vpop.f32.mrf.mxu0
      %v4680 = vadd.f32 0.0, %v4679
      %v4681 = vpop.f32.mrf.mxu0
      %v4682 = vpop.f32.mrf.mxu0
      %v4683 = vadd.f32 0.0, %v4682
      %v4684 = vpop.f32.mrf.mxu0
      %4685 = vmatprep.mubr.bf16.mxu0 0
      %4686 = vmatmul.mubr.bf16.gmra.mxu0 %v2968
      %v4687 = vpop.f32.mrf.mxu0
      %v4688 = vadd.f32 0.0, %v4687
      %v4689 = vpop.f32.mrf.mxu0
      %v4690 = vpop.f32.mrf.mxu0
      %v4691 = vadd.f32 0.0, %v4690
      %v4692 = vpop.f32.mrf.mxu0
      %4693 = vmatprep.mubr.bf16.mxu0 0
      %4694 = vmatmul.mubr.bf16.gmra.mxu0 %v2971
      %v4695 = vpop.f32.mrf.mxu0
      %v4696 = vadd.f32 0.0, %v4695
      %v4697 = vpop.f32.mrf.mxu0
      %v4698 = vpop.f32.mrf.mxu0
      %v4699 = vadd.f32 0.0, %v4698
      %v4700 = vpop.f32.mrf.mxu0
      %4701 = vmatprep.mubr.bf16.mxu0 0
      %4702 = vmatmul.mubr.bf16.gmra.mxu0 %v2974
      %v4703 = vpop.f32.mrf.mxu0
      %v4704 = vadd.f32 0.0, %v4703
      %v4705 = vpop.f32.mrf.mxu0
      %v4706 = vpop.f32.mrf.mxu0
      %v4707 = vadd.f32 0.0, %v4706
      %v4708 = vpop.f32.mrf.mxu0
      %4709 = vmatprep.mubr.bf16.mxu0 0
      %4710 = vmatmul.mubr.bf16.gmra.mxu0 %v2977
      %v4711 = vpop.f32.mrf.mxu0
      %v4712 = vadd.f32 0.0, %v4711
      %v4713 = vpop.f32.mrf.mxu0
      %v4714 = vpop.f32.mrf.mxu0
      %v4715 = vadd.f32 0.0, %v4714
      %v4716 = vpop.f32.mrf.mxu0
      %4717 = vmatprep.mubr.bf16.mxu0 0
      %4718 = vmatmul.mubr.bf16.gmra.mxu0 %v3945
      %v4719 = vpop.f32.mrf.mxu0
      %v4720 = vadd.f32 0.0, %v4719
      %v4721 = vpop.f32.mrf.mxu0
      %v4722 = vpop.f32.mrf.mxu0
      %v4723 = vadd.f32 0.0, %v4722
      %v4724 = vpop.f32.mrf.mxu0
      %4725 = vmatprep.mubr.bf16.mxu0 0
      %4726 = vmatmul.mubr.bf16.gmra.mxu0 %v4568
      %v4727 = vpop.f32.mrf.mxu0
      %v4728 = vadd.f32 0.0, %v4727
      %v4729 = vpop.f32.mrf.mxu0
      %v4730 = vpop.f32.mrf.mxu0
      %v4731 = vadd.f32 0.0, %v4730
      %v4732 = vpop.f32.mrf.mxu0
      %4733 = vdwg.mxu0
      %v4734 = vadd.f32 %v4522, %v4608
      %v4735 = vadd.f32 %v4523, %v4611
      %v4736 = vadd.f32 %v4524, %v4616
      %v4737 = vadd.f32 %v4525, %v4619
      %v4738 = vadd.f32 %v4526, %v4624
      %v4739 = vadd.f32 %v4527, %v4627
      %v4740 = vadd.f32 %v4528, %v4632
      %v4741 = vadd.f32 %v4529, %v4635
      %v4742 = vadd.f32 %v4530, %v4640
      %v4743 = vadd.f32 %v4531, %v4643
      %v4744 = vadd.f32 %v4532, %v4648
      %v4745 = vadd.f32 %v4533, %v4651
      %v4746 = vadd.f32 %v4534, %v4656
      %v4747 = vadd.f32 %v4535, %v4659
      %v4748 = vadd.f32 %v4536, %v4664
      %v4749 = vadd.f32 %v4537, %v4667
      %v4750 = vadd.f32 %v4538, %v4672
      %v4751 = vadd.f32 %v4539, %v4675
      %v4752 = vadd.f32 %v4540, %v4680
      %v4753 = vadd.f32 %v4541, %v4683
      %v4754 = vadd.f32 %v4542, %v4688
      %v4755 = vadd.f32 %v4543, %v4691
      %v4756 = vadd.f32 %v4544, %v4696
      %v4757 = vadd.f32 %v4545, %v4699
      %v4758 = vadd.f32 %v4546, %v4704
      %v4759 = vadd.f32 %v4547, %v4707
      %v4760 = vadd.f32 %v4548, %v4712
      %v4761 = vadd.f32 %v4549, %v4715
      %v4762 = vadd.f32 %v4550, %v4720
      %v4763 = vadd.f32 %v4551, %v4723
      %v4764 = vadd.f32 %v4552, %v4728
      %v4765 = vadd.f32 %v4553, %v4731
      %v4766 = vrot.slane %v2733, 2
      %v4767 = vrot.slane %v2734, 2
      %v4768 = vsel %vm902, %v4766, %v4767
      %v4769 = vrot.slane %v2735, 2
      %v4770 = vsel %vm902, %v4767, %v4769
      %v4773 = vpack.c.bf16 %v4770, %v4768
      %s4774 = scalar_lea.vmem %s3, 32
      %v4775 = vld [vmem:[%s4774] sm:$0xf]
      %v4777 = vsel %vm476, %v4773, 0
      %v4780 = vsel %vm525, %v4775, 0
      %4782 = vmatprep.subr.bf16.mxu0 0
      %4783 = vmatpush1.bf16.msra.mxu0 0
      %4784 = vmatprep.subr.bf16.mxu0 0
      %4785 = vmatpush1.bf16.msra.mxu0 0
      %4786 = vmatprep.subr.bf16.mxu0 0
      %4787 = vmatpush1.bf16.msra.mxu0 0
      %4788 = vmatprep.subr.bf16.mxu0 0
      %4789 = vmatpush1.bf16.msra.mxu0 0
      %4790 = vmatprep.subr.bf16.mxu0 0
      %4791 = vmatpush1.bf16.msra.mxu0 0
      %4792 = vmatprep.subr.bf16.mxu0 0
      %4793 = vmatpush1.bf16.msra.mxu0 0
      %4794 = vmatprep.subr.bf16.mxu0 0
      %4795 = vmatpush1.bf16.msra.mxu0 0
      %4796 = vmatprep.subr.bf16.mxu0 0
      %4797 = vmatpush1.bf16.msra.mxu0 %v4780
      %4798 = vmatprep.subr.bf16.mxu0 0
      %4799 = vmatpush2.bf16.msra.mxu0 0
      %4800 = vmatprep.subr.bf16.mxu0 0
      %4801 = vmatpush2.bf16.msra.mxu0 0
      %4802 = vmatprep.subr.bf16.mxu0 0
      %4803 = vmatpush2.bf16.msra.mxu0 0
      %4804 = vmatprep.subr.bf16.mxu0 0
      %4805 = vmatpush2.bf16.msra.mxu0 0
      %4806 = vmatprep.subr.bf16.mxu0 0
      %4807 = vmatpush2.bf16.msra.mxu0 0
      %4808 = vmatprep.subr.bf16.mxu0 0
      %4809 = vmatpush2.bf16.msra.mxu0 0
      %4810 = vmatprep.subr.bf16.mxu0 0
      %4811 = vmatpush2.bf16.msra.mxu0 0
      %4812 = vmatprep.subr.bf16.mxu0 0
      %4813 = vmatpush2.bf16.msra.mxu0 0
      %4814 = vmatprep.mubr.bf16.mxu0 0
      %4815 = vmatmul.mubr.bf16.gmra.mxu0 %v3492
      %v4816 = vpop.f32.mrf.mxu0
      %v4817 = vadd.f32 0.0, %v4816
      %v4818 = vpop.f32.mrf.mxu0
      %v4819 = vpop.f32.mrf.mxu0
      %v4820 = vadd.f32 0.0, %v4819
      %v4821 = vpop.f32.mrf.mxu0
      %4822 = vmatprep.mubr.bf16.mxu0 0
      %4823 = vmatmul.mubr.bf16.gmra.mxu0 %v3495
      %v4824 = vpop.f32.mrf.mxu0
      %v4825 = vadd.f32 0.0, %v4824
      %v4826 = vpop.f32.mrf.mxu0
      %v4827 = vpop.f32.mrf.mxu0
      %v4828 = vadd.f32 0.0, %v4827
      %v4829 = vpop.f32.mrf.mxu0
      %4830 = vmatprep.mubr.bf16.mxu0 0
      %4831 = vmatmul.mubr.bf16.gmra.mxu0 %v3498
      %v4832 = vpop.f32.mrf.mxu0
      %v4833 = vadd.f32 0.0, %v4832
      %v4834 = vpop.f32.mrf.mxu0
      %v4835 = vpop.f32.mrf.mxu0
      %v4836 = vadd.f32 0.0, %v4835
      %v4837 = vpop.f32.mrf.mxu0
      %4838 = vmatprep.mubr.bf16.mxu0 0
      %4839 = vmatmul.mubr.bf16.gmra.mxu0 %v3501
      %v4840 = vpop.f32.mrf.mxu0
      %v4841 = vadd.f32 0.0, %v4840
      %v4842 = vpop.f32.mrf.mxu0
      %v4843 = vpop.f32.mrf.mxu0
      %v4844 = vadd.f32 0.0, %v4843
      %v4845 = vpop.f32.mrf.mxu0
      %4846 = vmatprep.mubr.bf16.mxu0 0
      %4847 = vmatmul.mubr.bf16.gmra.mxu0 %v3504
      %v4848 = vpop.f32.mrf.mxu0
      %v4849 = vadd.f32 0.0, %v4848
      %v4850 = vpop.f32.mrf.mxu0
      %v4851 = vpop.f32.mrf.mxu0
      %v4852 = vadd.f32 0.0, %v4851
      %v4853 = vpop.f32.mrf.mxu0
      %4854 = vmatprep.mubr.bf16.mxu0 0
      %4855 = vmatmul.mubr.bf16.gmra.mxu0 %v3507
      %v4856 = vpop.f32.mrf.mxu0
      %v4857 = vadd.f32 0.0, %v4856
      %v4858 = vpop.f32.mrf.mxu0
      %v4859 = vpop.f32.mrf.mxu0
      %v4860 = vadd.f32 0.0, %v4859
      %v4861 = vpop.f32.mrf.mxu0
      %4862 = vmatprep.mubr.bf16.mxu0 0
      %4863 = vmatmul.mubr.bf16.gmra.mxu0 %v3510
      %v4864 = vpop.f32.mrf.mxu0
      %v4865 = vadd.f32 0.0, %v4864
      %v4866 = vpop.f32.mrf.mxu0
      %v4867 = vpop.f32.mrf.mxu0
      %v4868 = vadd.f32 0.0, %v4867
      %v4869 = vpop.f32.mrf.mxu0
      %4870 = vmatprep.mubr.bf16.mxu0 0
      %4871 = vmatmul.mubr.bf16.gmra.mxu0 %v3513
      %v4872 = vpop.f32.mrf.mxu0
      %v4873 = vadd.f32 0.0, %v4872
      %v4874 = vpop.f32.mrf.mxu0
      %v4875 = vpop.f32.mrf.mxu0
      %v4876 = vadd.f32 0.0, %v4875
      %v4877 = vpop.f32.mrf.mxu0
      %4878 = vmatprep.mubr.bf16.mxu0 0
      %4879 = vmatmul.mubr.bf16.gmra.mxu0 %v3516
      %v4880 = vpop.f32.mrf.mxu0
      %v4881 = vadd.f32 0.0, %v4880
      %v4882 = vpop.f32.mrf.mxu0
      %v4883 = vpop.f32.mrf.mxu0
      %v4884 = vadd.f32 0.0, %v4883
      %v4885 = vpop.f32.mrf.mxu0
      %4886 = vmatprep.mubr.bf16.mxu0 0
      %4887 = vmatmul.mubr.bf16.gmra.mxu0 %v3519
      %v4888 = vpop.f32.mrf.mxu0
      %v4889 = vadd.f32 0.0, %v4888
      %v4890 = vpop.f32.mrf.mxu0
      %v4891 = vpop.f32.mrf.mxu0
      %v4892 = vadd.f32 0.0, %v4891
      %v4893 = vpop.f32.mrf.mxu0
      %4894 = vmatprep.mubr.bf16.mxu0 0
      %4895 = vmatmul.mubr.bf16.gmra.mxu0 %v3522
      %v4896 = vpop.f32.mrf.mxu0
      %v4897 = vadd.f32 0.0, %v4896
      %v4898 = vpop.f32.mrf.mxu0
      %v4899 = vpop.f32.mrf.mxu0
      %v4900 = vadd.f32 0.0, %v4899
      %v4901 = vpop.f32.mrf.mxu0
      %4902 = vmatprep.mubr.bf16.mxu0 0
      %4903 = vmatmul.mubr.bf16.gmra.mxu0 %v3525
      %v4904 = vpop.f32.mrf.mxu0
      %v4905 = vadd.f32 0.0, %v4904
      %v4906 = vpop.f32.mrf.mxu0
      %v4907 = vpop.f32.mrf.mxu0
      %v4908 = vadd.f32 0.0, %v4907
      %v4909 = vpop.f32.mrf.mxu0
      %4910 = vmatprep.mubr.bf16.mxu0 0
      %4911 = vmatmul.mubr.bf16.gmra.mxu0 %v3528
      %v4912 = vpop.f32.mrf.mxu0
      %v4913 = vadd.f32 0.0, %v4912
      %v4914 = vpop.f32.mrf.mxu0
      %v4915 = vpop.f32.mrf.mxu0
      %v4916 = vadd.f32 0.0, %v4915
      %v4917 = vpop.f32.mrf.mxu0
      %4918 = vmatprep.mubr.bf16.mxu0 0
      %4919 = vmatmul.mubr.bf16.gmra.mxu0 %v3531
      %v4920 = vpop.f32.mrf.mxu0
      %v4921 = vadd.f32 0.0, %v4920
      %v4922 = vpop.f32.mrf.mxu0
      %v4923 = vpop.f32.mrf.mxu0
      %v4924 = vadd.f32 0.0, %v4923
      %v4925 = vpop.f32.mrf.mxu0
      %4926 = vmatprep.mubr.bf16.mxu0 0
      %4927 = vmatmul.mubr.bf16.gmra.mxu0 %v4154
      %v4928 = vpop.f32.mrf.mxu0
      %v4929 = vadd.f32 0.0, %v4928
      %v4930 = vpop.f32.mrf.mxu0
      %v4931 = vpop.f32.mrf.mxu0
      %v4932 = vadd.f32 0.0, %v4931
      %v4933 = vpop.f32.mrf.mxu0
      %4934 = vmatprep.mubr.bf16.mxu0 0
      %4935 = vmatmul.mubr.bf16.gmra.mxu0 %v4777
      %v4936 = vpop.f32.mrf.mxu0
      %v4937 = vadd.f32 0.0, %v4936
      %v4938 = vpop.f32.mrf.mxu0
      %v4939 = vpop.f32.mrf.mxu0
      %v4940 = vadd.f32 0.0, %v4939
      %v4941 = vpop.f32.mrf.mxu0
      %4942 = vdwg.mxu0
      %v4943 = vadd.f32 %v4734, %v4817
      %v4944 = vadd.f32 %v4735, %v4820
      %v4945 = vadd.f32 %v4736, %v4825
      %v4946 = vadd.f32 %v4737, %v4828
      %v4947 = vadd.f32 %v4738, %v4833
      %v4948 = vadd.f32 %v4739, %v4836
      %v4949 = vadd.f32 %v4740, %v4841
      %v4950 = vadd.f32 %v4741, %v4844
      %v4951 = vadd.f32 %v4742, %v4849
      %v4952 = vadd.f32 %v4743, %v4852
      %v4953 = vadd.f32 %v4744, %v4857
      %v4954 = vadd.f32 %v4745, %v4860
      %v4955 = vadd.f32 %v4746, %v4865
      %v4956 = vadd.f32 %v4747, %v4868
      %v4957 = vadd.f32 %v4748, %v4873
      %v4958 = vadd.f32 %v4749, %v4876
      %v4959 = vadd.f32 %v4750, %v4881
      %v4960 = vadd.f32 %v4751, %v4884
      %v4961 = vadd.f32 %v4752, %v4889
      %v4962 = vadd.f32 %v4753, %v4892
      %v4963 = vadd.f32 %v4754, %v4897
      %v4964 = vadd.f32 %v4755, %v4900
      %v4965 = vadd.f32 %v4756, %v4905
      %v4966 = vadd.f32 %v4757, %v4908
      %v4967 = vadd.f32 %v4758, %v4913
      %v4968 = vadd.f32 %v4759, %v4916
      %v4969 = vadd.f32 %v4760, %v4921
      %v4970 = vadd.f32 %v4761, %v4924
      %v4971 = vadd.f32 %v4762, %v4929
      %v4972 = vadd.f32 %v4763, %v4932
      %v4973 = vadd.f32 %v4764, %v4937
      %v4974 = vadd.f32 %v4765, %v4940
      %v4975 = vld [vmem:[%s4] sm:$0x1]
      %v4977 = vlaneseq
      %v4978 = vshrl.u32 %v4977, 7
      %v4979 = vsub.s32 0, %v4978
      %v4980 = vrot.slane %v4975, %v4979
      %v4982 = vadd.f32 %v4943, %v4980
      %v4983 = vadd.f32 %v4944, %v4980
      %v4984 = vadd.f32 %v4945, %v4980
      %v4985 = vadd.f32 %v4946, %v4980
      %v4986 = vadd.f32 %v4947, %v4980
      %v4987 = vadd.f32 %v4948, %v4980
      %v4988 = vadd.f32 %v4949, %v4980
      %v4989 = vadd.f32 %v4950, %v4980
      %v4990 = vadd.f32 %v4951, %v4980
      %v4991 = vadd.f32 %v4952, %v4980
      %v4992 = vadd.f32 %v4953, %v4980
      %v4993 = vadd.f32 %v4954, %v4980
      %v4994 = vadd.f32 %v4955, %v4980
      %v4995 = vadd.f32 %v4956, %v4980
      %v4996 = vadd.f32 %v4957, %v4980
      %v4997 = vadd.f32 %v4958, %v4980
      %v4998 = vadd.f32 %v4959, %v4980
      %v4999 = vadd.f32 %v4960, %v4980
      %v5000 = vadd.f32 %v4961, %v4980
      %v5001 = vadd.f32 %v4962, %v4980
      %v5002 = vadd.f32 %v4963, %v4980
      %v5003 = vadd.f32 %v4964, %v4980
      %v5004 = vadd.f32 %v4965, %v4980
      %v5005 = vadd.f32 %v4966, %v4980
      %v5006 = vadd.f32 %v4967, %v4980
      %v5007 = vadd.f32 %v4968, %v4980
      %v5008 = vadd.f32 %v4969, %v4980
      %v5009 = vadd.f32 %v4970, %v4980
      %v5010 = vadd.f32 %v4971, %v4980
      %v5011 = vadd.f32 %v4972, %v4980
      %v5012 = vadd.f32 %v4973, %v4980
      %v5013 = vadd.f32 %v4974, %v4980
      %v5014 = vadd.f32 %v4982, %v353
      %v5015 = vadd.f32 %v4983, %v355
      %v5016 = vadd.f32 %v4984, %v358
      %v5017 = vadd.f32 %v4985, %v360
      %v5018 = vadd.f32 %v4986, %v363
      %v5019 = vadd.f32 %v4987, %v365
      %v5020 = vadd.f32 %v4988, %v368
      %v5021 = vadd.f32 %v4989, %v370
      %v5022 = vadd.f32 %v4990, %v373
      %v5023 = vadd.f32 %v4991, %v375
      %v5024 = vadd.f32 %v4992, %v378
      %v5025 = vadd.f32 %v4993, %v380
      %v5026 = vadd.f32 %v4994, %v383
      %v5027 = vadd.f32 %v4995, %v385
      %v5028 = vadd.f32 %v4996, %v388
      %v5029 = vadd.f32 %v4997, %v390
      %v5030 = vadd.f32 %v4998, %v393
      %v5031 = vadd.f32 %v4999, %v395
      %v5032 = vadd.f32 %v5000, %v398
      %v5033 = vadd.f32 %v5001, %v400
      %v5034 = vadd.f32 %v5002, %v403
      %v5035 = vadd.f32 %v5003, %v405
      %v5036 = vadd.f32 %v5004, %v408
      %v5037 = vadd.f32 %v5005, %v410
      %v5038 = vadd.f32 %v5006, %v413
      %v5039 = vadd.f32 %v5007, %v415
      %v5040 = vadd.f32 %v5008, %v418
      %v5041 = vadd.f32 %v5009, %v420
      %v5042 = vadd.f32 %v5010, %v423
      %v5043 = vadd.f32 %v5011, %v425
      %v5044 = vadd.f32 %v5012, %v1484
      %v5045 = vadd.f32 %v5013, %v1486
      %v5046 = vmax.f32 %v5014, 0.0
      %v5047 = vmax.f32 %v5015, 0.0
      %v5048 = vmax.f32 %v5016, 0.0
      %v5049 = vmax.f32 %v5017, 0.0
      %v5050 = vmax.f32 %v5018, 0.0
      %v5051 = vmax.f32 %v5019, 0.0
      %v5052 = vmax.f32 %v5020, 0.0
      %v5053 = vmax.f32 %v5021, 0.0
      %v5054 = vmax.f32 %v5022, 0.0
      %v5055 = vmax.f32 %v5023, 0.0
      %v5056 = vmax.f32 %v5024, 0.0
      %v5057 = vmax.f32 %v5025, 0.0
      %v5058 = vmax.f32 %v5026, 0.0
      %v5059 = vmax.f32 %v5027, 0.0
      %v5060 = vmax.f32 %v5028, 0.0
      %v5061 = vmax.f32 %v5029, 0.0
      %v5062 = vmax.f32 %v5030, 0.0
      %v5063 = vmax.f32 %v5031, 0.0
      %v5064 = vmax.f32 %v5032, 0.0
      %v5065 = vmax.f32 %v5033, 0.0
      %v5066 = vmax.f32 %v5034, 0.0
      %v5067 = vmax.f32 %v5035, 0.0
      %v5068 = vmax.f32 %v5036, 0.0
      %v5069 = vmax.f32 %v5037, 0.0
      %v5070 = vmax.f32 %v5038, 0.0
      %v5071 = vmax.f32 %v5039, 0.0
      %v5072 = vmax.f32 %v5040, 0.0
      %v5073 = vmax.f32 %v5041, 0.0
      %v5074 = vmax.f32 %v5042, 0.0
      %v5075 = vmax.f32 %v5043, 0.0
      %v5076 = vmax.f32 %v5044, 0.0
      %v5077 = vmax.f32 %v5045, 0.0
      %5078 = vst.msk [vmem:[%s224] sm:$0xff] %vm476, %v5046
      %5079 = vst.msk [vmem:[%s224 + $0x8] sm:$0xff] %vm476, %v5047
      %5080 = vst.msk [vmem:[%s224 + $0x10] sm:$0xff] %vm476, %v5048
      %5081 = vst.msk [vmem:[%s224 + $0x18] sm:$0xff] %vm476, %v5049
      %5082 = vst.msk [vmem:[%s224 + $0x20] sm:$0xff] %vm476, %v5050
      %5083 = vst.msk [vmem:[%s224 + $0x28] sm:$0xff] %vm476, %v5051
      %5084 = vst.msk [vmem:[%s224 + $0x30] sm:$0xff] %vm476, %v5052
      %5085 = vst.msk [vmem:[%s224 + $0x38] sm:$0xff] %vm476, %v5053
      %5086 = vst.msk [vmem:[%s224 + $0x40] sm:$0xff] %vm476, %v5054
      %5087 = vst.msk [vmem:[%s224 + $0x48] sm:$0xff] %vm476, %v5055
      %5088 = vst.msk [vmem:[%s224 + $0x50] sm:$0xff] %vm476, %v5056
      %5089 = vst.msk [vmem:[%s224 + $0x58] sm:$0xff] %vm476, %v5057
      %5090 = vst.msk [vmem:[%s224 + $0x60] sm:$0xff] %vm476, %v5058
      %5091 = vst.msk [vmem:[%s224 + $0x68] sm:$0xff] %vm476, %v5059
      %5092 = vst.msk [vmem:[%s224 + $0x70] sm:$0xff] %vm476, %v5060
      %5093 = vst.msk [vmem:[%s224 + $0x78] sm:$0xff] %vm476, %v5061
      %5094 = vst.msk [vmem:[%s224 + $0x80] sm:$0xff] %vm476, %v5062
      %5095 = vst.msk [vmem:[%s224 + $0x88] sm:$0xff] %vm476, %v5063
      %5096 = vst.msk [vmem:[%s224 + $0x90] sm:$0xff] %vm476, %v5064
      %5097 = vst.msk [vmem:[%s224 + $0x98] sm:$0xff] %vm476, %v5065
      %5098 = vst.msk [vmem:[%s224 + $0xa0] sm:$0xff] %vm476, %v5066
      %5099 = vst.msk [vmem:[%s224 + $0xa8] sm:$0xff] %vm476, %v5067
      %5100 = vst.msk [vmem:[%s224 + $0xb0] sm:$0xff] %vm476, %v5068
      %5101 = vst.msk [vmem:[%s224 + $0xb8] sm:$0xff] %vm476, %v5069
      %5102 = vst.msk [vmem:[%s224 + $0xc0] sm:$0xff] %vm476, %v5070
      %5103 = vst.msk [vmem:[%s224 + $0xc8] sm:$0xff] %vm476, %v5071
      %5104 = vst.msk [vmem:[%s224 + $0xd0] sm:$0xff] %vm476, %v5072
      %5105 = vst.msk [vmem:[%s224 + $0xd8] sm:$0xff] %vm476, %v5073
      %5106 = vst.msk [vmem:[%s224 + $0xe0] sm:$0xff] %vm476, %v5074
      %5107 = vst.msk [vmem:[%s224 + $0xe8] sm:$0xff] %vm476, %v5075
      %5108 = vst.msk [vmem:[%s224 + $0xf0] sm:$0xff] %vm476, %v5076
      %5109 = vst.msk [vmem:[%s224 + $0xf8] sm:$0xff] %vm476, %v5077
      %p5110 = scmp.lt.s32.totalorder %s16, 1
      %s5111 = scalar_select %p5110, %s16, 1
      %s5112 = smul.addr %s5111, 32
      %s5113 = smul.addr %s5112, 8
      %s5114 = scalar_lea.vmem %s5, %s5113
      // Predicated region
      $region41: #{basic_block_forward_nhwc.1} parent=39 // pred_check
        %p5115 = pneg %p144
      $region42: #{basic_block_forward_nhwc.1} parent=39 // pred_check_branch
        %5117 = sbr.rel (%p5115) target = $region44
      $region43: #{basic_block_forward_nhwc.1} parent=39 // pred_region
        _
      $region44: #{basic_block_forward_nhwc.1} parent=39 // pred_fallthru
        _
    $region40: #{basic_block_forward_nhwc.1} parent=5 // pred_fallthru
      _
    %p5118 = scmp.le.s32.totalorder 2, %s11
    // Predicated region
    $region45: #{basic_block_forward_nhwc.1} parent=5 // pred_check
      %p5119 = pneg %p5118
    $region46: #{basic_block_forward_nhwc.1} parent=5 // pred_check_branch
      %5121 = sbr.rel (%p5119) target = $region48
    $region47: #{basic_block_forward_nhwc.1} parent=5 // pred_region
      %s5122 = ssub.s32 %s11, 2
      // Predicated region
      $region49: #{basic_block_forward_nhwc.1} parent=47 // pred_check
        %p5123 = pneg %p150
      $region50: #{basic_block_forward_nhwc.1} parent=47 // pred_check_branch
        %5125 = sbr.rel (%p5123) target = $region52
      $region51: #{basic_block_forward_nhwc.1} parent=47 // pred_region
        %p5126 = scmp.lt.s32.totalorder %s17, 1
        %s5127 = scalar_select %p5126, %s17, 1
        %s5128 = smul.addr %s5127, 32
        %s5129 = smul.addr %s5128, 8
        %s5130 = scalar_lea.vmem %s5, %s5129
      $region52: #{basic_block_forward_nhwc.1} parent=47 // pred_fallthru
        _
    $region48: #{basic_block_forward_nhwc.1} parent=5 // pred_fallthru
      _
  $region6: #{basic_block_forward_nhwc.1} parent=0 // loop_footer
    %s15 = sadd.s32 1, %s11
  $region7: #{basic_block_forward_nhwc.1} parent=0 // loop_footer_branch
    %10 = sbr.rel target = $region3
  $region8: #{basic_block_forward_nhwc.1} parent=0 // loop_exit
    _

</llo_original>
